<compile_context>
chip_gen: v7x
topology: tpu7x:2x2x1
jax: 0.10.0
libtpu: 0.0.40
codegen_flags: <defaults>
</compile_context>

<pallas_src>
import jax
import jax.numpy as jnp
import numpy as np
from jax.experimental import pallas as pl
from jax.experimental.pallas import tpu as pltpu

BN_EPS = 1e-5                  # PyTorch BatchNorm2d default eps
MAX_TILE = 512                 # max row / lane tile for the Pallas kernels
COMPUTE_DTYPE = jnp.bfloat16   # MXU input dtype (accumulation stays f32)


def _round_up(x, m):
    return -(-x // m) * m


def _pad_axis(x, axis, new_size):
    pad = [(0, 0)] * x.ndim
    pad[axis] = (0, new_size - x.shape[axis])
    return jnp.pad(x, pad)


# ----------------------------- Pallas kernels -----------------------------

def _matmul_stats_kernel(a_ref, b_ref, y_ref, s_ref):
    """y = a @ b (bf16 MXU, f32 acc) + fused per-channel sum / sum-of-squares."""
    @pl.when(pl.program_id(1) == 0)       # first M-step of this phase
    def _():
        s_ref[...] = jnp.zeros_like(s_ref)

    y = jnp.dot(a_ref[...], b_ref[...], preferred_element_type=jnp.float32)
    y_ref[...] = y.astype(y_ref.dtype)
    s_ref[...] += jnp.concatenate(
        [jnp.sum(y, axis=0, keepdims=True),
         jnp.sum(y * y, axis=0, keepdims=True)], axis=0)          # (2, C)


def fused_matmul_stats(a, b):
    """Per-phase matmul with fused BN statistics.

    a : (Pa, M, K) with Pa in {1, P}   (Pa == 1 -> A shared by all phases)
    b : (P,  K, C)
    returns y : (P, M, C) bf16,  stats : (P, 2, C) f32 (rows: sum, sum of sq).
    """
    a = a.astype(COMPUTE_DTYPE)
    b = b.astype(COMPUTE_DTYPE)
    pa, m, k = a.shape
    p, _, c = b.shape
    mp = _round_up(max(m, 16), 16)
    tm = min(MAX_TILE, mp)
    mp = _round_up(mp, tm)
    if mp != m:
        a = _pad_axis(a, 1, mp)           # zero rows: contribute 0 to the sums

    a_map = (lambda pi, i: (0, i, 0)) if pa == 1 else (lambda pi, i: (pi, i, 0))
    y, stats = pl.pallas_call(
        _matmul_stats_kernel,
        out_shape=(jax.ShapeDtypeStruct((p, mp, c), COMPUTE_DTYPE),
                   jax.ShapeDtypeStruct((p, 2, c), jnp.float32)),
        grid_spec=pltpu.PrefetchScalarGridSpec(
            num_scalar_prefetch=0,
            grid=(p, mp // tm),
            in_specs=[pl.BlockSpec((None, tm, k), a_map),
                      pl.BlockSpec((None, k, c), lambda pi, i: (pi, 0, 0))],
            out_specs=[pl.BlockSpec((None, tm, c), lambda pi, i: (pi, i, 0)),
                       pl.BlockSpec((None, 2, c), lambda pi, i: (pi, 0, 0))]),
        compiler_params=pltpu.CompilerParams(
            dimension_semantics=("parallel", "arbitrary")),
    )(a, b)
    return y[:, :m, :], stats


def _affine_relu_kernel(x_ref, a_ref, b_ref, o_ref):
    y = x_ref[...].astype(jnp.float32) * a_ref[...] + b_ref[...]
    o_ref[...] = jnp.maximum(y, 0.0).astype(o_ref.dtype)


def affine_relu(x, scale, shift):
    """y = relu(x * scale + shift), per-channel scale/shift. x: (R, C) -> bf16."""
    r, c = x.shape
    rp = _round_up(max(r, 16), 16)
    tr = min(MAX_TILE, rp)
    rp = _round_up(rp, tr)
    if rp != r:
        x = _pad_axis(x, 0, rp)
    out = pl.pallas_call(
        _affine_relu_kernel,
        out_shape=jax.ShapeDtypeStruct((rp, c), COMPUTE_DTYPE),
        grid_spec=pltpu.PrefetchScalarGridSpec(
            num_scalar_prefetch=0,
            grid=(rp // tr,),
            in_specs=[pl.BlockSpec((tr, c), lambda i: (i, 0)),
                      pl.BlockSpec((1, c), lambda i: (0, 0)),
                      pl.BlockSpec((1, c), lambda i: (0, 0))],
            out_specs=pl.BlockSpec((tr, c), lambda i: (i, 0))),
        compiler_params=pltpu.CompilerParams(dimension_semantics=("parallel",)),
    )(x, scale.reshape(1, c).astype(jnp.float32),
      shift.reshape(1, c).astype(jnp.float32))
    return out[:r]


def _matmul_t_tanh_kernel(w_ref, a_ref, o_ref):
    y = jnp.dot(w_ref[...], a_ref[...], preferred_element_type=jnp.float32)
    o_ref[...] = jnp.tanh(y).astype(o_ref.dtype)


def matmul_t_tanh(w_t, a_t):
    """out = tanh(w_t @ a_t) per phase; lane dim = big spatial axis (lane-dense).

    w_t : (P, Cout, K), a_t : (P, K, M)  ->  (P, Cout, M) float32
    """
    w_t = w_t.astype(COMPUTE_DTYPE)
    a_t = a_t.astype(COMPUTE_DTYPE)
    p, cout, k = w_t.shape
    m = a_t.shape[2]
    coutp = _round_up(cout, 8)
    if coutp != cout:
        w_t = _pad_axis(w_t, 1, coutp)
    mp = _round_up(max(m, 128), 128)
    tn = min(MAX_TILE, mp)
    mp = _round_up(mp, tn)
    if mp != m:
        a_t = _pad_axis(a_t, 2, mp)
    out = pl.pallas_call(
        _matmul_t_tanh_kernel,
        out_shape=jax.ShapeDtypeStruct((p, coutp, mp), jnp.float32),
        grid_spec=pltpu.PrefetchScalarGridSpec(
            num_scalar_prefetch=0,
            grid=(p, mp // tn),
            in_specs=[pl.BlockSpec((None, coutp, k), lambda pi, i: (pi, 0, 0)),
                      pl.BlockSpec((None, k, tn), lambda pi, i: (pi, 0, i))],
            out_specs=pl.BlockSpec((None, coutp, tn), lambda pi, i: (pi, 0, i))),
        compiler_params=pltpu.CompilerParams(
            dimension_semantics=("parallel", "parallel")),
    )(w_t, a_t)
    return out[:, :cout, :m]


# ------------------------------- JAX glue ---------------------------------
# Phase decomposition of ConvTranspose2d(k=4, stride=2, padding=1):
#   out[n, co, 2j+ry, 2i+rx] = sum_{dy,dx in {0,1}, ci}
#       xpad[n, j+ry+dy, i+rx+dx, ci] * w[ci, co, 3-ry-2*dy, 3-rx-2*dx]
# where xpad is x zero-padded by 1 on each spatial side.

def _phase_weights(w_pt):
    """(Cin, Cout, 4, 4) -> (4, 4*Cin, Cout); phase p = ry*2+rx, K=(dy,dx,ci)."""
    cin, cout = w_pt.shape[0], w_pt.shape[1]
    mats = []
    for ry in range(2):
        for rx in range(2):
            sub = w_pt[:, :, (3 - ry)::-2, (3 - rx)::-2]      # (Cin,Cout,dy,dx)
            mats.append(jnp.transpose(sub, (2, 3, 0, 1)).reshape(4 * cin, cout))
    return jnp.stack(mats, axis=0)


def _phase_cols(x):
    """x: (N,H,W,Cin) -> per-phase im2col (4, N*H*W, 4*Cin), K=(dy,dx,ci)."""
    n, h, w, cin = x.shape
    xp = jnp.pad(x, ((0, 0), (1, 1), (1, 1), (0, 0)))
    cols = []
    for ry in range(2):
        for rx in range(2):
            pats = [xp[:, ry + dy:ry + dy + h, rx + dx:rx + dx + w, :]
                    for dy in range(2) for dx in range(2)]
            cols.append(jnp.stack(pats, axis=3).reshape(n * h * w, 4 * cin))
    return jnp.stack(cols, axis=0)


def _phase_cols_t(x):
    """Transposed im2col: (4, 4*Cin, N*H*W); big spatial axis last (lane-dense)."""
    n, h, w, cin = x.shape
    xp = jnp.pad(x, ((0, 0), (1, 1), (1, 1), (0, 0)))
    cols = []
    for ry in range(2):
        for rx in range(2):
            pats = [xp[:, ry + dy:ry + dy + h, rx + dx:rx + dx + w, :]
                    for dy in range(2) for dx in range(2)]
            col = jnp.stack(pats, axis=0)                     # (4, N, H, W, Cin)
            cols.append(
                jnp.transpose(col, (0, 4, 1, 2, 3)).reshape(4 * cin, n * h * w))
    return jnp.stack(cols, axis=0)


def _bn_scale_shift(stats, count, gamma, beta):
    """stats: (P, 2, C) fused sums -> per-channel scale/shift for training BN."""
    s = jnp.sum(stats, axis=0)                 # (2, C)
    mean = s[0] / count
    var = s[1] / count - mean * mean           # biased batch variance
    inv = gamma.astype(jnp.float32) * jax.lax.rsqrt(var + BN_EPS)
    return inv, beta.astype(jnp.float32) - mean * inv


def init_generator_params(key, latent_dim=100, image_channels=1, hidden_dim=64):
    ks = jax.random.split(key, 10)

    def conv_w(k, cin, cout):  # ConvTranspose2d weight layout: (Cin, Cout, 4, 4)
        return 0.05 * jax.random.normal(k, (cin, cout, 4, 4), jnp.float32)

    return {
        "w1": conv_w(ks[0], latent_dim, hidden_dim * 4),
        "g1": 1.0 + 0.1 * jax.random.normal(ks[1], (hidden_dim * 4,), jnp.float32),
        "b1": 0.1 * jax.random.normal(ks[2], (hidden_dim * 4,), jnp.float32),
        "w2": conv_w(ks[3], hidden_dim * 4, hidden_dim * 2),
        "g2": 1.0 + 0.1 * jax.random.normal(ks[4], (hidden_dim * 2,), jnp.float32),
        "b2": 0.1 * jax.random.normal(ks[5], (hidden_dim * 2,), jnp.float32),
        "w3": conv_w(ks[6], hidden_dim * 2, hidden_dim),
        "g3": 1.0 + 0.1 * jax.random.normal(ks[7], (hidden_dim,), jnp.float32),
        "b3": 0.1 * jax.random.normal(ks[8], (hidden_dim,), jnp.float32),
        "w4": conv_w(ks[9], hidden_dim, image_channels),
    }


def generator_forward(z_nchw, p):
    """DCGAN Generator forward (training-mode BatchNorm). NCHW in, NCHW out."""
    n, latent = z_nchw.shape[0], z_nchw.shape[1]
    z = z_nchw.reshape(n, latent)

    # ---- layer 1: ConvTranspose2d(latent, 4h, k=4, s=1, p=0) + BN + ReLU ----
    # 1x1 input -> each of the 16 kernel taps is an independent output phase.
    w1 = p["w1"]
    c1 = w1.shape[1]
    w1_phases = jnp.transpose(w1, (2, 3, 0, 1)).reshape(16, latent, c1)
    y, stats = fused_matmul_stats(z.reshape(1, n, latent), w1_phases)  # (16,n,c1)
    scale, shift = _bn_scale_shift(stats, n * 16, p["g1"], p["b1"])
    y = affine_relu(y.reshape(16 * n, c1), scale, shift)
    x = jnp.transpose(y.reshape(4, 4, n, c1), (2, 0, 1, 3))            # (n,4,4,c1)

    # ---- layers 2,3: ConvTranspose2d(k=4, s=2, p=1) + BN + ReLU -------------
    for w, g, b in ((p["w2"], p["g2"], p["b2"]), (p["w3"], p["g3"], p["b3"])):
        nb, h, wd, _ = x.shape
        m = nb * h * wd
        cout = w.shape[1]
        y, stats = fused_matmul_stats(_phase_cols(x), _phase_weights(w))
        scale, shift = _bn_scale_shift(stats, 4 * m, g, b)
        y = affine_relu(y.reshape(4 * m, cout), scale, shift)
        y = y.reshape(2, 2, nb, h, wd, cout)                  # (ry,rx,n,h,w,c)
        x = jnp.transpose(y, (2, 3, 0, 4, 1, 5)).reshape(nb, 2 * h, 2 * wd, cout)

    # ---- layer 4: ConvTranspose2d(k=4, s=2, p=1) + Tanh (lane-dense, NCHW) --
    w4 = p["w4"]
    c4 = w4.shape[1]
    nb, h, wd, _ = x.shape
    w4_t = jnp.transpose(_phase_weights(w4), (0, 2, 1))       # (4, c4, 4*cin)
    out = matmul_t_tanh(w4_t, _phase_cols_t(x))               # (4, c4, nb*h*wd)
    out = out.reshape(2, 2, c4, nb, h, wd)                    # (ry,rx,c,n,h,w)
    return jnp.transpose(out, (3, 2, 4, 0, 5, 1)).reshape(nb, c4, 2 * h, 2 * wd)


# ---------------------------- pure-JAX reference ---------------------------

def _ref_conv_transpose(x_nhwc, w_pt, stride, padding):
    k = w_pt.shape[2]
    wf = jnp.transpose(w_pt[:, :, ::-1, ::-1], (2, 3, 0, 1))
    pad = k - 1 - padding
    return jax.lax.conv_general_dilated(
        x_nhwc, wf, window_strides=(1, 1),
        padding=[(pad, pad), (pad, pad)],
        lhs_dilation=(stride, stride),
        dimension_numbers=("NHWC", "HWIO", "NHWC"),
        precision=jax.lax.Precision.HIGHEST)


def ref_forward(z_nchw, p):
    x = jnp.transpose(z_nchw, (0, 2, 3, 1)).astype(jnp.float32)
    bn_layers = [
        (p["w1"], p["g1"], p["b1"], 1, 0),
        (p["w2"], p["g2"], p["b2"], 2, 1),
        (p["w3"], p["g3"], p["b3"], 2, 1),
    ]
    for w, gamma, beta, stride, padding in bn_layers:
        y = _ref_conv_transpose(x, w, stride, padding)
        mean = jnp.mean(y, axis=(0, 1, 2))
        var = jnp.mean((y - mean) ** 2, axis=(0, 1, 2))
        y = (y - mean) / jnp.sqrt(var + BN_EPS) * gamma + beta
        x = jnp.maximum(y, 0.0)
    y = _ref_conv_transpose(x, p["w4"], 2, 1)
    return jnp.transpose(jnp.tanh(y), (0, 3, 1, 2))


# ----------------------------------- main ----------------------------------

if __name__ == "__main__":
    key = jax.random.PRNGKey(0)
    k_z, k_p = jax.random.split(key)

    # Small shapes consistent with the module: latent input (N, latent_dim, 1, 1).
    batch, latent_dim, image_channels, hidden_dim = 2, 16, 1, 8

    params = init_generator_params(k_p, latent_dim, image_channels, hidden_dim)
    z = jax.random.normal(k_z, (batch, latent_dim, 1, 1), jnp.float32)

    out = jax.block_until_ready(jax.jit(generator_forward)(z, params))
    assert out.shape == (batch, image_channels, 32, 32), out.shape

    ref = jax.block_until_ready(jax.jit(ref_forward)(z, params))
    # bf16 MXU / bf16 inter-layer activations vs. the f32 HIGHEST reference:
    # tolerance loosened accordingly (structural errors would be O(0.1-1)).
    np.testing.assert_allclose(np.asarray(out), np.asarray(ref),
                               atol=5e-2, rtol=5e-2)

    print("KERNEL_OK")
</pallas_src>

<mosaic_0001>
module attributes {stable_mosaic.version = 11 : i64} {
  func.func @_matmul_stats_kernel(%arg0: i32, %arg1: i32, %arg2: memref<1x16x16xbf16, #tpu.memory_space<vmem>>, %arg3: memref<1x16x32xbf16, #tpu.memory_space<vmem>>, %arg4: memref<1x16x32xbf16, #tpu.memory_space<vmem>>, %arg5: memref<1x2x32xf32, #tpu.memory_space<vmem>>) attributes {dimension_semantics = [#tpu.dimension_semantics<parallel>, #tpu.dimension_semantics<arbitrary>], iteration_bounds = array<i64: 16, 1>, scalar_prefetch = 0 : i64, scratch_operands = 0 : i64, tpu.core_type = #tpu.core_type<tc>, window_params = [{transform_indices = @transform_0, window_bounds = array<i64: 1, 16, 16>}, {transform_indices = @transform_1, window_bounds = array<i64: 1, 16, 32>}, {transform_indices = @transform_2, window_bounds = array<i64: 1, 16, 32>}, {transform_indices = @transform_3, window_bounds = array<i64: 1, 2, 32>}]} {
    %c0_i32 = arith.constant 0 : i32
    %0 = arith.cmpi eq, %arg1, %c0_i32 : i32
    %1 = arith.extui %0 : i1 to i32
    %c0_i32_0 = arith.constant 0 : i32
    %2 = arith.cmpi ne, %1, %c0_i32_0 : i32
    scf.if %2 {
      %cst_17 = arith.constant 0.000000e+00 : f32
      %24 = vector.broadcast %cst_17 : f32 to vector<2x32xf32>
      %c0_18 = arith.constant 0 : index
      %c0_19 = arith.constant 0 : index
      %c0_20 = arith.constant 0 : index
      %25 = vector.load %arg5[%c0_18, %c0_19, %c0_20] : memref<1x2x32xf32, #tpu.memory_space<vmem>>, vector<1x2x32xf32>
      %26 = vector.shape_cast %25 : vector<1x2x32xf32> to vector<2x32xf32>
      %27 = vector.shape_cast %24 : vector<2x32xf32> to vector<1x2x32xf32>
      tpu.vector_store %arg5[%c0_18, %c0_19, %c0_20], %27 {strides = array<i32>} : memref<1x2x32xf32, #tpu.memory_space<vmem>>, vector<1x2x32xf32>,
    } else {
    }
    %c0 = arith.constant 0 : index
    %c0_1 = arith.constant 0 : index
    %c0_2 = arith.constant 0 : index
    %3 = vector.load %arg2[%c0, %c0_1, %c0_2] : memref<1x16x16xbf16, #tpu.memory_space<vmem>>, vector<1x16x16xbf16>
    %4 = vector.shape_cast %3 : vector<1x16x16xbf16> to vector<16x16xbf16>
    %c0_3 = arith.constant 0 : index
    %c0_4 = arith.constant 0 : index
    %c0_5 = arith.constant 0 : index
    %5 = vector.load %arg3[%c0_3, %c0_4, %c0_5] : memref<1x16x32xbf16, #tpu.memory_space<vmem>>, vector<1x16x32xbf16>
    %6 = vector.shape_cast %5 : vector<1x16x32xbf16> to vector<16x32xbf16>
    %cst = arith.constant dense<0.000000e+00> : vector<16x32xf32>
    %7 = tpu.matmul %4, %6, %cst {dimension_numbers = #tpu.dot_dimension_numbers<[1], [0], [0], [1], [0, 0, 1, 1], [], []>} : vector<16x16xbf16>, vector<16x32xbf16>, vector<16x32xf32> -> vector<16x32xf32>
    %8 = arith.truncf %7 : vector<16x32xf32> to vector<16x32xbf16>
    %c0_6 = arith.constant 0 : index
    %c0_7 = arith.constant 0 : index
    %c0_8 = arith.constant 0 : index
    %9 = vector.load %arg4[%c0_6, %c0_7, %c0_8] : memref<1x16x32xbf16, #tpu.memory_space<vmem>>, vector<1x16x32xbf16>
    %10 = vector.shape_cast %9 : vector<1x16x32xbf16> to vector<16x32xbf16>
    %11 = vector.shape_cast %8 : vector<16x32xbf16> to vector<1x16x32xbf16>
    tpu.vector_store %arg4[%c0_6, %c0_7, %c0_8], %11 {strides = array<i32>} : memref<1x16x32xbf16, #tpu.memory_space<vmem>>, vector<1x16x32xbf16>,
    %c0_9 = arith.constant 0 : index
    %c0_10 = arith.constant 0 : index
    %c0_11 = arith.constant 0 : index
    %12 = vector.load %arg5[%c0_9, %c0_10, %c0_11] : memref<1x2x32xf32, #tpu.memory_space<vmem>>, vector<1x2x32xf32>
    %13 = vector.shape_cast %12 : vector<1x2x32xf32> to vector<2x32xf32>
    %cst_12 = arith.constant dense<0.000000e+00> : vector<32xf32>
    %14 = vector.multi_reduction <add>, %7, %cst_12 [0] : vector<16x32xf32> to vector<32xf32>
    %15 = vector.shape_cast %14 : vector<32xf32> to vector<1x32xf32>
    %16 = arith.mulf %7, %7 : vector<16x32xf32>
    %cst_13 = arith.constant dense<0.000000e+00> : vector<32xf32>
    %17 = vector.multi_reduction <add>, %16, %cst_13 [0] : vector<16x32xf32> to vector<32xf32>
    %18 = vector.shape_cast %17 : vector<32xf32> to vector<1x32xf32>
    %19 = tpu.concatenate %15, %18 in 0 : vector<1x32xf32>, vector<1x32xf32> -> vector<2x32xf32>
    %20 = arith.addf %13, %19 : vector<2x32xf32>
    %c0_14 = arith.constant 0 : index
    %c0_15 = arith.constant 0 : index
    %c0_16 = arith.constant 0 : index
    %21 = vector.load %arg5[%c0_14, %c0_15, %c0_16] : memref<1x2x32xf32, #tpu.memory_space<vmem>>, vector<1x2x32xf32>
    %22 = vector.shape_cast %21 : vector<1x2x32xf32> to vector<2x32xf32>
    %23 = vector.shape_cast %20 : vector<2x32xf32> to vector<1x2x32xf32>
    tpu.vector_store %arg5[%c0_14, %c0_15, %c0_16], %23 {strides = array<i32>} : memref<1x2x32xf32, #tpu.memory_space<vmem>>, vector<1x2x32xf32>,
    return
  }
  func.func @transform_0(%arg0: i32, %arg1: i32) -> (i32, i32, i32) {
    %c0_i32 = arith.constant 0 : i32
    %c0_i32_0 = arith.constant 0 : i32
    %c0_i32_1 = arith.constant 0 : i32
    return %c0_i32, %arg1, %c0_i32_0 : i32, i32, i32
  }
  func.func @transform_1(%arg0: i32, %arg1: i32) -> (i32, i32, i32) {
    %c0_i32 = arith.constant 0 : i32
    %c0_i32_0 = arith.constant 0 : i32
    %c0_i32_1 = arith.constant 0 : i32
    return %arg0, %c0_i32, %c0_i32_0 : i32, i32, i32
  }
  func.func @transform_2(%arg0: i32, %arg1: i32) -> (i32, i32, i32) {
    %c0_i32 = arith.constant 0 : i32
    %c0_i32_0 = arith.constant 0 : i32
    return %arg0, %arg1, %c0_i32 : i32, i32, i32
  }
  func.func @transform_3(%arg0: i32, %arg1: i32) -> (i32, i32, i32) {
    %c0_i32 = arith.constant 0 : i32
    %c0_i32_0 = arith.constant 0 : i32
    %c0_i32_1 = arith.constant 0 : i32
    return %arg0, %c0_i32, %c0_i32_0 : i32, i32, i32
  }
}

module attributes {stable_mosaic.version = 11 : i64} {
  func.func @_affine_relu_kernel(%arg0: i32, %arg1: memref<32x32xbf16, #tpu.memory_space<vmem>>, %arg2: memref<1x32xf32, #tpu.memory_space<vmem>>, %arg3: memref<1x32xf32, #tpu.memory_space<vmem>>, %arg4: memref<32x32xbf16, #tpu.memory_space<vmem>>) attributes {dimension_semantics = [#tpu.dimension_semantics<parallel>], iteration_bounds = array<i64: 1>, scalar_prefetch = 0 : i64, scratch_operands = 0 : i64, tpu.core_type = #tpu.core_type<tc>, window_params = [{transform_indices = @transform_0, window_bounds = array<i64: 32, 32>}, {pipeline_mode = #tpu.pipeline_mode<synchronous>, transform_indices = @transform_1, window_bounds = array<i64: 1, 32>}, {pipeline_mode = #tpu.pipeline_mode<synchronous>, transform_indices = @transform_2, window_bounds = array<i64: 1, 32>}, {transform_indices = @transform_3, window_bounds = array<i64: 32, 32>}]} {
    %c0 = arith.constant 0 : index
    %c0_0 = arith.constant 0 : index
    %0 = vector.load %arg1[%c0, %c0_0] : memref<32x32xbf16, #tpu.memory_space<vmem>>, vector<32x32xbf16>
    %1 = arith.extf %0 : vector<32x32xbf16> to vector<32x32xf32>
    %c0_1 = arith.constant 0 : index
    %c0_2 = arith.constant 0 : index
    %2 = vector.load %arg2[%c0_1, %c0_2] : memref<1x32xf32, #tpu.memory_space<vmem>>, vector<1x32xf32>
    %3 = vector.broadcast %2 : vector<1x32xf32> to vector<32x32xf32>
    %4 = arith.mulf %1, %3 : vector<32x32xf32>
    %c0_3 = arith.constant 0 : index
    %c0_4 = arith.constant 0 : index
    %5 = vector.load %arg3[%c0_3, %c0_4] : memref<1x32xf32, #tpu.memory_space<vmem>>, vector<1x32xf32>
    %6 = vector.broadcast %5 : vector<1x32xf32> to vector<32x32xf32>
    %7 = arith.addf %4, %6 : vector<32x32xf32>
    %cst = arith.constant 0.000000e+00 : f32
    %8 = vector.broadcast %cst : f32 to vector<32x32xf32>
    %9 = arith.maximumf %7, %8 : vector<32x32xf32>
    %10 = arith.truncf %9 : vector<32x32xf32> to vector<32x32xbf16>
    %c0_5 = arith.constant 0 : index
    %c0_6 = arith.constant 0 : index
    %11 = vector.load %arg4[%c0_5, %c0_6] : memref<32x32xbf16, #tpu.memory_space<vmem>>, vector<32x32xbf16>
    tpu.vector_store %arg4[%c0_5, %c0_6], %10 {strides = array<i32>} : memref<32x32xbf16, #tpu.memory_space<vmem>>, vector<32x32xbf16>,
    return
  }
  func.func @transform_0(%arg0: i32) -> (i32, i32) {
    %c0_i32 = arith.constant 0 : i32
    %c0_i32_0 = arith.constant 0 : i32
    return %arg0, %c0_i32 : i32, i32
  }
  func.func @transform_1(%arg0: i32) -> (i32, i32) {
    %c0_i32 = arith.constant 0 : i32
    %c0_i32_0 = arith.constant 0 : i32
    %c0_i32_1 = arith.constant 0 : i32
    return %c0_i32, %c0_i32_0 : i32, i32
  }
  func.func @transform_2(%arg0: i32) -> (i32, i32) {
    %c0_i32 = arith.constant 0 : i32
    %c0_i32_0 = arith.constant 0 : i32
    %c0_i32_1 = arith.constant 0 : i32
    return %c0_i32, %c0_i32_0 : i32, i32
  }
  func.func @transform_3(%arg0: i32) -> (i32, i32) {
    %c0_i32 = arith.constant 0 : i32
    %c0_i32_0 = arith.constant 0 : i32
    return %arg0, %c0_i32 : i32, i32
  }
}

module attributes {stable_mosaic.version = 11 : i64} {
  func.func @_affine_relu_kernel(%arg0: i32, %arg1: memref<128x16xbf16, #tpu.memory_space<vmem>>, %arg2: memref<1x16xf32, #tpu.memory_space<vmem>>, %arg3: memref<1x16xf32, #tpu.memory_space<vmem>>, %arg4: memref<128x16xbf16, #tpu.memory_space<vmem>>) attributes {dimension_semantics = [#tpu.dimension_semantics<parallel>], iteration_bounds = array<i64: 1>, scalar_prefetch = 0 : i64, scratch_operands = 0 : i64, tpu.core_type = #tpu.core_type<tc>, window_params = [{transform_indices = @transform_0, window_bounds = array<i64: 128, 16>}, {pipeline_mode = #tpu.pipeline_mode<synchronous>, transform_indices = @transform_1, window_bounds = array<i64: 1, 16>}, {pipeline_mode = #tpu.pipeline_mode<synchronous>, transform_indices = @transform_2, window_bounds = array<i64: 1, 16>}, {transform_indices = @transform_3, window_bounds = array<i64: 128, 16>}]} {
    %c0 = arith.constant 0 : index
    %c0_0 = arith.constant 0 : index
    %0 = vector.load %arg1[%c0, %c0_0] : memref<128x16xbf16, #tpu.memory_space<vmem>>, vector<128x16xbf16>
    %1 = arith.extf %0 : vector<128x16xbf16> to vector<128x16xf32>
    %c0_1 = arith.constant 0 : index
    %c0_2 = arith.constant 0 : index
    %2 = vector.load %arg2[%c0_1, %c0_2] : memref<1x16xf32, #tpu.memory_space<vmem>>, vector<1x16xf32>
    %3 = vector.broadcast %2 : vector<1x16xf32> to vector<128x16xf32>
    %4 = arith.mulf %1, %3 : vector<128x16xf32>
    %c0_3 = arith.constant 0 : index
    %c0_4 = arith.constant 0 : index
    %5 = vector.load %arg3[%c0_3, %c0_4] : memref<1x16xf32, #tpu.memory_space<vmem>>, vector<1x16xf32>
    %6 = vector.broadcast %5 : vector<1x16xf32> to vector<128x16xf32>
    %7 = arith.addf %4, %6 : vector<128x16xf32>
    %cst = arith.constant 0.000000e+00 : f32
    %8 = vector.broadcast %cst : f32 to vector<128x16xf32>
    %9 = arith.maximumf %7, %8 : vector<128x16xf32>
    %10 = arith.truncf %9 : vector<128x16xf32> to vector<128x16xbf16>
    %c0_5 = arith.constant 0 : index
    %c0_6 = arith.constant 0 : index
    %11 = vector.load %arg4[%c0_5, %c0_6] : memref<128x16xbf16, #tpu.memory_space<vmem>>, vector<128x16xbf16>
    tpu.vector_store %arg4[%c0_5, %c0_6], %10 {strides = array<i32>} : memref<128x16xbf16, #tpu.memory_space<vmem>>, vector<128x16xbf16>,
    return
  }
  func.func @transform_0(%arg0: i32) -> (i32, i32) {
    %c0_i32 = arith.constant 0 : i32
    %c0_i32_0 = arith.constant 0 : i32
    return %arg0, %c0_i32 : i32, i32
  }
  func.func @transform_1(%arg0: i32) -> (i32, i32) {
    %c0_i32 = arith.constant 0 : i32
    %c0_i32_0 = arith.constant 0 : i32
    %c0_i32_1 = arith.constant 0 : i32
    return %c0_i32, %c0_i32_0 : i32, i32
  }
  func.func @transform_2(%arg0: i32) -> (i32, i32) {
    %c0_i32 = arith.constant 0 : i32
    %c0_i32_0 = arith.constant 0 : i32
    %c0_i32_1 = arith.constant 0 : i32
    return %c0_i32, %c0_i32_0 : i32, i32
  }
  func.func @transform_3(%arg0: i32) -> (i32, i32) {
    %c0_i32 = arith.constant 0 : i32
    %c0_i32_0 = arith.constant 0 : i32
    return %arg0, %c0_i32 : i32, i32
  }
}

module attributes {stable_mosaic.version = 11 : i64} {
  func.func @_matmul_stats_kernel(%arg0: i32, %arg1: i32, %arg2: memref<1x32x128xbf16, #tpu.memory_space<vmem>>, %arg3: memref<1x128x16xbf16, #tpu.memory_space<vmem>>, %arg4: memref<1x32x16xbf16, #tpu.memory_space<vmem>>, %arg5: memref<1x2x16xf32, #tpu.memory_space<vmem>>) attributes {dimension_semantics = [#tpu.dimension_semantics<parallel>, #tpu.dimension_semantics<arbitrary>], iteration_bounds = array<i64: 4, 1>, scalar_prefetch = 0 : i64, scratch_operands = 0 : i64, tpu.core_type = #tpu.core_type<tc>, window_params = [{transform_indices = @transform_0, window_bounds = array<i64: 1, 32, 128>}, {transform_indices = @transform_1, window_bounds = array<i64: 1, 128, 16>}, {transform_indices = @transform_2, window_bounds = array<i64: 1, 32, 16>}, {transform_indices = @transform_3, window_bounds = array<i64: 1, 2, 16>}]} {
    %c0_i32 = arith.constant 0 : i32
    %0 = arith.cmpi eq, %arg1, %c0_i32 : i32
    %1 = arith.extui %0 : i1 to i32
    %c0_i32_0 = arith.constant 0 : i32
    %2 = arith.cmpi ne, %1, %c0_i32_0 : i32
    scf.if %2 {
      %cst_17 = arith.constant 0.000000e+00 : f32
      %24 = vector.broadcast %cst_17 : f32 to vector<2x16xf32>
      %c0_18 = arith.constant 0 : index
      %c0_19 = arith.constant 0 : index
      %c0_20 = arith.constant 0 : index
      %25 = vector.load %arg5[%c0_18, %c0_19, %c0_20] : memref<1x2x16xf32, #tpu.memory_space<vmem>>, vector<1x2x16xf32>
      %26 = vector.shape_cast %25 : vector<1x2x16xf32> to vector<2x16xf32>
      %27 = vector.shape_cast %24 : vector<2x16xf32> to vector<1x2x16xf32>
      tpu.vector_store %arg5[%c0_18, %c0_19, %c0_20], %27 {strides = array<i32>} : memref<1x2x16xf32, #tpu.memory_space<vmem>>, vector<1x2x16xf32>,
    } else {
    }
    %c0 = arith.constant 0 : index
    %c0_1 = arith.constant 0 : index
    %c0_2 = arith.constant 0 : index
    %3 = vector.load %arg2[%c0, %c0_1, %c0_2] : memref<1x32x128xbf16, #tpu.memory_space<vmem>>, vector<1x32x128xbf16>
    %4 = vector.shape_cast %3 : vector<1x32x128xbf16> to vector<32x128xbf16>
    %c0_3 = arith.constant 0 : index
    %c0_4 = arith.constant 0 : index
    %c0_5 = arith.constant 0 : index
    %5 = vector.load %arg3[%c0_3, %c0_4, %c0_5] : memref<1x128x16xbf16, #tpu.memory_space<vmem>>, vector<1x128x16xbf16>
    %6 = vector.shape_cast %5 : vector<1x128x16xbf16> to vector<128x16xbf16>
    %cst = arith.constant dense<0.000000e+00> : vector<32x16xf32>
    %7 = tpu.matmul %4, %6, %cst {dimension_numbers = #tpu.dot_dimension_numbers<[1], [0], [0], [1], [0, 0, 1, 1], [], []>} : vector<32x128xbf16>, vector<128x16xbf16>, vector<32x16xf32> -> vector<32x16xf32>
    %8 = arith.truncf %7 : vector<32x16xf32> to vector<32x16xbf16>
    %c0_6 = arith.constant 0 : index
    %c0_7 = arith.constant 0 : index
    %c0_8 = arith.constant 0 : index
    %9 = vector.load %arg4[%c0_6, %c0_7, %c0_8] : memref<1x32x16xbf16, #tpu.memory_space<vmem>>, vector<1x32x16xbf16>
    %10 = vector.shape_cast %9 : vector<1x32x16xbf16> to vector<32x16xbf16>
    %11 = vector.shape_cast %8 : vector<32x16xbf16> to vector<1x32x16xbf16>
    tpu.vector_store %arg4[%c0_6, %c0_7, %c0_8], %11 {strides = array<i32>} : memref<1x32x16xbf16, #tpu.memory_space<vmem>>, vector<1x32x16xbf16>,
    %c0_9 = arith.constant 0 : index
    %c0_10 = arith.constant 0 : index
    %c0_11 = arith.constant 0 : index
    %12 = vector.load %arg5[%c0_9, %c0_10, %c0_11] : memref<1x2x16xf32, #tpu.memory_space<vmem>>, vector<1x2x16xf32>
    %13 = vector.shape_cast %12 : vector<1x2x16xf32> to vector<2x16xf32>
    %cst_12 = arith.constant dense<0.000000e+00> : vector<16xf32>
    %14 = vector.multi_reduction <add>, %7, %cst_12 [0] : vector<32x16xf32> to vector<16xf32>
    %15 = vector.shape_cast %14 : vector<16xf32> to vector<1x16xf32>
    %16 = arith.mulf %7, %7 : vector<32x16xf32>
    %cst_13 = arith.constant dense<0.000000e+00> : vector<16xf32>
    %17 = vector.multi_reduction <add>, %16, %cst_13 [0] : vector<32x16xf32> to vector<16xf32>
    %18 = vector.shape_cast %17 : vector<16xf32> to vector<1x16xf32>
    %19 = tpu.concatenate %15, %18 in 0 : vector<1x16xf32>, vector<1x16xf32> -> vector<2x16xf32>
    %20 = arith.addf %13, %19 : vector<2x16xf32>
    %c0_14 = arith.constant 0 : index
    %c0_15 = arith.constant 0 : index
    %c0_16 = arith.constant 0 : index
    %21 = vector.load %arg5[%c0_14, %c0_15, %c0_16] : memref<1x2x16xf32, #tpu.memory_space<vmem>>, vector<1x2x16xf32>
    %22 = vector.shape_cast %21 : vector<1x2x16xf32> to vector<2x16xf32>
    %23 = vector.shape_cast %20 : vector<2x16xf32> to vector<1x2x16xf32>
    tpu.vector_store %arg5[%c0_14, %c0_15, %c0_16], %23 {strides = array<i32>} : memref<1x2x16xf32, #tpu.memory_space<vmem>>, vector<1x2x16xf32>,
    return
  }
  func.func @transform_0(%arg0: i32, %arg1: i32) -> (i32, i32, i32) {
    %c0_i32 = arith.constant 0 : i32
    %c0_i32_0 = arith.constant 0 : i32
    return %arg0, %arg1, %c0_i32 : i32, i32, i32
  }
  func.func @transform_1(%arg0: i32, %arg1: i32) -> (i32, i32, i32) {
    %c0_i32 = arith.constant 0 : i32
    %c0_i32_0 = arith.constant 0 : i32
    %c0_i32_1 = arith.constant 0 : i32
    return %arg0, %c0_i32, %c0_i32_0 : i32, i32, i32
  }
  func.func @transform_2(%arg0: i32, %arg1: i32) -> (i32, i32, i32) {
    %c0_i32 = arith.constant 0 : i32
    %c0_i32_0 = arith.constant 0 : i32
    return %arg0, %arg1, %c0_i32 : i32, i32, i32
  }
  func.func @transform_3(%arg0: i32, %arg1: i32) -> (i32, i32, i32) {
    %c0_i32 = arith.constant 0 : i32
    %c0_i32_0 = arith.constant 0 : i32
    %c0_i32_1 = arith.constant 0 : i32
    return %arg0, %c0_i32, %c0_i32_0 : i32, i32, i32
  }
}

module attributes {stable_mosaic.version = 11 : i64} {
  func.func @_affine_relu_kernel(%arg0: i32, %arg1: memref<512x8xbf16, #tpu.memory_space<vmem>>, %arg2: memref<1x8xf32, #tpu.memory_space<vmem>>, %arg3: memref<1x8xf32, #tpu.memory_space<vmem>>, %arg4: memref<512x8xbf16, #tpu.memory_space<vmem>>) attributes {dimension_semantics = [#tpu.dimension_semantics<parallel>], iteration_bounds = array<i64: 1>, scalar_prefetch = 0 : i64, scratch_operands = 0 : i64, tpu.core_type = #tpu.core_type<tc>, window_params = [{transform_indices = @transform_0, window_bounds = array<i64: 512, 8>}, {pipeline_mode = #tpu.pipeline_mode<synchronous>, transform_indices = @transform_1, window_bounds = array<i64: 1, 8>}, {pipeline_mode = #tpu.pipeline_mode<synchronous>, transform_indices = @transform_2, window_bounds = array<i64: 1, 8>}, {transform_indices = @transform_3, window_bounds = array<i64: 512, 8>}]} {
    %c0 = arith.constant 0 : index
    %c0_0 = arith.constant 0 : index
    %0 = vector.load %arg1[%c0, %c0_0] : memref<512x8xbf16, #tpu.memory_space<vmem>>, vector<512x8xbf16>
    %1 = arith.extf %0 : vector<512x8xbf16> to vector<512x8xf32>
    %c0_1 = arith.constant 0 : index
    %c0_2 = arith.constant 0 : index
    %2 = vector.load %arg2[%c0_1, %c0_2] : memref<1x8xf32, #tpu.memory_space<vmem>>, vector<1x8xf32>
    %3 = vector.broadcast %2 : vector<1x8xf32> to vector<512x8xf32>
    %4 = arith.mulf %1, %3 : vector<512x8xf32>
    %c0_3 = arith.constant 0 : index
    %c0_4 = arith.constant 0 : index
    %5 = vector.load %arg3[%c0_3, %c0_4] : memref<1x8xf32, #tpu.memory_space<vmem>>, vector<1x8xf32>
    %6 = vector.broadcast %5 : vector<1x8xf32> to vector<512x8xf32>
    %7 = arith.addf %4, %6 : vector<512x8xf32>
    %cst = arith.constant 0.000000e+00 : f32
    %8 = vector.broadcast %cst : f32 to vector<512x8xf32>
    %9 = arith.maximumf %7, %8 : vector<512x8xf32>
    %10 = arith.truncf %9 : vector<512x8xf32> to vector<512x8xbf16>
    %c0_5 = arith.constant 0 : index
    %c0_6 = arith.constant 0 : index
    %11 = vector.load %arg4[%c0_5, %c0_6] : memref<512x8xbf16, #tpu.memory_space<vmem>>, vector<512x8xbf16>
    tpu.vector_store %arg4[%c0_5, %c0_6], %10 {strides = array<i32>} : memref<512x8xbf16, #tpu.memory_space<vmem>>, vector<512x8xbf16>,
    return
  }
  func.func @transform_0(%arg0: i32) -> (i32, i32) {
    %c0_i32 = arith.constant 0 : i32
    %c0_i32_0 = arith.constant 0 : i32
    return %arg0, %c0_i32 : i32, i32
  }
  func.func @transform_1(%arg0: i32) -> (i32, i32) {
    %c0_i32 = arith.constant 0 : i32
    %c0_i32_0 = arith.constant 0 : i32
    %c0_i32_1 = arith.constant 0 : i32
    return %c0_i32, %c0_i32_0 : i32, i32
  }
  func.func @transform_2(%arg0: i32) -> (i32, i32) {
    %c0_i32 = arith.constant 0 : i32
    %c0_i32_0 = arith.constant 0 : i32
    %c0_i32_1 = arith.constant 0 : i32
    return %c0_i32, %c0_i32_0 : i32, i32
  }
  func.func @transform_3(%arg0: i32) -> (i32, i32) {
    %c0_i32 = arith.constant 0 : i32
    %c0_i32_0 = arith.constant 0 : i32
    return %arg0, %c0_i32 : i32, i32
  }
}

module attributes {stable_mosaic.version = 11 : i64} {
  func.func @_matmul_stats_kernel(%arg0: i32, %arg1: i32, %arg2: memref<1x128x64xbf16, #tpu.memory_space<vmem>>, %arg3: memref<1x64x8xbf16, #tpu.memory_space<vmem>>, %arg4: memref<1x128x8xbf16, #tpu.memory_space<vmem>>, %arg5: memref<1x2x8xf32, #tpu.memory_space<vmem>>) attributes {dimension_semantics = [#tpu.dimension_semantics<parallel>, #tpu.dimension_semantics<arbitrary>], iteration_bounds = array<i64: 4, 1>, scalar_prefetch = 0 : i64, scratch_operands = 0 : i64, tpu.core_type = #tpu.core_type<tc>, window_params = [{transform_indices = @transform_0, window_bounds = array<i64: 1, 128, 64>}, {transform_indices = @transform_1, window_bounds = array<i64: 1, 64, 8>}, {transform_indices = @transform_2, window_bounds = array<i64: 1, 128, 8>}, {transform_indices = @transform_3, window_bounds = array<i64: 1, 2, 8>}]} {
    %c0_i32 = arith.constant 0 : i32
    %0 = arith.cmpi eq, %arg1, %c0_i32 : i32
    %1 = arith.extui %0 : i1 to i32
    %c0_i32_0 = arith.constant 0 : i32
    %2 = arith.cmpi ne, %1, %c0_i32_0 : i32
    scf.if %2 {
      %cst_17 = arith.constant 0.000000e+00 : f32
      %24 = vector.broadcast %cst_17 : f32 to vector<2x8xf32>
      %c0_18 = arith.constant 0 : index
      %c0_19 = arith.constant 0 : index
      %c0_20 = arith.constant 0 : index
      %25 = vector.load %arg5[%c0_18, %c0_19, %c0_20] : memref<1x2x8xf32, #tpu.memory_space<vmem>>, vector<1x2x8xf32>
      %26 = vector.shape_cast %25 : vector<1x2x8xf32> to vector<2x8xf32>
      %27 = vector.shape_cast %24 : vector<2x8xf32> to vector<1x2x8xf32>
      tpu.vector_store %arg5[%c0_18, %c0_19, %c0_20], %27 {strides = array<i32>} : memref<1x2x8xf32, #tpu.memory_space<vmem>>, vector<1x2x8xf32>,
    } else {
    }
    %c0 = arith.constant 0 : index
    %c0_1 = arith.constant 0 : index
    %c0_2 = arith.constant 0 : index
    %3 = vector.load %arg2[%c0, %c0_1, %c0_2] : memref<1x128x64xbf16, #tpu.memory_space<vmem>>, vector<1x128x64xbf16>
    %4 = vector.shape_cast %3 : vector<1x128x64xbf16> to vector<128x64xbf16>
    %c0_3 = arith.constant 0 : index
    %c0_4 = arith.constant 0 : index
    %c0_5 = arith.constant 0 : index
    %5 = vector.load %arg3[%c0_3, %c0_4, %c0_5] : memref<1x64x8xbf16, #tpu.memory_space<vmem>>, vector<1x64x8xbf16>
    %6 = vector.shape_cast %5 : vector<1x64x8xbf16> to vector<64x8xbf16>
    %cst = arith.constant dense<0.000000e+00> : vector<128x8xf32>
    %7 = tpu.matmul %4, %6, %cst {dimension_numbers = #tpu.dot_dimension_numbers<[1], [0], [0], [1], [0, 0, 1, 1], [], []>} : vector<128x64xbf16>, vector<64x8xbf16>, vector<128x8xf32> -> vector<128x8xf32>
    %8 = arith.truncf %7 : vector<128x8xf32> to vector<128x8xbf16>
    %c0_6 = arith.constant 0 : index
    %c0_7 = arith.constant 0 : index
    %c0_8 = arith.constant 0 : index
    %9 = vector.load %arg4[%c0_6, %c0_7, %c0_8] : memref<1x128x8xbf16, #tpu.memory_space<vmem>>, vector<1x128x8xbf16>
    %10 = vector.shape_cast %9 : vector<1x128x8xbf16> to vector<128x8xbf16>
    %11 = vector.shape_cast %8 : vector<128x8xbf16> to vector<1x128x8xbf16>
    tpu.vector_store %arg4[%c0_6, %c0_7, %c0_8], %11 {strides = array<i32>} : memref<1x128x8xbf16, #tpu.memory_space<vmem>>, vector<1x128x8xbf16>,
    %c0_9 = arith.constant 0 : index
    %c0_10 = arith.constant 0 : index
    %c0_11 = arith.constant 0 : index
    %12 = vector.load %arg5[%c0_9, %c0_10, %c0_11] : memref<1x2x8xf32, #tpu.memory_space<vmem>>, vector<1x2x8xf32>
    %13 = vector.shape_cast %12 : vector<1x2x8xf32> to vector<2x8xf32>
    %cst_12 = arith.constant dense<0.000000e+00> : vector<8xf32>
    %14 = vector.multi_reduction <add>, %7, %cst_12 [0] : vector<128x8xf32> to vector<8xf32>
    %15 = vector.shape_cast %14 : vector<8xf32> to vector<1x8xf32>
    %16 = arith.mulf %7, %7 : vector<128x8xf32>
    %cst_13 = arith.constant dense<0.000000e+00> : vector<8xf32>
    %17 = vector.multi_reduction <add>, %16, %cst_13 [0] : vector<128x8xf32> to vector<8xf32>
    %18 = vector.shape_cast %17 : vector<8xf32> to vector<1x8xf32>
    %19 = tpu.concatenate %15, %18 in 0 : vector<1x8xf32>, vector<1x8xf32> -> vector<2x8xf32>
    %20 = arith.addf %13, %19 : vector<2x8xf32>
    %c0_14 = arith.constant 0 : index
    %c0_15 = arith.constant 0 : index
    %c0_16 = arith.constant 0 : index
    %21 = vector.load %arg5[%c0_14, %c0_15, %c0_16] : memref<1x2x8xf32, #tpu.memory_space<vmem>>, vector<1x2x8xf32>
    %22 = vector.shape_cast %21 : vector<1x2x8xf32> to vector<2x8xf32>
    %23 = vector.shape_cast %20 : vector<2x8xf32> to vector<1x2x8xf32>
    tpu.vector_store %arg5[%c0_14, %c0_15, %c0_16], %23 {strides = array<i32>} : memref<1x2x8xf32, #tpu.memory_space<vmem>>, vector<1x2x8xf32>,
    return
  }
  func.func @transform_0(%arg0: i32, %arg1: i32) -> (i32, i32, i32) {
    %c0_i32 = arith.constant 0 : i32
    %c0_i32_0 = arith.constant 0 : i32
    return %arg0, %arg1, %c0_i32 : i32, i32, i32
  }
  func.func @transform_1(%arg0: i32, %arg1: i32) -> (i32, i32, i32) {
    %c0_i32 = arith.constant 0 : i32
    %c0_i32_0 = arith.constant 0 : i32
    %c0_i32_1 = arith.constant 0 : i32
    return %arg0, %c0_i32, %c0_i32_0 : i32, i32, i32
  }
  func.func @transform_2(%arg0: i32, %arg1: i32) -> (i32, i32, i32) {
    %c0_i32 = arith.constant 0 : i32
    %c0_i32_0 = arith.constant 0 : i32
    return %arg0, %arg1, %c0_i32 : i32, i32, i32
  }
  func.func @transform_3(%arg0: i32, %arg1: i32) -> (i32, i32, i32) {
    %c0_i32 = arith.constant 0 : i32
    %c0_i32_0 = arith.constant 0 : i32
    %c0_i32_1 = arith.constant 0 : i32
    return %arg0, %c0_i32, %c0_i32_0 : i32, i32, i32
  }
}

module attributes {stable_mosaic.version = 11 : i64} {
  func.func @_matmul_t_tanh_kernel(%arg0: i32, %arg1: i32, %arg2: memref<1x8x32xbf16, #tpu.memory_space<vmem>>, %arg3: memref<1x32x512xbf16, #tpu.memory_space<vmem>>, %arg4: memref<1x8x512xf32, #tpu.memory_space<vmem>>) attributes {dimension_semantics = [#tpu.dimension_semantics<parallel>, #tpu.dimension_semantics<parallel>], iteration_bounds = array<i64: 4, 1>, scalar_prefetch = 0 : i64, scratch_operands = 0 : i64, tpu.core_type = #tpu.core_type<tc>, window_params = [{transform_indices = @transform_0, window_bounds = array<i64: 1, 8, 32>}, {transform_indices = @transform_1, window_bounds = array<i64: 1, 32, 512>}, {transform_indices = @transform_2, window_bounds = array<i64: 1, 8, 512>}]} {
    %c0 = arith.constant 0 : index
    %c0_0 = arith.constant 0 : index
    %c0_1 = arith.constant 0 : index
    %0 = vector.load %arg2[%c0, %c0_0, %c0_1] : memref<1x8x32xbf16, #tpu.memory_space<vmem>>, vector<1x8x32xbf16>
    %1 = vector.shape_cast %0 : vector<1x8x32xbf16> to vector<8x32xbf16>
    %c0_2 = arith.constant 0 : index
    %c0_3 = arith.constant 0 : index
    %c0_4 = arith.constant 0 : index
    %2 = vector.load %arg3[%c0_2, %c0_3, %c0_4] : memref<1x32x512xbf16, #tpu.memory_space<vmem>>, vector<1x32x512xbf16>
    %3 = vector.shape_cast %2 : vector<1x32x512xbf16> to vector<32x512xbf16>
    %cst = arith.constant dense<0.000000e+00> : vector<8x512xf32>
    %4 = tpu.matmul %1, %3, %cst {dimension_numbers = #tpu.dot_dimension_numbers<[1], [0], [0], [1], [0, 0, 1, 1], [], []>} : vector<8x32xbf16>, vector<32x512xbf16>, vector<8x512xf32> -> vector<8x512xf32>
    %5 = math.tanh %4 : vector<8x512xf32>
    %c0_5 = arith.constant 0 : index
    %c0_6 = arith.constant 0 : index
    %c0_7 = arith.constant 0 : index
    %6 = vector.load %arg4[%c0_5, %c0_6, %c0_7] : memref<1x8x512xf32, #tpu.memory_space<vmem>>, vector<1x8x512xf32>
    %7 = vector.shape_cast %6 : vector<1x8x512xf32> to vector<8x512xf32>
    %8 = vector.shape_cast %5 : vector<8x512xf32> to vector<1x8x512xf32>
    tpu.vector_store %arg4[%c0_5, %c0_6, %c0_7], %8 {strides = array<i32>} : memref<1x8x512xf32, #tpu.memory_space<vmem>>, vector<1x8x512xf32>,
    return
  }
  func.func @transform_0(%arg0: i32, %arg1: i32) -> (i32, i32, i32) {
    %c0_i32 = arith.constant 0 : i32
    %c0_i32_0 = arith.constant 0 : i32
    %c0_i32_1 = arith.constant 0 : i32
    return %arg0, %c0_i32, %c0_i32_0 : i32, i32, i32
  }
  func.func @transform_1(%arg0: i32, %arg1: i32) -> (i32, i32, i32) {
    %c0_i32 = arith.constant 0 : i32
    %c0_i32_0 = arith.constant 0 : i32
    return %arg0, %c0_i32, %arg1 : i32, i32, i32
  }
  func.func @transform_2(%arg0: i32, %arg1: i32) -> (i32, i32, i32) {
    %c0_i32 = arith.constant 0 : i32
    %c0_i32_0 = arith.constant 0 : i32
    return %arg0, %c0_i32, %arg1 : i32, i32, i32
  }
}

</mosaic_0001>

<llo_original>
// kernel: generator_forward.7
$region0: #{generator_forward.7}
  #allocation0 [shape = 'u32[]', space=smem, size = 0x4, offset = 0x4, fixed_abs, tag = 'smem constant byte address 0x4 - core index']
  #allocation1 [shape = 'u32[144,128]{1,0:T(1,128)}', space=vmem, size = 0x12000, scoped, tag = 'internal scratch']
  %s0 = inlined_call_operand.vmem [shape: bf16[1,16,16], index: 0, kind: input, shape index: {}]
  %s1 = inlined_call_operand.vmem [shape: bf16[16,16,32], index: 1, kind: input, shape index: {}]
  %s2 = inlined_call_operand.vmem [shape: bf16[16,16,32], index: 2, kind: output, shape index: {0}]
  %s3 = inlined_call_operand.vmem [shape: f32[16,2,32], index: 3, kind: output, shape index: {1}]
  %4 = xla_tuple %s2, %s3
  %s5 = sld [smem:[#allocation0]]
  $region53: #{generator_forward.7} parent=0
    _
  %s7 = ssub.s32 1, %s5
  %s8 = scalar_select 0, %s7, %s5
  loop: start=0, step=1, limit=18
  $region2: #{generator_forward.7} parent=0 // loop_pre_header
    _
  $region3: #{generator_forward.7} parent=0 // loop_header
    %s10 = sphi 0, %s14
    %p11 = scmp.ge.s32.totalorder %s10, 18
    %s17 = sphi 0, %s29
    %s18 = sphi 0, %s25
    %s19 = sphi 0, %s17
    %s20 = sphi 0, %s18
    %s21 = sphi 0, %s19
    %s22 = sphi 0, %s20
    %s32 = sphi 0, %s34
    %s35 = sphi 0, %s32
    %s36 = sphi 0, %s35
    %s52 = sphi 0, %s36
    %s58 = sphi 0, %s60
    %s61 = sphi 0, %s58
    %s62 = sphi 0, %s61
    %s78 = sphi 0, %s62
    %s86 = sphi 0, %s88
    %s89 = sphi 0, %s86
    %s90 = sphi 0, %s89
    %s106 = sphi 0, %s90
    %s112 = sphi 0, %s114
    %s115 = sphi 0, %s112
    %s116 = sphi 0, %s115
    %s132 = sphi 0, %s116
  $region4: #{generator_forward.7} parent=0 // loop_header_branch
    %13 = sbr.rel (%p11) target = $region8
  $region5: #{generator_forward.7} parent=0 // loop_body
    %s15 = ssub.s32 %s10, 1
    %s16 = ssub.s32 %s10, 2
    %s23 = sadd.s32 1, %s18
    %p24 = scmp.ge.s32.totalorder %s23, 1
    %s25 = scalar_select %p24, 0, %s23
    %s26 = sadd.s32 1, %s17
    %s27 = scalar_select %p24, %s26, %s17
    %p28 = scmp.ge.s32.totalorder %s27, 16
    %s29 = scalar_select %p28, 0, %s27
    %s30 = ssub.s32 %s18, %s25
    %p31 = scmp.eq.s32.totalorder %s30, 0
    %s33 = sadd.s32 %s32, 1
    %s34 = scalar_select %p31, %s32, %s33
    %p37 = pneg %p31
    %p38 = scmp.eq.s32.totalorder %s10, 15
    %p39 = por %p37, %p38
    %p40 = scmp.ne.s32.totalorder %s32, %s35
    %p41 = scmp.eq.s32.totalorder %s10, 0
    %p42 = por %p40, %p41
    %p43 = scmp.ne.s32.totalorder %s32, %s35
    %p44 = scmp.eq.s32.totalorder %s15, 15
    %p45 = por %p43, %p44
    %p46 = scmp.ne.s32.totalorder %s35, %s36
    %p47 = scmp.eq.s32.totalorder %s15, 0
    %p48 = por %p46, %p47
    %p49 = scmp.ne.s32.totalorder %s35, %s36
    %p50 = scmp.eq.s32.totalorder %s16, 15
    %p51 = por %p49, %p50
    %p53 = scmp.ne.s32.totalorder %s36, %s52
    %p54 = scmp.eq.s32.totalorder %s16, 0
    %p55 = por %p53, %p54
    %s56 = ssub.s32 %s17, %s29
    %p57 = scmp.eq.s32.totalorder %s56, 0
    %s59 = sadd.s32 %s58, 1
    %s60 = scalar_select %p57, %s58, %s59
    %p63 = pneg %p57
    %p64 = scmp.eq.s32.totalorder %s10, 15
    %p65 = por %p63, %p64
    %p66 = scmp.ne.s32.totalorder %s58, %s61
    %p67 = scmp.eq.s32.totalorder %s10, 0
    %p68 = por %p66, %p67
    %p69 = scmp.ne.s32.totalorder %s58, %s61
    %p70 = scmp.eq.s32.totalorder %s15, 15
    %p71 = por %p69, %p70
    %p72 = scmp.ne.s32.totalorder %s61, %s62
    %p73 = scmp.eq.s32.totalorder %s15, 0
    %p74 = por %p72, %p73
    %p75 = scmp.ne.s32.totalorder %s61, %s62
    %p76 = scmp.eq.s32.totalorder %s16, 15
    %p77 = por %p75, %p76
    %p79 = scmp.ne.s32.totalorder %s62, %s78
    %p80 = scmp.eq.s32.totalorder %s16, 0
    %p81 = por %p79, %p80
    %s82 = ssub.s32 %s17, %s29
    %s83 = ssub.s32 %s18, %s25
    %s84 = sor.u32 %s82, %s83
    %p85 = scmp.eq.s32.totalorder %s84, 0
    %s87 = sadd.s32 %s86, 1
    %s88 = scalar_select %p85, %s86, %s87
    %p91 = pneg %p85
    %p92 = scmp.eq.s32.totalorder %s10, 15
    %p93 = por %p91, %p92
    %p94 = scmp.ne.s32.totalorder %s86, %s89
    %p95 = scmp.eq.s32.totalorder %s10, 0
    %p96 = por %p94, %p95
    %p97 = scmp.ne.s32.totalorder %s86, %s89
    %p98 = scmp.eq.s32.totalorder %s15, 15
    %p99 = por %p97, %p98
    %p100 = scmp.ne.s32.totalorder %s89, %s90
    %p101 = scmp.eq.s32.totalorder %s15, 0
    %p102 = por %p100, %p101
    %p103 = scmp.ne.s32.totalorder %s89, %s90
    %p104 = scmp.eq.s32.totalorder %s16, 15
    %p105 = por %p103, %p104
    %p107 = scmp.ne.s32.totalorder %s90, %s106
    %p108 = scmp.eq.s32.totalorder %s16, 0
    %p109 = por %p107, %p108
    %s110 = ssub.s32 %s17, %s29
    %p111 = scmp.eq.s32.totalorder %s110, 0
    %s113 = sadd.s32 %s112, 1
    %s114 = scalar_select %p111, %s112, %s113
    %p117 = pneg %p111
    %p118 = scmp.eq.s32.totalorder %s10, 15
    %p119 = por %p117, %p118
    %p120 = scmp.ne.s32.totalorder %s112, %s115
    %p121 = scmp.eq.s32.totalorder %s10, 0
    %p122 = por %p120, %p121
    %p123 = scmp.ne.s32.totalorder %s112, %s115
    %p124 = scmp.eq.s32.totalorder %s15, 15
    %p125 = por %p123, %p124
    %p126 = scmp.ne.s32.totalorder %s115, %s116
    %p127 = scmp.eq.s32.totalorder %s15, 0
    %p128 = por %p126, %p127
    %p129 = scmp.ne.s32.totalorder %s115, %s116
    %p130 = scmp.eq.s32.totalorder %s16, 15
    %p131 = por %p129, %p130
    %p133 = scmp.ne.s32.totalorder %s116, %s132
    %p134 = scmp.eq.s32.totalorder %s16, 0
    %p135 = por %p133, %p134
    %p136 = scmp.le.s32.totalorder 1, %s10
    %p137 = scmp.lt.s32.totalorder %s10, 17
    %p138 = pnand %p136, %p137
    %p139 = pneg %p138
    // Predicated region
    $region9: #{generator_forward.7} parent=5 // pred_check
      _
    $region10: #{generator_forward.7} parent=5 // pred_check_branch
      %141 = sbr.rel (%p138) target = $region12
    $region11: #{generator_forward.7} parent=5 // pred_region
      %s142 = ssub.s32 %s10, 1
      // Predicated region
      $region13: #{generator_forward.7} parent=11 // pred_check
        %p143 = pneg %p48
      $region14: #{generator_forward.7} parent=11 // pred_check_branch
        %145 = sbr.rel (%p143) target = $region16
      $region15: #{generator_forward.7} parent=11 // pred_region
        %s146 = smul.u32 2, %s20
        %p147 = scmp.lt.s32.totalorder %s146, 1
        %s148 = scalar_select %p147, %s146, 1
        %s149 = smul.addr %s148, 4
        %s150 = scalar_lea.vmem %s0, %s149
        %s151 = smul.u32 2, %s20
      $region16: #{generator_forward.7} parent=11 // pred_fallthru
        _
    $region12: #{generator_forward.7} parent=5 // pred_fallthru
      _
    %p152 = scmp.lt.s32.totalorder %s10, 16
    // Predicated region
    $region17: #{generator_forward.7} parent=5 // pred_check
      %p153 = pneg %p152
    $region18: #{generator_forward.7} parent=5 // pred_check_branch
      %155 = sbr.rel (%p153) target = $region20
    $region19: #{generator_forward.7} parent=5 // pred_region
      // Predicated region
      $region21: #{generator_forward.7} parent=19 // pred_check
        %p156 = pneg %p68
      $region22: #{generator_forward.7} parent=19 // pred_check_branch
        %158 = sbr.rel (%p156) target = $region24
      $region23: #{generator_forward.7} parent=19 // pred_region
        %p159 = scmp.lt.s32.totalorder %s17, 15
        %s160 = scalar_select %p159, %s17, 15
        %s161 = smul.addr %s160, 2
        %s162 = smul.addr %s161, 4
        %s163 = scalar_lea.vmem %s1, %s162
      $region24: #{generator_forward.7} parent=19 // pred_fallthru
        _
    $region20: #{generator_forward.7} parent=5 // pred_fallthru
      _
    %p164 = scmp.le.s32.totalorder 1, %s10
    %p165 = scmp.lt.s32.totalorder %s10, 17
    %p166 = pnand %p164, %p165
    %p167 = pneg %p166
    // Predicated region
    $region25: #{generator_forward.7} parent=5 // pred_check
      _
    $region26: #{generator_forward.7} parent=5 // pred_check_branch
      %169 = sbr.rel (%p166) target = $region28
    $region27: #{generator_forward.7} parent=5 // pred_region
      %s170 = ssub.s32 %s10, 1
      %s171 = smul.u32 2, %s20
      %p172 = scmp.lt.s32.totalorder %s171, 1
      %s173 = scalar_select %p172, %s171, 1
      %s174 = smul.addr %s173, 4
      %s175 = scalar_lea.vmem %s0, %s174
      %p176 = pneg %p48
      %p177 = pneg %p45
      %p178 = scmp.lt.s32.totalorder %s19, 15
      %s179 = scalar_select %p178, %s19, 15
      %s180 = smul.addr %s179, 2
      %s181 = smul.addr %s180, 4
      %s182 = scalar_lea.vmem %s1, %s181
      %p183 = pneg %p74
      %p184 = pneg %p71
      %p185 = pneg %p102
      %p186 = pneg %p99
      %s187 = smul.u32 2, %s20
      %p188 = scmp.lt.s32.totalorder %s19, 15
      %s189 = scalar_select %p188, %s19, 15
      %p190 = scmp.lt.s32.totalorder %s187, 1
      %s191 = scalar_select %p190, %s187, 1
      %s192 = smul.addr %s189, 2
      %s193 = sadd.s32 %s191, %s192
      %s194 = smul.addr %s193, 4
      %s195 = scalar_lea.vmem %s2, %s194
      %p196 = pneg %p128
      %p197 = pneg %p125
      %p198 = scmp.lt.s32.totalorder %s19, 15
      %s199 = scalar_select %p198, %s19, 15
      %s200 = smul.addr %s199, 2
      %s201 = scalar_lea.vmem %s3, %s200
      %s202 = smul.u32 2, %s20
      %p203 = scmp.lt.s32.totalorder %s202, 1
      %s204 = scalar_select %p203, %s202, 1
      %s205 = smul.addr %s204, 4
      %s206 = scalar_lea.vmem %s0, %s205
      %s207 = smul.u32 2, %s20
      %p208 = scmp.lt.s32.totalorder %s19, 15
      %s209 = scalar_select %p208, %s19, 15
      %s210 = smul.addr %s209, 2
      %s211 = smul.addr %s210, 4
      %s212 = scalar_lea.vmem %s1, %s211
      %s213 = smul.u32 2, %s20
      %p214 = scmp.lt.s32.totalorder %s19, 15
      %s215 = scalar_select %p214, %s19, 15
      %p216 = scmp.lt.s32.totalorder %s213, 1
      %s217 = scalar_select %p216, %s213, 1
      %s218 = smul.addr %s215, 2
      %s219 = sadd.s32 %s217, %s218
      %s220 = smul.addr %s219, 4
      %s221 = scalar_lea.vmem %s2, %s220
      %s222 = smul.u32 2, %s20
      %p223 = scmp.lt.s32.totalorder %s19, 15
      %s224 = scalar_select %p223, %s19, 15
      %s225 = smul.addr %s224, 2
      %s226 = scalar_lea.vmem %s3, %s225
      %p228 = scmp.eq.s32.totalorder %s20, 0
      // Predicated region
      $region29: #{generator_forward.7} parent=27 // pred_check
        %p229 = pneg %p228
      $region30: #{generator_forward.7} parent=27 // pred_check_branch
        %231 = sbr.rel (%p229) target = $region32
      $region31: #{generator_forward.7} parent=27 // pred_region
        %vm232 = vcmask 254976
        %233 = vst.msk [vmem:[%s226] sm:$0x3] %vm232, 0.0
      $region32: #{generator_forward.7} parent=27 // pred_fallthru
        _
      %v234 = vld [vmem:[%s206] sm:$0xf]
      %v235 = vld [vmem:[%s206 + $0x4] sm:$0xf]
      %v236 = vld [vmem:[%s212] sm:$0xf]
      %v237 = vld [vmem:[%s212 + $0x4] sm:$0xf]
      %v240 = vunpack.c.l.b16 %v234
      %v241 = vunpack.c.l.b16 %v235
      %v242 = vpack.c.b16 %v241, %v240
      %v245 = vunpack.c.l.b16 %v236
      %v246 = vunpack.c.l.b16 %v237
      %v247 = vpack.c.b16 %v246, %v245
      %vm249 = vcmask 130048
      %v251 = vsel %vm249, %v242, 0
      %253 = vmatprep.subr.bf16.mxu0 0
      %254 = vmatpush1.bf16.msra.mxu0 %v247
      %255 = vmatprep.subr.bf16.mxu0 0
      %256 = vmatpush1.bf16.msra.mxu0 0
      %257 = vmatprep.subr.bf16.mxu0 0
      %258 = vmatpush1.bf16.msra.mxu0 0
      %259 = vmatprep.subr.bf16.mxu0 0
      %260 = vmatpush1.bf16.msra.mxu0 0
      %261 = vmatprep.subr.bf16.mxu0 0
      %262 = vmatpush1.bf16.msra.mxu0 0
      %263 = vmatprep.subr.bf16.mxu0 0
      %264 = vmatpush1.bf16.msra.mxu0 0
      %265 = vmatprep.subr.bf16.mxu0 0
      %266 = vmatpush1.bf16.msra.mxu0 0
      %267 = vmatprep.subr.bf16.mxu0 0
      %268 = vmatpush1.bf16.msra.mxu0 0
      %269 = vmatprep.subr.bf16.mxu0 0
      %270 = vmatpush1.bf16.msra.mxu0 0
      %271 = vmatprep.subr.bf16.mxu0 0
      %272 = vmatpush1.bf16.msra.mxu0 0
      %273 = vmatprep.subr.bf16.mxu0 0
      %274 = vmatpush1.bf16.msra.mxu0 0
      %275 = vmatprep.subr.bf16.mxu0 0
      %276 = vmatpush1.bf16.msra.mxu0 0
      %277 = vmatprep.subr.bf16.mxu0 0
      %278 = vmatpush1.bf16.msra.mxu0 0
      %279 = vmatprep.subr.bf16.mxu0 0
      %280 = vmatpush1.bf16.msra.mxu0 0
      %281 = vmatprep.subr.bf16.mxu0 0
      %282 = vmatpush1.bf16.msra.mxu0 0
      %283 = vmatprep.subr.bf16.mxu0 0
      %284 = vmatpush1.bf16.msra.mxu0 0
      %285 = vmatprep.mubr.bf16.mxu0 0
      %286 = vmatmul.mubr.bf16.gmra.mrb[0].mxu0 %v251
      %v287 = vpop.f32.mrb[0].mxu0
      %v288 = vadd.f32 0.0, %v287
      %v289 = vpop.f32.mrb[0].mxu0
      %v290 = vpop.f32.mrb[0].mxu0
      %v291 = vadd.f32 0.0, %v290
      %v292 = vpop.f32.mrb[0].mxu0
      %293 = vdwg.mxu0
      %v294 = vpack.c.bf16 %v291, %v288
      %v296 = vunpack.c.l.b16 %v294
      %v297 = vunpack.c.h.b16 %v294
      %v298 = vpack.c.b16 %v296, %v296
      %v299 = vpack.c.b16 %v297, %v297
      %vm302 = vcmask 257024
      %303 = vst.msk [vmem:[%s221] sm:$0xf] %vm302, %v298
      %304 = vst.msk [vmem:[%s221 + $0x4] sm:$0xf] %vm302, %v299
      %v305 = vld [vmem:[%s226] sm:$0x3]
      %vm306 = vcmask 261120
      %v307 = vsel %vm306, %v288, 0.0
      %v308 = vsel %vm306, %v291, 0.0
      %v309 = vadd.f32 %v307, %v308
      %v310 = vrot.slane %v309, 4
      %v311 = vadd.f32 %v309, %v310
      %v312 = vrot.slane %v311, 2
      %v313 = vadd.f32 %v311, %v312
      %v314 = vrot.slane %v313, 1
      %v315 = vadd.f32 %v313, %v314
      %v316 = vmul.f32 %v288, %v288
      %v317 = vmul.f32 %v291, %v291
      %v318 = vsel %vm306, %v316, 0.0
      %v319 = vsel %vm306, %v317, 0.0
      %v320 = vadd.f32 %v318, %v319
      %v321 = vrot.slane %v320, 4
      %v322 = vadd.f32 %v320, %v321
      %v323 = vrot.slane %v322, 2
      %v324 = vadd.f32 %v322, %v323
      %v325 = vrot.slane %v324, 1
      %v326 = vadd.f32 %v324, %v325
      %vm327 = vcmask 1040384
      %v328 = vsel %vm327, %v315, %v326
      %v329 = vadd.f32 %v305, %v328
      %vm330 = vcmask 254976
      %331 = vst.msk [vmem:[%s226] sm:$0x3] %vm330, %v329
      %s332 = smul.u32 2, %s20
      %p333 = scmp.lt.s32.totalorder %s19, 15
      %s334 = scalar_select %p333, %s19, 15
      %p335 = scmp.lt.s32.totalorder %s332, 1
      %s336 = scalar_select %p335, %s332, 1
      %s337 = smul.addr %s334, 2
      %s338 = sadd.s32 %s336, %s337
      %s339 = smul.addr %s338, 4
      %s340 = scalar_lea.vmem %s2, %s339
      %p341 = scmp.lt.s32.totalorder %s19, 15
      %s342 = scalar_select %p341, %s19, 15
      %s343 = smul.addr %s342, 2
      %s344 = scalar_lea.vmem %s3, %s343
      // Predicated region
      $region33: #{generator_forward.7} parent=27 // pred_check
        %p345 = pneg %p99
      $region34: #{generator_forward.7} parent=27 // pred_check_branch
        %347 = sbr.rel (%p345) target = $region36
      $region35: #{generator_forward.7} parent=27 // pred_region
        %s348 = smul.u32 2, %s20
      $region36: #{generator_forward.7} parent=27 // pred_fallthru
        _
      // Predicated region
      $region37: #{generator_forward.7} parent=27 // pred_check
        %p349 = pneg %p125
      $region38: #{generator_forward.7} parent=27 // pred_check_branch
        %351 = sbr.rel (%p349) target = $region40
      $region39: #{generator_forward.7} parent=27 // pred_region
        _
      $region40: #{generator_forward.7} parent=27 // pred_fallthru
        _
    $region28: #{generator_forward.7} parent=5 // pred_fallthru
      _
    %p352 = scmp.le.s32.totalorder 2, %s10
    // Predicated region
    $region41: #{generator_forward.7} parent=5 // pred_check
      %p353 = pneg %p352
    $region42: #{generator_forward.7} parent=5 // pred_check_branch
      %355 = sbr.rel (%p353) target = $region44
    $region43: #{generator_forward.7} parent=5 // pred_region
      %s356 = ssub.s32 %s10, 2
      // Predicated region
      $region45: #{generator_forward.7} parent=43 // pred_check
        %p357 = pneg %p105
      $region46: #{generator_forward.7} parent=43 // pred_check_branch
        %359 = sbr.rel (%p357) target = $region48
      $region47: #{generator_forward.7} parent=43 // pred_region
        %s360 = smul.u32 2, %s22
        %p361 = scmp.lt.s32.totalorder %s21, 15
        %s362 = scalar_select %p361, %s21, 15
        %p363 = scmp.lt.s32.totalorder %s360, 1
        %s364 = scalar_select %p363, %s360, 1
        %s365 = smul.addr %s362, 2
        %s366 = sadd.s32 %s364, %s365
        %s367 = smul.addr %s366, 4
        %s368 = scalar_lea.vmem %s2, %s367
      $region48: #{generator_forward.7} parent=43 // pred_fallthru
        _
      // Predicated region
      $region49: #{generator_forward.7} parent=43 // pred_check
        %p369 = pneg %p131
      $region50: #{generator_forward.7} parent=43 // pred_check_branch
        %371 = sbr.rel (%p369) target = $region52
      $region51: #{generator_forward.7} parent=43 // pred_region
        %p372 = scmp.lt.s32.totalorder %s21, 15
        %s373 = scalar_select %p372, %s21, 15
        %s374 = smul.addr %s373, 2
        %s375 = scalar_lea.vmem %s3, %s374
      $region52: #{generator_forward.7} parent=43 // pred_fallthru
        _
    $region44: #{generator_forward.7} parent=5 // pred_fallthru
      _
  $region6: #{generator_forward.7} parent=0 // loop_footer
    %s14 = sadd.s32 1, %s10
  $region7: #{generator_forward.7} parent=0 // loop_footer_branch
    %9 = sbr.rel target = $region3
  $region8: #{generator_forward.7} parent=0 // loop_exit
    _

// kernel: generator_forward.8
$region0: #{generator_forward.8}
  #allocation0 [shape = 'u32[]', space=smem, size = 0x4, offset = 0x4, fixed_abs, tag = 'smem constant byte address 0x4 - core index']
  #allocation1 [shape = 'u32[144,128]{1,0:T(1,128)}', space=vmem, size = 0x12000, scoped, tag = 'internal scratch']
  %s0 = inlined_call_operand.vmem [shape: bf16[32,32], index: 0, kind: input, shape index: {}]
  %s1 = inlined_call_operand.vmem [shape: f32[1,32], index: 1, kind: input, shape index: {}]
  %s2 = inlined_call_operand.vmem [shape: f32[1,32], index: 2, kind: input, shape index: {}]
  %s3 = inlined_call_operand.vmem [shape: bf16[32,32], index: 3, kind: output, shape index: {}]
  %s4 = sld [smem:[#allocation0]]
  $region22: #{generator_forward.8} parent=0
    _
  %s6 = ssub.s32 1, %s4
  %s7 = scalar_select 0, %s6, %s4
  // Predicated region
  $region2: #{generator_forward.8} parent=0 // pred_check
    _
  $region3: #{generator_forward.8} parent=0 // pred_check_branch
    %9 = sbr.rel (0) target = $region5
  $region4: #{generator_forward.8} parent=0 // pred_region
    _
  $region5: #{generator_forward.8} parent=0 // pred_fallthru
    _
  // Predicated region
  $region6: #{generator_forward.8} parent=0 // pred_check
    _
  $region7: #{generator_forward.8} parent=0 // pred_check_branch
    %11 = sbr.rel (0) target = $region9
  $region8: #{generator_forward.8} parent=0 // pred_region
    _
  $region9: #{generator_forward.8} parent=0 // pred_fallthru
    _
  // Predicated region
  $region10: #{generator_forward.8} parent=0 // pred_check
    _
  $region11: #{generator_forward.8} parent=0 // pred_check_branch
    %13 = sbr.rel (0) target = $region13
  $region12: #{generator_forward.8} parent=0 // pred_region
    _
  $region13: #{generator_forward.8} parent=0 // pred_fallthru
    _
  %v14 = vld [vmem:[%s0] sm:$0xf]
  %v15 = vld [vmem:[%s0 + $0x4] sm:$0xf]
  %v16 = vld [vmem:[%s0 + $0x8] sm:$0xf]
  %v17 = vld [vmem:[%s0 + $0xc] sm:$0xf]
  %v18 = vunpack.c.l.bf16 %v14
  %v19 = vunpack.c.l.bf16 %v15
  %v20 = vunpack.c.l.bf16 %v16
  %v21 = vunpack.c.l.bf16 %v17
  %v22 = vld [vmem:[%s1] sm:$0x1]
  %v24 = vlaneseq
  %v25 = vshrl.u32 %v24, 7
  %v26 = vsub.s32 0, %v25
  %v27 = vrot.slane %v22, %v26
  %v29 = vmul.f32 %v18, %v27
  %v30 = vmul.f32 %v19, %v27
  %v31 = vmul.f32 %v20, %v27
  %v32 = vmul.f32 %v21, %v27
  %v33 = vld [vmem:[%s2] sm:$0x1]
  %v35 = vlaneseq
  %v36 = vshrl.u32 %v35, 7
  %v37 = vsub.s32 0, %v36
  %v38 = vrot.slane %v33, %v37
  %v40 = vadd.f32 %v29, %v38
  %v41 = vadd.f32 %v30, %v38
  %v42 = vadd.f32 %v31, %v38
  %v43 = vadd.f32 %v32, %v38
  %v44 = vmax.f32 %v40, 0.0
  %v45 = vmax.f32 %v41, 0.0
  %v46 = vmax.f32 %v42, 0.0
  %v47 = vmax.f32 %v43, 0.0
  %v48 = vpack.c.bf16 %v45, %v44
  %v49 = vpack.c.bf16 %v47, %v46
  %v52 = vunpack.c.l.b16 %v48
  %v53 = vunpack.c.h.b16 %v48
  %v54 = vunpack.c.l.b16 %v49
  %v55 = vunpack.c.h.b16 %v49
  %v56 = vpack.c.b16 %v52, %v52
  %v57 = vpack.c.b16 %v53, %v53
  %v58 = vpack.c.b16 %v54, %v54
  %v59 = vpack.c.b16 %v55, %v55
  %vm64 = vcmask 257024
  %65 = vst.msk [vmem:[%s3] sm:$0xf] %vm64, %v56
  %66 = vst.msk [vmem:[%s3 + $0x4] sm:$0xf] %vm64, %v57
  %67 = vst.msk [vmem:[%s3 + $0x8] sm:$0xf] %vm64, %v58
  %68 = vst.msk [vmem:[%s3 + $0xc] sm:$0xf] %vm64, %v59
  // Predicated region
  $region14: #{generator_forward.8} parent=0 // pred_check
    _
  $region15: #{generator_forward.8} parent=0 // pred_check_branch
    %70 = sbr.rel (0) target = $region17
  $region16: #{generator_forward.8} parent=0 // pred_region
    _
  $region17: #{generator_forward.8} parent=0 // pred_fallthru
    _
  // Predicated region
  $region18: #{generator_forward.8} parent=0 // pred_check
    _
  $region19: #{generator_forward.8} parent=0 // pred_check_branch
    %72 = sbr.rel (0) target = $region21
  $region20: #{generator_forward.8} parent=0 // pred_region
    _
  $region21: #{generator_forward.8} parent=0 // pred_fallthru
    _

// kernel: generator_forward.10
$region0: #{generator_forward.10}
  #allocation0 [shape = 'u32[]', space=smem, size = 0x4, offset = 0x4, fixed_abs, tag = 'smem constant byte address 0x4 - core index']
  #allocation1 [shape = 'u32[144,128]{1,0:T(1,128)}', space=vmem, size = 0x12000, scoped, tag = 'internal scratch']
  %s0 = inlined_call_operand.vmem [shape: bf16[128,16], index: 0, kind: input, shape index: {}]
  %s1 = inlined_call_operand.vmem [shape: f32[1,16], index: 1, kind: input, shape index: {}]
  %s2 = inlined_call_operand.vmem [shape: f32[1,16], index: 2, kind: input, shape index: {}]
  %s3 = inlined_call_operand.vmem [shape: bf16[128,16], index: 3, kind: output, shape index: {}]
  %s4 = sld [smem:[#allocation0]]
  $region22: #{generator_forward.10} parent=0
    _
  %s6 = ssub.s32 1, %s4
  %s7 = scalar_select 0, %s6, %s4
  // Predicated region
  $region2: #{generator_forward.10} parent=0 // pred_check
    _
  $region3: #{generator_forward.10} parent=0 // pred_check_branch
    %9 = sbr.rel (0) target = $region5
  $region4: #{generator_forward.10} parent=0 // pred_region
    _
  $region5: #{generator_forward.10} parent=0 // pred_fallthru
    _
  // Predicated region
  $region6: #{generator_forward.10} parent=0 // pred_check
    _
  $region7: #{generator_forward.10} parent=0 // pred_check_branch
    %11 = sbr.rel (0) target = $region9
  $region8: #{generator_forward.10} parent=0 // pred_region
    _
  $region9: #{generator_forward.10} parent=0 // pred_fallthru
    _
  // Predicated region
  $region10: #{generator_forward.10} parent=0 // pred_check
    _
  $region11: #{generator_forward.10} parent=0 // pred_check_branch
    %13 = sbr.rel (0) target = $region13
  $region12: #{generator_forward.10} parent=0 // pred_region
    _
  $region13: #{generator_forward.10} parent=0 // pred_fallthru
    _
  %v14 = vld [vmem:[%s0] sm:$0xf]
  %v15 = vld [vmem:[%s0 + $0x4] sm:$0xf]
  %v16 = vld [vmem:[%s0 + $0x8] sm:$0xf]
  %v17 = vld [vmem:[%s0 + $0xc] sm:$0xf]
  %v18 = vld [vmem:[%s0 + $0x10] sm:$0xf]
  %v19 = vld [vmem:[%s0 + $0x14] sm:$0xf]
  %v20 = vld [vmem:[%s0 + $0x18] sm:$0xf]
  %v21 = vld [vmem:[%s0 + $0x1c] sm:$0xf]
  %v22 = vld [vmem:[%s0 + $0x20] sm:$0xf]
  %v23 = vld [vmem:[%s0 + $0x24] sm:$0xf]
  %v24 = vld [vmem:[%s0 + $0x28] sm:$0xf]
  %v25 = vld [vmem:[%s0 + $0x2c] sm:$0xf]
  %v26 = vld [vmem:[%s0 + $0x30] sm:$0xf]
  %v27 = vld [vmem:[%s0 + $0x34] sm:$0xf]
  %v28 = vld [vmem:[%s0 + $0x38] sm:$0xf]
  %v29 = vld [vmem:[%s0 + $0x3c] sm:$0xf]
  %v30 = vunpack.c.l.bf16 %v14
  %v31 = vunpack.c.l.bf16 %v15
  %v32 = vunpack.c.l.bf16 %v16
  %v33 = vunpack.c.l.bf16 %v17
  %v34 = vunpack.c.l.bf16 %v18
  %v35 = vunpack.c.l.bf16 %v19
  %v36 = vunpack.c.l.bf16 %v20
  %v37 = vunpack.c.l.bf16 %v21
  %v38 = vunpack.c.l.bf16 %v22
  %v39 = vunpack.c.l.bf16 %v23
  %v40 = vunpack.c.l.bf16 %v24
  %v41 = vunpack.c.l.bf16 %v25
  %v42 = vunpack.c.l.bf16 %v26
  %v43 = vunpack.c.l.bf16 %v27
  %v44 = vunpack.c.l.bf16 %v28
  %v45 = vunpack.c.l.bf16 %v29
  %v46 = vld [vmem:[%s1] sm:$0x1]
  %v48 = vlaneseq
  %v49 = vshrl.u32 %v48, 7
  %v50 = vsub.s32 0, %v49
  %v51 = vrot.slane %v46, %v50
  %v53 = vmul.f32 %v30, %v51
  %v54 = vmul.f32 %v31, %v51
  %v55 = vmul.f32 %v32, %v51
  %v56 = vmul.f32 %v33, %v51
  %v57 = vmul.f32 %v34, %v51
  %v58 = vmul.f32 %v35, %v51
  %v59 = vmul.f32 %v36, %v51
  %v60 = vmul.f32 %v37, %v51
  %v61 = vmul.f32 %v38, %v51
  %v62 = vmul.f32 %v39, %v51
  %v63 = vmul.f32 %v40, %v51
  %v64 = vmul.f32 %v41, %v51
  %v65 = vmul.f32 %v42, %v51
  %v66 = vmul.f32 %v43, %v51
  %v67 = vmul.f32 %v44, %v51
  %v68 = vmul.f32 %v45, %v51
  %v69 = vld [vmem:[%s2] sm:$0x1]
  %v71 = vlaneseq
  %v72 = vshrl.u32 %v71, 7
  %v73 = vsub.s32 0, %v72
  %v74 = vrot.slane %v69, %v73
  %v76 = vadd.f32 %v53, %v74
  %v77 = vadd.f32 %v54, %v74
  %v78 = vadd.f32 %v55, %v74
  %v79 = vadd.f32 %v56, %v74
  %v80 = vadd.f32 %v57, %v74
  %v81 = vadd.f32 %v58, %v74
  %v82 = vadd.f32 %v59, %v74
  %v83 = vadd.f32 %v60, %v74
  %v84 = vadd.f32 %v61, %v74
  %v85 = vadd.f32 %v62, %v74
  %v86 = vadd.f32 %v63, %v74
  %v87 = vadd.f32 %v64, %v74
  %v88 = vadd.f32 %v65, %v74
  %v89 = vadd.f32 %v66, %v74
  %v90 = vadd.f32 %v67, %v74
  %v91 = vadd.f32 %v68, %v74
  %v92 = vmax.f32 %v76, 0.0
  %v93 = vmax.f32 %v77, 0.0
  %v94 = vmax.f32 %v78, 0.0
  %v95 = vmax.f32 %v79, 0.0
  %v96 = vmax.f32 %v80, 0.0
  %v97 = vmax.f32 %v81, 0.0
  %v98 = vmax.f32 %v82, 0.0
  %v99 = vmax.f32 %v83, 0.0
  %v100 = vmax.f32 %v84, 0.0
  %v101 = vmax.f32 %v85, 0.0
  %v102 = vmax.f32 %v86, 0.0
  %v103 = vmax.f32 %v87, 0.0
  %v104 = vmax.f32 %v88, 0.0
  %v105 = vmax.f32 %v89, 0.0
  %v106 = vmax.f32 %v90, 0.0
  %v107 = vmax.f32 %v91, 0.0
  %v108 = vpack.c.bf16 %v93, %v92
  %v109 = vpack.c.bf16 %v95, %v94
  %v110 = vpack.c.bf16 %v97, %v96
  %v111 = vpack.c.bf16 %v99, %v98
  %v112 = vpack.c.bf16 %v101, %v100
  %v113 = vpack.c.bf16 %v103, %v102
  %v114 = vpack.c.bf16 %v105, %v104
  %v115 = vpack.c.bf16 %v107, %v106
  %v124 = vunpack.c.l.b16 %v108
  %v125 = vunpack.c.h.b16 %v108
  %v126 = vunpack.c.l.b16 %v109
  %v127 = vunpack.c.h.b16 %v109
  %v128 = vunpack.c.l.b16 %v110
  %v129 = vunpack.c.h.b16 %v110
  %v130 = vunpack.c.l.b16 %v111
  %v131 = vunpack.c.h.b16 %v111
  %v132 = vunpack.c.l.b16 %v112
  %v133 = vunpack.c.h.b16 %v112
  %v134 = vunpack.c.l.b16 %v113
  %v135 = vunpack.c.h.b16 %v113
  %v136 = vunpack.c.l.b16 %v114
  %v137 = vunpack.c.h.b16 %v114
  %v138 = vunpack.c.l.b16 %v115
  %v139 = vunpack.c.h.b16 %v115
  %v140 = vpack.c.b16 %v124, %v124
  %v141 = vpack.c.b16 %v125, %v125
  %v142 = vpack.c.b16 %v126, %v126
  %v143 = vpack.c.b16 %v127, %v127
  %v144 = vpack.c.b16 %v128, %v128
  %v145 = vpack.c.b16 %v129, %v129
  %v146 = vpack.c.b16 %v130, %v130
  %v147 = vpack.c.b16 %v131, %v131
  %v148 = vpack.c.b16 %v132, %v132
  %v149 = vpack.c.b16 %v133, %v133
  %v150 = vpack.c.b16 %v134, %v134
  %v151 = vpack.c.b16 %v135, %v135
  %v152 = vpack.c.b16 %v136, %v136
  %v153 = vpack.c.b16 %v137, %v137
  %v154 = vpack.c.b16 %v138, %v138
  %v155 = vpack.c.b16 %v139, %v139
  %vm172 = vcmask 125952
  %173 = vst.msk [vmem:[%s3] sm:$0xf] %vm172, %v140
  %174 = vst.msk [vmem:[%s3 + $0x4] sm:$0xf] %vm172, %v141
  %175 = vst.msk [vmem:[%s3 + $0x8] sm:$0xf] %vm172, %v142
  %176 = vst.msk [vmem:[%s3 + $0xc] sm:$0xf] %vm172, %v143
  %177 = vst.msk [vmem:[%s3 + $0x10] sm:$0xf] %vm172, %v144
  %178 = vst.msk [vmem:[%s3 + $0x14] sm:$0xf] %vm172, %v145
  %179 = vst.msk [vmem:[%s3 + $0x18] sm:$0xf] %vm172, %v146
  %180 = vst.msk [vmem:[%s3 + $0x1c] sm:$0xf] %vm172, %v147
  %181 = vst.msk [vmem:[%s3 + $0x20] sm:$0xf] %vm172, %v148
  %182 = vst.msk [vmem:[%s3 + $0x24] sm:$0xf] %vm172, %v149
  %183 = vst.msk [vmem:[%s3 + $0x28] sm:$0xf] %vm172, %v150
  %184 = vst.msk [vmem:[%s3 + $0x2c] sm:$0xf] %vm172, %v151
  %185 = vst.msk [vmem:[%s3 + $0x30] sm:$0xf] %vm172, %v152
  %186 = vst.msk [vmem:[%s3 + $0x34] sm:$0xf] %vm172, %v153
  %187 = vst.msk [vmem:[%s3 + $0x38] sm:$0xf] %vm172, %v154
  %188 = vst.msk [vmem:[%s3 + $0x3c] sm:$0xf] %vm172, %v155
  // Predicated region
  $region14: #{generator_forward.10} parent=0 // pred_check
    _
  $region15: #{generator_forward.10} parent=0 // pred_check_branch
    %190 = sbr.rel (0) target = $region17
  $region16: #{generator_forward.10} parent=0 // pred_region
    _
  $region17: #{generator_forward.10} parent=0 // pred_fallthru
    _
  // Predicated region
  $region18: #{generator_forward.10} parent=0 // pred_check
    _
  $region19: #{generator_forward.10} parent=0 // pred_check_branch
    %192 = sbr.rel (0) target = $region21
  $region20: #{generator_forward.10} parent=0 // pred_region
    _
  $region21: #{generator_forward.10} parent=0 // pred_fallthru
    _

// kernel: generator_forward.9
$region0: #{generator_forward.9}
  #allocation0 [shape = 'u32[]', space=smem, size = 0x4, offset = 0x4, fixed_abs, tag = 'smem constant byte address 0x4 - core index']
  #allocation1 [shape = 'u32[144,128]{1,0:T(1,128)}', space=vmem, size = 0x12000, scoped, tag = 'internal scratch']
  %s0 = inlined_call_operand.vmem [shape: bf16[4,32,128], index: 0, kind: input, shape index: {}]
  %s1 = inlined_call_operand.vmem [shape: bf16[4,128,16], index: 1, kind: input, shape index: {}]
  %s2 = inlined_call_operand.vmem [shape: bf16[4,32,16], index: 2, kind: output, shape index: {0}]
  %s3 = inlined_call_operand.vmem [shape: f32[4,2,16], index: 3, kind: output, shape index: {1}]
  %4 = xla_tuple %s2, %s3
  %s5 = sld [smem:[#allocation0]]
  $region53: #{generator_forward.9} parent=0
    _
  %s7 = ssub.s32 1, %s5
  %s8 = scalar_select 0, %s7, %s5
  loop: start=0, step=1, limit=6
  $region2: #{generator_forward.9} parent=0 // loop_pre_header
    _
  $region3: #{generator_forward.9} parent=0 // loop_header
    %s10 = sphi 0, %s14
    %p11 = scmp.ge.s32.totalorder %s10, 6
    %s17 = sphi 0, %s29
    %s18 = sphi 0, %s25
    %s19 = sphi 0, %s17
    %s20 = sphi 0, %s18
    %s21 = sphi 0, %s19
    %s22 = sphi 0, %s20
    %s34 = sphi 0, %s36
    %s37 = sphi 0, %s34
    %s38 = sphi 0, %s37
    %s54 = sphi 0, %s38
    %s60 = sphi 0, %s62
    %s63 = sphi 0, %s60
    %s64 = sphi 0, %s63
    %s80 = sphi 0, %s64
    %s88 = sphi 0, %s90
    %s91 = sphi 0, %s88
    %s92 = sphi 0, %s91
    %s108 = sphi 0, %s92
    %s114 = sphi 0, %s116
    %s117 = sphi 0, %s114
    %s118 = sphi 0, %s117
    %s134 = sphi 0, %s118
  $region4: #{generator_forward.9} parent=0 // loop_header_branch
    %13 = sbr.rel (%p11) target = $region8
  $region5: #{generator_forward.9} parent=0 // loop_body
    %s15 = ssub.s32 %s10, 1
    %s16 = ssub.s32 %s10, 2
    %s23 = sadd.s32 1, %s18
    %p24 = scmp.ge.s32.totalorder %s23, 1
    %s25 = scalar_select %p24, 0, %s23
    %s26 = sadd.s32 1, %s17
    %s27 = scalar_select %p24, %s26, %s17
    %p28 = scmp.ge.s32.totalorder %s27, 4
    %s29 = scalar_select %p28, 0, %s27
    %s30 = ssub.s32 %s17, %s29
    %s31 = ssub.s32 %s18, %s25
    %s32 = sor.u32 %s30, %s31
    %p33 = scmp.eq.s32.totalorder %s32, 0
    %s35 = sadd.s32 %s34, 1
    %s36 = scalar_select %p33, %s34, %s35
    %p39 = pneg %p33
    %p40 = scmp.eq.s32.totalorder %s10, 3
    %p41 = por %p39, %p40
    %p42 = scmp.ne.s32.totalorder %s34, %s37
    %p43 = scmp.eq.s32.totalorder %s10, 0
    %p44 = por %p42, %p43
    %p45 = scmp.ne.s32.totalorder %s34, %s37
    %p46 = scmp.eq.s32.totalorder %s15, 3
    %p47 = por %p45, %p46
    %p48 = scmp.ne.s32.totalorder %s37, %s38
    %p49 = scmp.eq.s32.totalorder %s15, 0
    %p50 = por %p48, %p49
    %p51 = scmp.ne.s32.totalorder %s37, %s38
    %p52 = scmp.eq.s32.totalorder %s16, 3
    %p53 = por %p51, %p52
    %p55 = scmp.ne.s32.totalorder %s38, %s54
    %p56 = scmp.eq.s32.totalorder %s16, 0
    %p57 = por %p55, %p56
    %s58 = ssub.s32 %s17, %s29
    %p59 = scmp.eq.s32.totalorder %s58, 0
    %s61 = sadd.s32 %s60, 1
    %s62 = scalar_select %p59, %s60, %s61
    %p65 = pneg %p59
    %p66 = scmp.eq.s32.totalorder %s10, 3
    %p67 = por %p65, %p66
    %p68 = scmp.ne.s32.totalorder %s60, %s63
    %p69 = scmp.eq.s32.totalorder %s10, 0
    %p70 = por %p68, %p69
    %p71 = scmp.ne.s32.totalorder %s60, %s63
    %p72 = scmp.eq.s32.totalorder %s15, 3
    %p73 = por %p71, %p72
    %p74 = scmp.ne.s32.totalorder %s63, %s64
    %p75 = scmp.eq.s32.totalorder %s15, 0
    %p76 = por %p74, %p75
    %p77 = scmp.ne.s32.totalorder %s63, %s64
    %p78 = scmp.eq.s32.totalorder %s16, 3
    %p79 = por %p77, %p78
    %p81 = scmp.ne.s32.totalorder %s64, %s80
    %p82 = scmp.eq.s32.totalorder %s16, 0
    %p83 = por %p81, %p82
    %s84 = ssub.s32 %s17, %s29
    %s85 = ssub.s32 %s18, %s25
    %s86 = sor.u32 %s84, %s85
    %p87 = scmp.eq.s32.totalorder %s86, 0
    %s89 = sadd.s32 %s88, 1
    %s90 = scalar_select %p87, %s88, %s89
    %p93 = pneg %p87
    %p94 = scmp.eq.s32.totalorder %s10, 3
    %p95 = por %p93, %p94
    %p96 = scmp.ne.s32.totalorder %s88, %s91
    %p97 = scmp.eq.s32.totalorder %s10, 0
    %p98 = por %p96, %p97
    %p99 = scmp.ne.s32.totalorder %s88, %s91
    %p100 = scmp.eq.s32.totalorder %s15, 3
    %p101 = por %p99, %p100
    %p102 = scmp.ne.s32.totalorder %s91, %s92
    %p103 = scmp.eq.s32.totalorder %s15, 0
    %p104 = por %p102, %p103
    %p105 = scmp.ne.s32.totalorder %s91, %s92
    %p106 = scmp.eq.s32.totalorder %s16, 3
    %p107 = por %p105, %p106
    %p109 = scmp.ne.s32.totalorder %s92, %s108
    %p110 = scmp.eq.s32.totalorder %s16, 0
    %p111 = por %p109, %p110
    %s112 = ssub.s32 %s17, %s29
    %p113 = scmp.eq.s32.totalorder %s112, 0
    %s115 = sadd.s32 %s114, 1
    %s116 = scalar_select %p113, %s114, %s115
    %p119 = pneg %p113
    %p120 = scmp.eq.s32.totalorder %s10, 3
    %p121 = por %p119, %p120
    %p122 = scmp.ne.s32.totalorder %s114, %s117
    %p123 = scmp.eq.s32.totalorder %s10, 0
    %p124 = por %p122, %p123
    %p125 = scmp.ne.s32.totalorder %s114, %s117
    %p126 = scmp.eq.s32.totalorder %s15, 3
    %p127 = por %p125, %p126
    %p128 = scmp.ne.s32.totalorder %s117, %s118
    %p129 = scmp.eq.s32.totalorder %s15, 0
    %p130 = por %p128, %p129
    %p131 = scmp.ne.s32.totalorder %s117, %s118
    %p132 = scmp.eq.s32.totalorder %s16, 3
    %p133 = por %p131, %p132
    %p135 = scmp.ne.s32.totalorder %s118, %s134
    %p136 = scmp.eq.s32.totalorder %s16, 0
    %p137 = por %p135, %p136
    %p138 = scmp.le.s32.totalorder 1, %s10
    %p139 = scmp.lt.s32.totalorder %s10, 5
    %p140 = pnand %p138, %p139
    %p141 = pneg %p140
    // Predicated region
    $region9: #{generator_forward.9} parent=5 // pred_check
      _
    $region10: #{generator_forward.9} parent=5 // pred_check_branch
      %143 = sbr.rel (%p140) target = $region12
    $region11: #{generator_forward.9} parent=5 // pred_region
      %s144 = ssub.s32 %s10, 1
    $region12: #{generator_forward.9} parent=5 // pred_fallthru
      _
    %p145 = scmp.lt.s32.totalorder %s10, 4
    // Predicated region
    $region13: #{generator_forward.9} parent=5 // pred_check
      %p146 = pneg %p145
    $region14: #{generator_forward.9} parent=5 // pred_check_branch
      %148 = sbr.rel (%p146) target = $region16
    $region15: #{generator_forward.9} parent=5 // pred_region
      // Predicated region
      $region17: #{generator_forward.9} parent=15 // pred_check
        %p149 = pneg %p44
      $region18: #{generator_forward.9} parent=15 // pred_check_branch
        %151 = sbr.rel (%p149) target = $region20
      $region19: #{generator_forward.9} parent=15 // pred_region
        %s152 = smul.u32 4, %s18
        %p153 = scmp.lt.s32.totalorder %s17, 3
        %s154 = scalar_select %p153, %s17, 3
        %p155 = scmp.lt.s32.totalorder %s152, 3
        %s156 = scalar_select %p155, %s152, 3
        %s157 = smul.addr %s154, 4
        %s158 = sadd.s32 %s156, %s157
        %s159 = smul.addr %s158, 4
        %s160 = scalar_lea.vmem %s0, %s159
        %s161 = smul.u32 4, %s18
      $region20: #{generator_forward.9} parent=15 // pred_fallthru
        _
      // Predicated region
      $region21: #{generator_forward.9} parent=15 // pred_check
        %p162 = pneg %p70
      $region22: #{generator_forward.9} parent=15 // pred_check_branch
        %164 = sbr.rel (%p162) target = $region24
      $region23: #{generator_forward.9} parent=15 // pred_region
        %p165 = scmp.lt.s32.totalorder %s17, 3
        %s166 = scalar_select %p165, %s17, 3
        %s167 = smul.addr %s166, 16
        %s168 = smul.addr %s167, 4
        %s169 = scalar_lea.vmem %s1, %s168
      $region24: #{generator_forward.9} parent=15 // pred_fallthru
        _
    $region16: #{generator_forward.9} parent=5 // pred_fallthru
      _
    %p170 = scmp.le.s32.totalorder 1, %s10
    %p171 = scmp.lt.s32.totalorder %s10, 5
    %p172 = pnand %p170, %p171
    %p173 = pneg %p172
    // Predicated region
    $region25: #{generator_forward.9} parent=5 // pred_check
      _
    $region26: #{generator_forward.9} parent=5 // pred_check_branch
      %175 = sbr.rel (%p172) target = $region28
    $region27: #{generator_forward.9} parent=5 // pred_region
      %s176 = ssub.s32 %s10, 1
      %s177 = smul.u32 4, %s20
      %p178 = scmp.lt.s32.totalorder %s19, 3
      %s179 = scalar_select %p178, %s19, 3
      %p180 = scmp.lt.s32.totalorder %s177, 3
      %s181 = scalar_select %p180, %s177, 3
      %s182 = smul.addr %s179, 4
      %s183 = sadd.s32 %s181, %s182
      %s184 = smul.addr %s183, 4
      %s185 = scalar_lea.vmem %s0, %s184
      %p186 = pneg %p50
      %p187 = pneg %p47
      %p188 = scmp.lt.s32.totalorder %s19, 3
      %s189 = scalar_select %p188, %s19, 3
      %s190 = smul.addr %s189, 16
      %s191 = smul.addr %s190, 4
      %s192 = scalar_lea.vmem %s1, %s191
      %p193 = pneg %p76
      %p194 = pneg %p73
      %p195 = pneg %p104
      %p196 = pneg %p101
      %s197 = smul.u32 4, %s20
      %p198 = scmp.lt.s32.totalorder %s19, 3
      %s199 = scalar_select %p198, %s19, 3
      %p200 = scmp.lt.s32.totalorder %s197, 3
      %s201 = scalar_select %p200, %s197, 3
      %s202 = smul.addr %s199, 4
      %s203 = sadd.s32 %s201, %s202
      %s204 = smul.addr %s203, 4
      %s205 = scalar_lea.vmem %s2, %s204
      %p206 = pneg %p130
      %p207 = pneg %p127
      %p208 = scmp.lt.s32.totalorder %s19, 3
      %s209 = scalar_select %p208, %s19, 3
      %s210 = smul.addr %s209, 2
      %s211 = scalar_lea.vmem %s3, %s210
      %s212 = smul.u32 4, %s20
      %p213 = scmp.lt.s32.totalorder %s19, 3
      %s214 = scalar_select %p213, %s19, 3
      %p215 = scmp.lt.s32.totalorder %s212, 3
      %s216 = scalar_select %p215, %s212, 3
      %s217 = smul.addr %s214, 4
      %s218 = sadd.s32 %s216, %s217
      %s219 = smul.addr %s218, 4
      %s220 = scalar_lea.vmem %s0, %s219
      %s221 = smul.u32 4, %s20
      %p222 = scmp.lt.s32.totalorder %s19, 3
      %s223 = scalar_select %p222, %s19, 3
      %s224 = smul.addr %s223, 16
      %s225 = smul.addr %s224, 4
      %s226 = scalar_lea.vmem %s1, %s225
      %s227 = smul.u32 4, %s20
      %p228 = scmp.lt.s32.totalorder %s19, 3
      %s229 = scalar_select %p228, %s19, 3
      %p230 = scmp.lt.s32.totalorder %s227, 3
      %s231 = scalar_select %p230, %s227, 3
      %s232 = smul.addr %s229, 4
      %s233 = sadd.s32 %s231, %s232
      %s234 = smul.addr %s233, 4
      %s235 = scalar_lea.vmem %s2, %s234
      %s236 = smul.u32 4, %s20
      %p237 = scmp.lt.s32.totalorder %s19, 3
      %s238 = scalar_select %p237, %s19, 3
      %s239 = smul.addr %s238, 2
      %s240 = scalar_lea.vmem %s3, %s239
      %p242 = scmp.eq.s32.totalorder %s20, 0
      // Predicated region
      $region29: #{generator_forward.9} parent=27 // pred_check
        %p243 = pneg %p242
      $region30: #{generator_forward.9} parent=27 // pred_check_branch
        %245 = sbr.rel (%p243) target = $region32
      $region31: #{generator_forward.9} parent=27 // pred_region
        %vm246 = vcmask 123904
        %247 = vst.msk [vmem:[%s240] sm:$0x3] %vm246, 0.0
      $region32: #{generator_forward.9} parent=27 // pred_fallthru
        _
      %v248 = vld [vmem:[%s220] sm:$0xf]
      %v249 = vld [vmem:[%s220 + $0x4] sm:$0xf]
      %v250 = vld [vmem:[%s220 + $0x8] sm:$0xf]
      %v251 = vld [vmem:[%s220 + $0xc] sm:$0xf]
      %v252 = vld [vmem:[%s226] sm:$0xf]
      %v253 = vld [vmem:[%s226 + $0x4] sm:$0xf]
      %v254 = vld [vmem:[%s226 + $0x8] sm:$0xf]
      %v255 = vld [vmem:[%s226 + $0xc] sm:$0xf]
      %v256 = vld [vmem:[%s226 + $0x10] sm:$0xf]
      %v257 = vld [vmem:[%s226 + $0x14] sm:$0xf]
      %v258 = vld [vmem:[%s226 + $0x18] sm:$0xf]
      %v259 = vld [vmem:[%s226 + $0x1c] sm:$0xf]
      %v260 = vld [vmem:[%s226 + $0x20] sm:$0xf]
      %v261 = vld [vmem:[%s226 + $0x24] sm:$0xf]
      %v262 = vld [vmem:[%s226 + $0x28] sm:$0xf]
      %v263 = vld [vmem:[%s226 + $0x2c] sm:$0xf]
      %v264 = vld [vmem:[%s226 + $0x30] sm:$0xf]
      %v265 = vld [vmem:[%s226 + $0x34] sm:$0xf]
      %v266 = vld [vmem:[%s226 + $0x38] sm:$0xf]
      %v267 = vld [vmem:[%s226 + $0x3c] sm:$0xf]
      %v272 = vunpack.c.l.b16 %v248
      %v273 = vunpack.c.l.b16 %v249
      %v274 = vunpack.c.l.b16 %v250
      %v275 = vunpack.c.l.b16 %v251
      %v276 = vpack.c.b16 %v273, %v272
      %v277 = vpack.c.b16 %v275, %v274
      %v296 = vunpack.c.l.b16 %v252
      %v297 = vunpack.c.l.b16 %v253
      %v298 = vunpack.c.l.b16 %v254
      %v299 = vunpack.c.l.b16 %v255
      %v300 = vunpack.c.l.b16 %v256
      %v301 = vunpack.c.l.b16 %v257
      %v302 = vunpack.c.l.b16 %v258
      %v303 = vunpack.c.l.b16 %v259
      %v304 = vunpack.c.l.b16 %v260
      %v305 = vunpack.c.l.b16 %v261
      %v306 = vunpack.c.l.b16 %v262
      %v307 = vunpack.c.l.b16 %v263
      %v308 = vunpack.c.l.b16 %v264
      %v309 = vunpack.c.l.b16 %v265
      %v310 = vunpack.c.l.b16 %v266
      %v311 = vunpack.c.l.b16 %v267
      %v312 = vpack.c.b16 %v297, %v296
      %v313 = vpack.c.b16 %v299, %v298
      %v314 = vpack.c.b16 %v301, %v300
      %v315 = vpack.c.b16 %v303, %v302
      %v316 = vpack.c.b16 %v305, %v304
      %v317 = vpack.c.b16 %v307, %v306
      %v318 = vpack.c.b16 %v309, %v308
      %v319 = vpack.c.b16 %v311, %v310
      %328 = vmatprep.subr.bf16.mxu0 0
      %329 = vmatpush1.bf16.msra.mxu0 %v312
      %330 = vmatprep.subr.bf16.mxu0 0
      %331 = vmatpush1.bf16.msra.mxu0 %v313
      %332 = vmatprep.subr.bf16.mxu0 0
      %333 = vmatpush1.bf16.msra.mxu0 %v314
      %334 = vmatprep.subr.bf16.mxu0 0
      %335 = vmatpush1.bf16.msra.mxu0 %v315
      %336 = vmatprep.subr.bf16.mxu0 0
      %337 = vmatpush1.bf16.msra.mxu0 %v316
      %338 = vmatprep.subr.bf16.mxu0 0
      %339 = vmatpush1.bf16.msra.mxu0 %v317
      %340 = vmatprep.subr.bf16.mxu0 0
      %341 = vmatpush1.bf16.msra.mxu0 %v318
      %342 = vmatprep.subr.bf16.mxu0 0
      %343 = vmatpush1.bf16.msra.mxu0 %v319
      %344 = vmatprep.subr.bf16.mxu0 0
      %345 = vmatpush1.bf16.msra.mxu0 0
      %346 = vmatprep.subr.bf16.mxu0 0
      %347 = vmatpush1.bf16.msra.mxu0 0
      %348 = vmatprep.subr.bf16.mxu0 0
      %349 = vmatpush1.bf16.msra.mxu0 0
      %350 = vmatprep.subr.bf16.mxu0 0
      %351 = vmatpush1.bf16.msra.mxu0 0
      %352 = vmatprep.subr.bf16.mxu0 0
      %353 = vmatpush1.bf16.msra.mxu0 0
      %354 = vmatprep.subr.bf16.mxu0 0
      %355 = vmatpush1.bf16.msra.mxu0 0
      %356 = vmatprep.subr.bf16.mxu0 0
      %357 = vmatpush1.bf16.msra.mxu0 0
      %358 = vmatprep.subr.bf16.mxu0 0
      %359 = vmatpush1.bf16.msra.mxu0 0
      %360 = vmatprep.mubr.bf16.mxu0 0
      %361 = vmatmul.mubr.bf16.gmra.mrb[0].mxu0 %v276
      %v362 = vpop.f32.mrb[0].mxu0
      %v363 = vadd.f32 0.0, %v362
      %v364 = vpop.f32.mrb[0].mxu0
      %v365 = vpop.f32.mrb[0].mxu0
      %v366 = vadd.f32 0.0, %v365
      %v367 = vpop.f32.mrb[0].mxu0
      %368 = vmatprep.mubr.bf16.mxu0 0
      %369 = vmatmul.mubr.bf16.gmra.mrb[0].mxu0 %v277
      %v370 = vpop.f32.mrb[0].mxu0
      %v371 = vadd.f32 0.0, %v370
      %v372 = vpop.f32.mrb[0].mxu0
      %v373 = vpop.f32.mrb[0].mxu0
      %v374 = vadd.f32 0.0, %v373
      %v375 = vpop.f32.mrb[0].mxu0
      %376 = vdwg.mxu0
      %v377 = vpack.c.bf16 %v366, %v363
      %v378 = vpack.c.bf16 %v374, %v371
      %v381 = vunpack.c.l.b16 %v377
      %v382 = vunpack.c.h.b16 %v377
      %v383 = vunpack.c.l.b16 %v378
      %v384 = vunpack.c.h.b16 %v378
      %v385 = vpack.c.b16 %v381, %v381
      %v386 = vpack.c.b16 %v382, %v382
      %v387 = vpack.c.b16 %v383, %v383
      %v388 = vpack.c.b16 %v384, %v384
      %vm393 = vcmask 125952
      %394 = vst.msk [vmem:[%s235] sm:$0xf] %vm393, %v385
      %395 = vst.msk [vmem:[%s235 + $0x4] sm:$0xf] %vm393, %v386
      %396 = vst.msk [vmem:[%s235 + $0x8] sm:$0xf] %vm393, %v387
      %397 = vst.msk [vmem:[%s235 + $0xc] sm:$0xf] %vm393, %v388
      %v398 = vld [vmem:[%s240] sm:$0x3]
      %vm399 = vcmask 130048
      %v400 = vsel %vm399, %v363, 0.0
      %v401 = vsel %vm399, %v366, 0.0
      %v402 = vadd.f32 %v400, %v401
      %v403 = vsel %vm399, %v371, 0.0
      %v404 = vadd.f32 %v402, %v403
      %v405 = vsel %vm399, %v374, 0.0
      %v406 = vadd.f32 %v404, %v405
      %v407 = vrot.slane %v406, 4
      %v408 = vadd.f32 %v406, %v407
      %v409 = vrot.slane %v408, 2
      %v410 = vadd.f32 %v408, %v409
      %v411 = vrot.slane %v410, 1
      %v412 = vadd.f32 %v410, %v411
      %v413 = vmul.f32 %v363, %v363
      %v414 = vmul.f32 %v366, %v366
      %v415 = vmul.f32 %v371, %v371
      %v416 = vmul.f32 %v374, %v374
      %v417 = vsel %vm399, %v413, 0.0
      %v418 = vsel %vm399, %v414, 0.0
      %v419 = vadd.f32 %v417, %v418
      %v420 = vsel %vm399, %v415, 0.0
      %v421 = vadd.f32 %v419, %v420
      %v422 = vsel %vm399, %v416, 0.0
      %v423 = vadd.f32 %v421, %v422
      %v424 = vrot.slane %v423, 4
      %v425 = vadd.f32 %v423, %v424
      %v426 = vrot.slane %v425, 2
      %v427 = vadd.f32 %v425, %v426
      %v428 = vrot.slane %v427, 1
      %v429 = vadd.f32 %v427, %v428
      %vm430 = vcmask 1040384
      %v431 = vsel %vm430, %v412, %v429
      %v432 = vadd.f32 %v398, %v431
      %vm433 = vcmask 123904
      %434 = vst.msk [vmem:[%s240] sm:$0x3] %vm433, %v432
      %s435 = smul.u32 4, %s20
      %p436 = scmp.lt.s32.totalorder %s19, 3
      %s437 = scalar_select %p436, %s19, 3
      %p438 = scmp.lt.s32.totalorder %s435, 3
      %s439 = scalar_select %p438, %s435, 3
      %s440 = smul.addr %s437, 4
      %s441 = sadd.s32 %s439, %s440
      %s442 = smul.addr %s441, 4
      %s443 = scalar_lea.vmem %s2, %s442
      %p444 = scmp.lt.s32.totalorder %s19, 3
      %s445 = scalar_select %p444, %s19, 3
      %s446 = smul.addr %s445, 2
      %s447 = scalar_lea.vmem %s3, %s446
      // Predicated region
      $region33: #{generator_forward.9} parent=27 // pred_check
        %p448 = pneg %p101
      $region34: #{generator_forward.9} parent=27 // pred_check_branch
        %450 = sbr.rel (%p448) target = $region36
      $region35: #{generator_forward.9} parent=27 // pred_region
        %s451 = smul.u32 4, %s20
      $region36: #{generator_forward.9} parent=27 // pred_fallthru
        _
      // Predicated region
      $region37: #{generator_forward.9} parent=27 // pred_check
        %p452 = pneg %p127
      $region38: #{generator_forward.9} parent=27 // pred_check_branch
        %454 = sbr.rel (%p452) target = $region40
      $region39: #{generator_forward.9} parent=27 // pred_region
        _
      $region40: #{generator_forward.9} parent=27 // pred_fallthru
        _
    $region28: #{generator_forward.9} parent=5 // pred_fallthru
      _
    %p455 = scmp.le.s32.totalorder 2, %s10
    // Predicated region
    $region41: #{generator_forward.9} parent=5 // pred_check
      %p456 = pneg %p455
    $region42: #{generator_forward.9} parent=5 // pred_check_branch
      %458 = sbr.rel (%p456) target = $region44
    $region43: #{generator_forward.9} parent=5 // pred_region
      %s459 = ssub.s32 %s10, 2
      // Predicated region
      $region45: #{generator_forward.9} parent=43 // pred_check
        %p460 = pneg %p107
      $region46: #{generator_forward.9} parent=43 // pred_check_branch
        %462 = sbr.rel (%p460) target = $region48
      $region47: #{generator_forward.9} parent=43 // pred_region
        %s463 = smul.u32 4, %s22
        %p464 = scmp.lt.s32.totalorder %s21, 3
        %s465 = scalar_select %p464, %s21, 3
        %p466 = scmp.lt.s32.totalorder %s463, 3
        %s467 = scalar_select %p466, %s463, 3
        %s468 = smul.addr %s465, 4
        %s469 = sadd.s32 %s467, %s468
        %s470 = smul.addr %s469, 4
        %s471 = scalar_lea.vmem %s2, %s470
      $region48: #{generator_forward.9} parent=43 // pred_fallthru
        _
      // Predicated region
      $region49: #{generator_forward.9} parent=43 // pred_check
        %p472 = pneg %p133
      $region50: #{generator_forward.9} parent=43 // pred_check_branch
        %474 = sbr.rel (%p472) target = $region52
      $region51: #{generator_forward.9} parent=43 // pred_region
        %p475 = scmp.lt.s32.totalorder %s21, 3
        %s476 = scalar_select %p475, %s21, 3
        %s477 = smul.addr %s476, 2
        %s478 = scalar_lea.vmem %s3, %s477
      $region52: #{generator_forward.9} parent=43 // pred_fallthru
        _
    $region44: #{generator_forward.9} parent=5 // pred_fallthru
      _
  $region6: #{generator_forward.9} parent=0 // loop_footer
    %s14 = sadd.s32 1, %s10
  $region7: #{generator_forward.9} parent=0 // loop_footer_branch
    %9 = sbr.rel target = $region3
  $region8: #{generator_forward.9} parent=0 // loop_exit
    _

// kernel: generator_forward.11
$region0: #{generator_forward.11}
  #allocation0 [shape = 'u32[]', space=smem, size = 0x4, offset = 0x4, fixed_abs, tag = 'smem constant byte address 0x4 - core index']
  #allocation1 [shape = 'u32[144,128]{1,0:T(1,128)}', space=vmem, size = 0x12000, scoped, tag = 'internal scratch']
  %s0 = inlined_call_operand.vmem [shape: bf16[4,128,64], index: 0, kind: input, shape index: {}]
  %s1 = inlined_call_operand.vmem [shape: bf16[4,64,8], index: 1, kind: input, shape index: {}]
  %s2 = inlined_call_operand.vmem [shape: bf16[4,128,8], index: 2, kind: output, shape index: {0}]
  %s3 = inlined_call_operand.vmem [shape: f32[4,2,8], index: 3, kind: output, shape index: {1}]
  %4 = xla_tuple %s2, %s3
  %s5 = sld [smem:[#allocation0]]
  $region53: #{generator_forward.11} parent=0
    _
  %s7 = ssub.s32 1, %s5
  %s8 = scalar_select 0, %s7, %s5
  loop: start=0, step=1, limit=6
  $region2: #{generator_forward.11} parent=0 // loop_pre_header
    _
  $region3: #{generator_forward.11} parent=0 // loop_header
    %s10 = sphi 0, %s14
    %p11 = scmp.ge.s32.totalorder %s10, 6
    %s17 = sphi 0, %s29
    %s18 = sphi 0, %s25
    %s19 = sphi 0, %s17
    %s20 = sphi 0, %s18
    %s21 = sphi 0, %s19
    %s22 = sphi 0, %s20
    %s34 = sphi 0, %s36
    %s37 = sphi 0, %s34
    %s38 = sphi 0, %s37
    %s54 = sphi 0, %s38
    %s60 = sphi 0, %s62
    %s63 = sphi 0, %s60
    %s64 = sphi 0, %s63
    %s80 = sphi 0, %s64
    %s88 = sphi 0, %s90
    %s91 = sphi 0, %s88
    %s92 = sphi 0, %s91
    %s108 = sphi 0, %s92
    %s114 = sphi 0, %s116
    %s117 = sphi 0, %s114
    %s118 = sphi 0, %s117
    %s134 = sphi 0, %s118
  $region4: #{generator_forward.11} parent=0 // loop_header_branch
    %13 = sbr.rel (%p11) target = $region8
  $region5: #{generator_forward.11} parent=0 // loop_body
    %s15 = ssub.s32 %s10, 1
    %s16 = ssub.s32 %s10, 2
    %s23 = sadd.s32 1, %s18
    %p24 = scmp.ge.s32.totalorder %s23, 1
    %s25 = scalar_select %p24, 0, %s23
    %s26 = sadd.s32 1, %s17
    %s27 = scalar_select %p24, %s26, %s17
    %p28 = scmp.ge.s32.totalorder %s27, 4
    %s29 = scalar_select %p28, 0, %s27
    %s30 = ssub.s32 %s17, %s29
    %s31 = ssub.s32 %s18, %s25
    %s32 = sor.u32 %s30, %s31
    %p33 = scmp.eq.s32.totalorder %s32, 0
    %s35 = sadd.s32 %s34, 1
    %s36 = scalar_select %p33, %s34, %s35
    %p39 = pneg %p33
    %p40 = scmp.eq.s32.totalorder %s10, 3
    %p41 = por %p39, %p40
    %p42 = scmp.ne.s32.totalorder %s34, %s37
    %p43 = scmp.eq.s32.totalorder %s10, 0
    %p44 = por %p42, %p43
    %p45 = scmp.ne.s32.totalorder %s34, %s37
    %p46 = scmp.eq.s32.totalorder %s15, 3
    %p47 = por %p45, %p46
    %p48 = scmp.ne.s32.totalorder %s37, %s38
    %p49 = scmp.eq.s32.totalorder %s15, 0
    %p50 = por %p48, %p49
    %p51 = scmp.ne.s32.totalorder %s37, %s38
    %p52 = scmp.eq.s32.totalorder %s16, 3
    %p53 = por %p51, %p52
    %p55 = scmp.ne.s32.totalorder %s38, %s54
    %p56 = scmp.eq.s32.totalorder %s16, 0
    %p57 = por %p55, %p56
    %s58 = ssub.s32 %s17, %s29
    %p59 = scmp.eq.s32.totalorder %s58, 0
    %s61 = sadd.s32 %s60, 1
    %s62 = scalar_select %p59, %s60, %s61
    %p65 = pneg %p59
    %p66 = scmp.eq.s32.totalorder %s10, 3
    %p67 = por %p65, %p66
    %p68 = scmp.ne.s32.totalorder %s60, %s63
    %p69 = scmp.eq.s32.totalorder %s10, 0
    %p70 = por %p68, %p69
    %p71 = scmp.ne.s32.totalorder %s60, %s63
    %p72 = scmp.eq.s32.totalorder %s15, 3
    %p73 = por %p71, %p72
    %p74 = scmp.ne.s32.totalorder %s63, %s64
    %p75 = scmp.eq.s32.totalorder %s15, 0
    %p76 = por %p74, %p75
    %p77 = scmp.ne.s32.totalorder %s63, %s64
    %p78 = scmp.eq.s32.totalorder %s16, 3
    %p79 = por %p77, %p78
    %p81 = scmp.ne.s32.totalorder %s64, %s80
    %p82 = scmp.eq.s32.totalorder %s16, 0
    %p83 = por %p81, %p82
    %s84 = ssub.s32 %s17, %s29
    %s85 = ssub.s32 %s18, %s25
    %s86 = sor.u32 %s84, %s85
    %p87 = scmp.eq.s32.totalorder %s86, 0
    %s89 = sadd.s32 %s88, 1
    %s90 = scalar_select %p87, %s88, %s89
    %p93 = pneg %p87
    %p94 = scmp.eq.s32.totalorder %s10, 3
    %p95 = por %p93, %p94
    %p96 = scmp.ne.s32.totalorder %s88, %s91
    %p97 = scmp.eq.s32.totalorder %s10, 0
    %p98 = por %p96, %p97
    %p99 = scmp.ne.s32.totalorder %s88, %s91
    %p100 = scmp.eq.s32.totalorder %s15, 3
    %p101 = por %p99, %p100
    %p102 = scmp.ne.s32.totalorder %s91, %s92
    %p103 = scmp.eq.s32.totalorder %s15, 0
    %p104 = por %p102, %p103
    %p105 = scmp.ne.s32.totalorder %s91, %s92
    %p106 = scmp.eq.s32.totalorder %s16, 3
    %p107 = por %p105, %p106
    %p109 = scmp.ne.s32.totalorder %s92, %s108
    %p110 = scmp.eq.s32.totalorder %s16, 0
    %p111 = por %p109, %p110
    %s112 = ssub.s32 %s17, %s29
    %p113 = scmp.eq.s32.totalorder %s112, 0
    %s115 = sadd.s32 %s114, 1
    %s116 = scalar_select %p113, %s114, %s115
    %p119 = pneg %p113
    %p120 = scmp.eq.s32.totalorder %s10, 3
    %p121 = por %p119, %p120
    %p122 = scmp.ne.s32.totalorder %s114, %s117
    %p123 = scmp.eq.s32.totalorder %s10, 0
    %p124 = por %p122, %p123
    %p125 = scmp.ne.s32.totalorder %s114, %s117
    %p126 = scmp.eq.s32.totalorder %s15, 3
    %p127 = por %p125, %p126
    %p128 = scmp.ne.s32.totalorder %s117, %s118
    %p129 = scmp.eq.s32.totalorder %s15, 0
    %p130 = por %p128, %p129
    %p131 = scmp.ne.s32.totalorder %s117, %s118
    %p132 = scmp.eq.s32.totalorder %s16, 3
    %p133 = por %p131, %p132
    %p135 = scmp.ne.s32.totalorder %s118, %s134
    %p136 = scmp.eq.s32.totalorder %s16, 0
    %p137 = por %p135, %p136
    %p138 = scmp.le.s32.totalorder 1, %s10
    %p139 = scmp.lt.s32.totalorder %s10, 5
    %p140 = pnand %p138, %p139
    %p141 = pneg %p140
    // Predicated region
    $region9: #{generator_forward.11} parent=5 // pred_check
      _
    $region10: #{generator_forward.11} parent=5 // pred_check_branch
      %143 = sbr.rel (%p140) target = $region12
    $region11: #{generator_forward.11} parent=5 // pred_region
      %s144 = ssub.s32 %s10, 1
    $region12: #{generator_forward.11} parent=5 // pred_fallthru
      _
    %p145 = scmp.lt.s32.totalorder %s10, 4
    // Predicated region
    $region13: #{generator_forward.11} parent=5 // pred_check
      %p146 = pneg %p145
    $region14: #{generator_forward.11} parent=5 // pred_check_branch
      %148 = sbr.rel (%p146) target = $region16
    $region15: #{generator_forward.11} parent=5 // pred_region
      // Predicated region
      $region17: #{generator_forward.11} parent=15 // pred_check
        %p149 = pneg %p44
      $region18: #{generator_forward.11} parent=15 // pred_check_branch
        %151 = sbr.rel (%p149) target = $region20
      $region19: #{generator_forward.11} parent=15 // pred_region
        %s152 = smul.u32 16, %s18
        %p153 = scmp.lt.s32.totalorder %s17, 3
        %s154 = scalar_select %p153, %s17, 3
        %p155 = scmp.lt.s32.totalorder %s152, 15
        %s156 = scalar_select %p155, %s152, 15
        %s157 = smul.addr %s154, 16
        %s158 = sadd.s32 %s156, %s157
        %s159 = smul.addr %s158, 4
        %s160 = scalar_lea.vmem %s0, %s159
        %s161 = smul.u32 16, %s18
      $region20: #{generator_forward.11} parent=15 // pred_fallthru
        _
      // Predicated region
      $region21: #{generator_forward.11} parent=15 // pred_check
        %p162 = pneg %p70
      $region22: #{generator_forward.11} parent=15 // pred_check_branch
        %164 = sbr.rel (%p162) target = $region24
      $region23: #{generator_forward.11} parent=15 // pred_region
        %p165 = scmp.lt.s32.totalorder %s17, 3
        %s166 = scalar_select %p165, %s17, 3
        %s167 = smul.addr %s166, 8
        %s168 = smul.addr %s167, 4
        %s169 = scalar_lea.vmem %s1, %s168
      $region24: #{generator_forward.11} parent=15 // pred_fallthru
        _
    $region16: #{generator_forward.11} parent=5 // pred_fallthru
      _
    %p170 = scmp.le.s32.totalorder 1, %s10
    %p171 = scmp.lt.s32.totalorder %s10, 5
    %p172 = pnand %p170, %p171
    %p173 = pneg %p172
    // Predicated region
    $region25: #{generator_forward.11} parent=5 // pred_check
      _
    $region26: #{generator_forward.11} parent=5 // pred_check_branch
      %175 = sbr.rel (%p172) target = $region28
    $region27: #{generator_forward.11} parent=5 // pred_region
      %s176 = ssub.s32 %s10, 1
      %s177 = smul.u32 16, %s20
      %p178 = scmp.lt.s32.totalorder %s19, 3
      %s179 = scalar_select %p178, %s19, 3
      %p180 = scmp.lt.s32.totalorder %s177, 15
      %s181 = scalar_select %p180, %s177, 15
      %s182 = smul.addr %s179, 16
      %s183 = sadd.s32 %s181, %s182
      %s184 = smul.addr %s183, 4
      %s185 = scalar_lea.vmem %s0, %s184
      %p186 = pneg %p50
      %p187 = pneg %p47
      %p188 = scmp.lt.s32.totalorder %s19, 3
      %s189 = scalar_select %p188, %s19, 3
      %s190 = smul.addr %s189, 8
      %s191 = smul.addr %s190, 4
      %s192 = scalar_lea.vmem %s1, %s191
      %p193 = pneg %p76
      %p194 = pneg %p73
      %p195 = pneg %p104
      %p196 = pneg %p101
      %s197 = smul.u32 16, %s20
      %p198 = scmp.lt.s32.totalorder %s19, 3
      %s199 = scalar_select %p198, %s19, 3
      %p200 = scmp.lt.s32.totalorder %s197, 15
      %s201 = scalar_select %p200, %s197, 15
      %s202 = smul.addr %s199, 16
      %s203 = sadd.s32 %s201, %s202
      %s204 = smul.addr %s203, 4
      %s205 = scalar_lea.vmem %s2, %s204
      %p206 = pneg %p130
      %p207 = pneg %p127
      %p208 = scmp.lt.s32.totalorder %s19, 3
      %s209 = scalar_select %p208, %s19, 3
      %s210 = smul.addr %s209, 2
      %s211 = scalar_lea.vmem %s3, %s210
      %s212 = smul.u32 16, %s20
      %p213 = scmp.lt.s32.totalorder %s19, 3
      %s214 = scalar_select %p213, %s19, 3
      %p215 = scmp.lt.s32.totalorder %s212, 15
      %s216 = scalar_select %p215, %s212, 15
      %s217 = smul.addr %s214, 16
      %s218 = sadd.s32 %s216, %s217
      %s219 = smul.addr %s218, 4
      %s220 = scalar_lea.vmem %s0, %s219
      %s221 = smul.u32 16, %s20
      %p222 = scmp.lt.s32.totalorder %s19, 3
      %s223 = scalar_select %p222, %s19, 3
      %s224 = smul.addr %s223, 8
      %s225 = smul.addr %s224, 4
      %s226 = scalar_lea.vmem %s1, %s225
      %s227 = smul.u32 16, %s20
      %p228 = scmp.lt.s32.totalorder %s19, 3
      %s229 = scalar_select %p228, %s19, 3
      %p230 = scmp.lt.s32.totalorder %s227, 15
      %s231 = scalar_select %p230, %s227, 15
      %s232 = smul.addr %s229, 16
      %s233 = sadd.s32 %s231, %s232
      %s234 = smul.addr %s233, 4
      %s235 = scalar_lea.vmem %s2, %s234
      %s236 = smul.u32 16, %s20
      %p237 = scmp.lt.s32.totalorder %s19, 3
      %s238 = scalar_select %p237, %s19, 3
      %s239 = smul.addr %s238, 2
      %s240 = scalar_lea.vmem %s3, %s239
      %p242 = scmp.eq.s32.totalorder %s20, 0
      // Predicated region
      $region29: #{generator_forward.11} parent=27 // pred_check
        %p243 = pneg %p242
      $region30: #{generator_forward.11} parent=27 // pred_check_branch
        %245 = sbr.rel (%p243) target = $region32
      $region31: #{generator_forward.11} parent=27 // pred_region
        %vm246 = vcmask 58368
        %247 = vst.msk [vmem:[%s240] sm:$0x3] %vm246, 0.0
      $region32: #{generator_forward.11} parent=27 // pred_fallthru
        _
      %v248 = vld [vmem:[%s220] sm:$0xf]
      %v249 = vld [vmem:[%s220 + $0x4] sm:$0xf]
      %v250 = vld [vmem:[%s220 + $0x8] sm:$0xf]
      %v251 = vld [vmem:[%s220 + $0xc] sm:$0xf]
      %v252 = vld [vmem:[%s220 + $0x10] sm:$0xf]
      %v253 = vld [vmem:[%s220 + $0x14] sm:$0xf]
      %v254 = vld [vmem:[%s220 + $0x18] sm:$0xf]
      %v255 = vld [vmem:[%s220 + $0x1c] sm:$0xf]
      %v256 = vld [vmem:[%s220 + $0x20] sm:$0xf]
      %v257 = vld [vmem:[%s220 + $0x24] sm:$0xf]
      %v258 = vld [vmem:[%s220 + $0x28] sm:$0xf]
      %v259 = vld [vmem:[%s220 + $0x2c] sm:$0xf]
      %v260 = vld [vmem:[%s220 + $0x30] sm:$0xf]
      %v261 = vld [vmem:[%s220 + $0x34] sm:$0xf]
      %v262 = vld [vmem:[%s220 + $0x38] sm:$0xf]
      %v263 = vld [vmem:[%s220 + $0x3c] sm:$0xf]
      %v264 = vld [vmem:[%s226] sm:$0xf]
      %v265 = vld [vmem:[%s226 + $0x4] sm:$0xf]
      %v266 = vld [vmem:[%s226 + $0x8] sm:$0xf]
      %v267 = vld [vmem:[%s226 + $0xc] sm:$0xf]
      %v268 = vld [vmem:[%s226 + $0x10] sm:$0xf]
      %v269 = vld [vmem:[%s226 + $0x14] sm:$0xf]
      %v270 = vld [vmem:[%s226 + $0x18] sm:$0xf]
      %v271 = vld [vmem:[%s226 + $0x1c] sm:$0xf]
      %v288 = vunpack.c.l.b16 %v248
      %v289 = vunpack.c.l.b16 %v249
      %v290 = vunpack.c.l.b16 %v250
      %v291 = vunpack.c.l.b16 %v251
      %v292 = vunpack.c.l.b16 %v252
      %v293 = vunpack.c.l.b16 %v253
      %v294 = vunpack.c.l.b16 %v254
      %v295 = vunpack.c.l.b16 %v255
      %v296 = vunpack.c.l.b16 %v256
      %v297 = vunpack.c.l.b16 %v257
      %v298 = vunpack.c.l.b16 %v258
      %v299 = vunpack.c.l.b16 %v259
      %v300 = vunpack.c.l.b16 %v260
      %v301 = vunpack.c.l.b16 %v261
      %v302 = vunpack.c.l.b16 %v262
      %v303 = vunpack.c.l.b16 %v263
      %v304 = vpack.c.b16 %v289, %v288
      %v305 = vpack.c.b16 %v291, %v290
      %v306 = vpack.c.b16 %v293, %v292
      %v307 = vpack.c.b16 %v295, %v294
      %v308 = vpack.c.b16 %v297, %v296
      %v309 = vpack.c.b16 %v299, %v298
      %v310 = vpack.c.b16 %v301, %v300
      %v311 = vpack.c.b16 %v303, %v302
      %v320 = vunpack.c.l.b16 %v264
      %v321 = vunpack.c.l.b16 %v265
      %v322 = vunpack.c.l.b16 %v266
      %v323 = vunpack.c.l.b16 %v267
      %v324 = vunpack.c.l.b16 %v268
      %v325 = vunpack.c.l.b16 %v269
      %v326 = vunpack.c.l.b16 %v270
      %v327 = vunpack.c.l.b16 %v271
      %v328 = vpack.c.b16 %v321, %v320
      %v329 = vpack.c.b16 %v323, %v322
      %v330 = vpack.c.b16 %v325, %v324
      %v331 = vpack.c.b16 %v327, %v326
      %vm336 = vcmask 523264
      %v338 = vsel %vm336, %v304, 0
      %v341 = vsel %vm336, %v305, 0
      %v344 = vsel %vm336, %v306, 0
      %v347 = vsel %vm336, %v307, 0
      %v350 = vsel %vm336, %v308, 0
      %v353 = vsel %vm336, %v309, 0
      %v356 = vsel %vm336, %v310, 0
      %v359 = vsel %vm336, %v311, 0
      %361 = vmatprep.subr.bf16.mxu0 0
      %362 = vmatpush1.bf16.msra.mxu0 %v328
      %363 = vmatprep.subr.bf16.mxu0 0
      %364 = vmatpush1.bf16.msra.mxu0 %v329
      %365 = vmatprep.subr.bf16.mxu0 0
      %366 = vmatpush1.bf16.msra.mxu0 %v330
      %367 = vmatprep.subr.bf16.mxu0 0
      %368 = vmatpush1.bf16.msra.mxu0 %v331
      %369 = vmatprep.subr.bf16.mxu0 0
      %370 = vmatpush1.bf16.msra.mxu0 0
      %371 = vmatprep.subr.bf16.mxu0 0
      %372 = vmatpush1.bf16.msra.mxu0 0
      %373 = vmatprep.subr.bf16.mxu0 0
      %374 = vmatpush1.bf16.msra.mxu0 0
      %375 = vmatprep.subr.bf16.mxu0 0
      %376 = vmatpush1.bf16.msra.mxu0 0
      %377 = vmatprep.subr.bf16.mxu0 0
      %378 = vmatpush1.bf16.msra.mxu0 0
      %379 = vmatprep.subr.bf16.mxu0 0
      %380 = vmatpush1.bf16.msra.mxu0 0
      %381 = vmatprep.subr.bf16.mxu0 0
      %382 = vmatpush1.bf16.msra.mxu0 0
      %383 = vmatprep.subr.bf16.mxu0 0
      %384 = vmatpush1.bf16.msra.mxu0 0
      %385 = vmatprep.subr.bf16.mxu0 0
      %386 = vmatpush1.bf16.msra.mxu0 0
      %387 = vmatprep.subr.bf16.mxu0 0
      %388 = vmatpush1.bf16.msra.mxu0 0
      %389 = vmatprep.subr.bf16.mxu0 0
      %390 = vmatpush1.bf16.msra.mxu0 0
      %391 = vmatprep.subr.bf16.mxu0 0
      %392 = vmatpush1.bf16.msra.mxu0 0
      %393 = vmatprep.mubr.bf16.mxu0 0
      %394 = vmatmul.mubr.bf16.gmra.mrb[0].mxu0 %v338
      %v395 = vpop.f32.mrb[0].mxu0
      %v396 = vadd.f32 0.0, %v395
      %v397 = vpop.f32.mrb[0].mxu0
      %v398 = vpop.f32.mrb[0].mxu0
      %v399 = vadd.f32 0.0, %v398
      %v400 = vpop.f32.mrb[0].mxu0
      %401 = vmatprep.mubr.bf16.mxu0 0
      %402 = vmatmul.mubr.bf16.gmra.mrb[0].mxu0 %v341
      %v403 = vpop.f32.mrb[0].mxu0
      %v404 = vadd.f32 0.0, %v403
      %v405 = vpop.f32.mrb[0].mxu0
      %v406 = vpop.f32.mrb[0].mxu0
      %v407 = vadd.f32 0.0, %v406
      %v408 = vpop.f32.mrb[0].mxu0
      %409 = vmatprep.mubr.bf16.mxu0 0
      %410 = vmatmul.mubr.bf16.gmra.mrb[0].mxu0 %v344
      %v411 = vpop.f32.mrb[0].mxu0
      %v412 = vadd.f32 0.0, %v411
      %v413 = vpop.f32.mrb[0].mxu0
      %v414 = vpop.f32.mrb[0].mxu0
      %v415 = vadd.f32 0.0, %v414
      %v416 = vpop.f32.mrb[0].mxu0
      %417 = vmatprep.mubr.bf16.mxu0 0
      %418 = vmatmul.mubr.bf16.gmra.mrb[0].mxu0 %v347
      %v419 = vpop.f32.mrb[0].mxu0
      %v420 = vadd.f32 0.0, %v419
      %v421 = vpop.f32.mrb[0].mxu0
      %v422 = vpop.f32.mrb[0].mxu0
      %v423 = vadd.f32 0.0, %v422
      %v424 = vpop.f32.mrb[0].mxu0
      %425 = vmatprep.mubr.bf16.mxu0 0
      %426 = vmatmul.mubr.bf16.gmra.mrb[0].mxu0 %v350
      %v427 = vpop.f32.mrb[0].mxu0
      %v428 = vadd.f32 0.0, %v427
      %v429 = vpop.f32.mrb[0].mxu0
      %v430 = vpop.f32.mrb[0].mxu0
      %v431 = vadd.f32 0.0, %v430
      %v432 = vpop.f32.mrb[0].mxu0
      %433 = vmatprep.mubr.bf16.mxu0 0
      %434 = vmatmul.mubr.bf16.gmra.mrb[0].mxu0 %v353
      %v435 = vpop.f32.mrb[0].mxu0
      %v436 = vadd.f32 0.0, %v435
      %v437 = vpop.f32.mrb[0].mxu0
      %v438 = vpop.f32.mrb[0].mxu0
      %v439 = vadd.f32 0.0, %v438
      %v440 = vpop.f32.mrb[0].mxu0
      %441 = vmatprep.mubr.bf16.mxu0 0
      %442 = vmatmul.mubr.bf16.gmra.mrb[0].mxu0 %v356
      %v443 = vpop.f32.mrb[0].mxu0
      %v444 = vadd.f32 0.0, %v443
      %v445 = vpop.f32.mrb[0].mxu0
      %v446 = vpop.f32.mrb[0].mxu0
      %v447 = vadd.f32 0.0, %v446
      %v448 = vpop.f32.mrb[0].mxu0
      %449 = vmatprep.mubr.bf16.mxu0 0
      %450 = vmatmul.mubr.bf16.gmra.mrb[0].mxu0 %v359
      %v451 = vpop.f32.mrb[0].mxu0
      %v452 = vadd.f32 0.0, %v451
      %v453 = vpop.f32.mrb[0].mxu0
      %v454 = vpop.f32.mrb[0].mxu0
      %v455 = vadd.f32 0.0, %v454
      %v456 = vpop.f32.mrb[0].mxu0
      %457 = vdwg.mxu0
      %v458 = vpack.c.bf16 %v399, %v396
      %v459 = vpack.c.bf16 %v407, %v404
      %v460 = vpack.c.bf16 %v415, %v412
      %v461 = vpack.c.bf16 %v423, %v420
      %v462 = vpack.c.bf16 %v431, %v428
      %v463 = vpack.c.bf16 %v439, %v436
      %v464 = vpack.c.bf16 %v447, %v444
      %v465 = vpack.c.bf16 %v455, %v452
      %v474 = vunpack.c.l.b16 %v458
      %v475 = vunpack.c.h.b16 %v458
      %v476 = vunpack.c.l.b16 %v459
      %v477 = vunpack.c.h.b16 %v459
      %v478 = vunpack.c.l.b16 %v460
      %v479 = vunpack.c.h.b16 %v460
      %v480 = vunpack.c.l.b16 %v461
      %v481 = vunpack.c.h.b16 %v461
      %v482 = vunpack.c.l.b16 %v462
      %v483 = vunpack.c.h.b16 %v462
      %v484 = vunpack.c.l.b16 %v463
      %v485 = vunpack.c.h.b16 %v463
      %v486 = vunpack.c.l.b16 %v464
      %v487 = vunpack.c.h.b16 %v464
      %v488 = vunpack.c.l.b16 %v465
      %v489 = vunpack.c.h.b16 %v465
      %v490 = vpack.c.b16 %v474, %v474
      %v491 = vpack.c.b16 %v475, %v475
      %v492 = vpack.c.b16 %v476, %v476
      %v493 = vpack.c.b16 %v477, %v477
      %v494 = vpack.c.b16 %v478, %v478
      %v495 = vpack.c.b16 %v479, %v479
      %v496 = vpack.c.b16 %v480, %v480
      %v497 = vpack.c.b16 %v481, %v481
      %v498 = vpack.c.b16 %v482, %v482
      %v499 = vpack.c.b16 %v483, %v483
      %v500 = vpack.c.b16 %v484, %v484
      %v501 = vpack.c.b16 %v485, %v485
      %v502 = vpack.c.b16 %v486, %v486
      %v503 = vpack.c.b16 %v487, %v487
      %v504 = vpack.c.b16 %v488, %v488
      %v505 = vpack.c.b16 %v489, %v489
      %vm522 = vcmask 60416
      %523 = vst.msk [vmem:[%s235] sm:$0xf] %vm522, %v490
      %524 = vst.msk [vmem:[%s235 + $0x4] sm:$0xf] %vm522, %v491
      %525 = vst.msk [vmem:[%s235 + $0x8] sm:$0xf] %vm522, %v492
      %526 = vst.msk [vmem:[%s235 + $0xc] sm:$0xf] %vm522, %v493
      %527 = vst.msk [vmem:[%s235 + $0x10] sm:$0xf] %vm522, %v494
      %528 = vst.msk [vmem:[%s235 + $0x14] sm:$0xf] %vm522, %v495
      %529 = vst.msk [vmem:[%s235 + $0x18] sm:$0xf] %vm522, %v496
      %530 = vst.msk [vmem:[%s235 + $0x1c] sm:$0xf] %vm522, %v497
      %531 = vst.msk [vmem:[%s235 + $0x20] sm:$0xf] %vm522, %v498
      %532 = vst.msk [vmem:[%s235 + $0x24] sm:$0xf] %vm522, %v499
      %533 = vst.msk [vmem:[%s235 + $0x28] sm:$0xf] %vm522, %v500
      %534 = vst.msk [vmem:[%s235 + $0x2c] sm:$0xf] %vm522, %v501
      %535 = vst.msk [vmem:[%s235 + $0x30] sm:$0xf] %vm522, %v502
      %536 = vst.msk [vmem:[%s235 + $0x34] sm:$0xf] %vm522, %v503
      %537 = vst.msk [vmem:[%s235 + $0x38] sm:$0xf] %vm522, %v504
      %538 = vst.msk [vmem:[%s235 + $0x3c] sm:$0xf] %vm522, %v505
      %v539 = vld [vmem:[%s240] sm:$0x3]
      %vm540 = vcmask 64512
      %v541 = vsel %vm540, %v396, 0.0
      %v542 = vsel %vm540, %v399, 0.0
      %v543 = vadd.f32 %v541, %v542
      %v544 = vsel %vm540, %v404, 0.0
      %v545 = vadd.f32 %v543, %v544
      %v546 = vsel %vm540, %v407, 0.0
      %v547 = vadd.f32 %v545, %v546
      %v548 = vsel %vm540, %v412, 0.0
      %v549 = vadd.f32 %v547, %v548
      %v550 = vsel %vm540, %v415, 0.0
      %v551 = vadd.f32 %v549, %v550
      %v552 = vsel %vm540, %v420, 0.0
      %v553 = vadd.f32 %v551, %v552
      %v554 = vsel %vm540, %v423, 0.0
      %v555 = vadd.f32 %v553, %v554
      %v556 = vsel %vm540, %v428, 0.0
      %v557 = vadd.f32 %v555, %v556
      %v558 = vsel %vm540, %v431, 0.0
      %v559 = vadd.f32 %v557, %v558
      %v560 = vsel %vm540, %v436, 0.0
      %v561 = vadd.f32 %v559, %v560
      %v562 = vsel %vm540, %v439, 0.0
      %v563 = vadd.f32 %v561, %v562
      %v564 = vsel %vm540, %v444, 0.0
      %v565 = vadd.f32 %v563, %v564
      %v566 = vsel %vm540, %v447, 0.0
      %v567 = vadd.f32 %v565, %v566
      %v568 = vsel %vm540, %v452, 0.0
      %v569 = vadd.f32 %v567, %v568
      %v570 = vsel %vm540, %v455, 0.0
      %v571 = vadd.f32 %v569, %v570
      %v572 = vrot.slane %v571, 4
      %v573 = vadd.f32 %v571, %v572
      %v574 = vrot.slane %v573, 2
      %v575 = vadd.f32 %v573, %v574
      %v576 = vrot.slane %v575, 1
      %v577 = vadd.f32 %v575, %v576
      %v578 = vmul.f32 %v396, %v396
      %v579 = vmul.f32 %v399, %v399
      %v580 = vmul.f32 %v404, %v404
      %v581 = vmul.f32 %v407, %v407
      %v582 = vmul.f32 %v412, %v412
      %v583 = vmul.f32 %v415, %v415
      %v584 = vmul.f32 %v420, %v420
      %v585 = vmul.f32 %v423, %v423
      %v586 = vmul.f32 %v428, %v428
      %v587 = vmul.f32 %v431, %v431
      %v588 = vmul.f32 %v436, %v436
      %v589 = vmul.f32 %v439, %v439
      %v590 = vmul.f32 %v444, %v444
      %v591 = vmul.f32 %v447, %v447
      %v592 = vmul.f32 %v452, %v452
      %v593 = vmul.f32 %v455, %v455
      %v594 = vsel %vm540, %v578, 0.0
      %v595 = vsel %vm540, %v579, 0.0
      %v596 = vadd.f32 %v594, %v595
      %v597 = vsel %vm540, %v580, 0.0
      %v598 = vadd.f32 %v596, %v597
      %v599 = vsel %vm540, %v581, 0.0
      %v600 = vadd.f32 %v598, %v599
      %v601 = vsel %vm540, %v582, 0.0
      %v602 = vadd.f32 %v600, %v601
      %v603 = vsel %vm540, %v583, 0.0
      %v604 = vadd.f32 %v602, %v603
      %v605 = vsel %vm540, %v584, 0.0
      %v606 = vadd.f32 %v604, %v605
      %v607 = vsel %vm540, %v585, 0.0
      %v608 = vadd.f32 %v606, %v607
      %v609 = vsel %vm540, %v586, 0.0
      %v610 = vadd.f32 %v608, %v609
      %v611 = vsel %vm540, %v587, 0.0
      %v612 = vadd.f32 %v610, %v611
      %v613 = vsel %vm540, %v588, 0.0
      %v614 = vadd.f32 %v612, %v613
      %v615 = vsel %vm540, %v589, 0.0
      %v616 = vadd.f32 %v614, %v615
      %v617 = vsel %vm540, %v590, 0.0
      %v618 = vadd.f32 %v616, %v617
      %v619 = vsel %vm540, %v591, 0.0
      %v620 = vadd.f32 %v618, %v619
      %v621 = vsel %vm540, %v592, 0.0
      %v622 = vadd.f32 %v620, %v621
      %v623 = vsel %vm540, %v593, 0.0
      %v624 = vadd.f32 %v622, %v623
      %v625 = vrot.slane %v624, 4
      %v626 = vadd.f32 %v624, %v625
      %v627 = vrot.slane %v626, 2
      %v628 = vadd.f32 %v626, %v627
      %v629 = vrot.slane %v628, 1
      %v630 = vadd.f32 %v628, %v629
      %vm631 = vcmask 1040384
      %v632 = vsel %vm631, %v577, %v630
      %v633 = vadd.f32 %v539, %v632
      %vm634 = vcmask 58368
      %635 = vst.msk [vmem:[%s240] sm:$0x3] %vm634, %v633
      %s636 = smul.u32 16, %s20
      %p637 = scmp.lt.s32.totalorder %s19, 3
      %s638 = scalar_select %p637, %s19, 3
      %p639 = scmp.lt.s32.totalorder %s636, 15
      %s640 = scalar_select %p639, %s636, 15
      %s641 = smul.addr %s638, 16
      %s642 = sadd.s32 %s640, %s641
      %s643 = smul.addr %s642, 4
      %s644 = scalar_lea.vmem %s2, %s643
      %p645 = scmp.lt.s32.totalorder %s19, 3
      %s646 = scalar_select %p645, %s19, 3
      %s647 = smul.addr %s646, 2
      %s648 = scalar_lea.vmem %s3, %s647
      // Predicated region
      $region33: #{generator_forward.11} parent=27 // pred_check
        %p649 = pneg %p101
      $region34: #{generator_forward.11} parent=27 // pred_check_branch
        %651 = sbr.rel (%p649) target = $region36
      $region35: #{generator_forward.11} parent=27 // pred_region
        %s652 = smul.u32 16, %s20
      $region36: #{generator_forward.11} parent=27 // pred_fallthru
        _
      // Predicated region
      $region37: #{generator_forward.11} parent=27 // pred_check
        %p653 = pneg %p127
      $region38: #{generator_forward.11} parent=27 // pred_check_branch
        %655 = sbr.rel (%p653) target = $region40
      $region39: #{generator_forward.11} parent=27 // pred_region
        _
      $region40: #{generator_forward.11} parent=27 // pred_fallthru
        _
    $region28: #{generator_forward.11} parent=5 // pred_fallthru
      _
    %p656 = scmp.le.s32.totalorder 2, %s10
    // Predicated region
    $region41: #{generator_forward.11} parent=5 // pred_check
      %p657 = pneg %p656
    $region42: #{generator_forward.11} parent=5 // pred_check_branch
      %659 = sbr.rel (%p657) target = $region44
    $region43: #{generator_forward.11} parent=5 // pred_region
      %s660 = ssub.s32 %s10, 2
      // Predicated region
      $region45: #{generator_forward.11} parent=43 // pred_check
        %p661 = pneg %p107
      $region46: #{generator_forward.11} parent=43 // pred_check_branch
        %663 = sbr.rel (%p661) target = $region48
      $region47: #{generator_forward.11} parent=43 // pred_region
        %s664 = smul.u32 16, %s22
        %p665 = scmp.lt.s32.totalorder %s21, 3
        %s666 = scalar_select %p665, %s21, 3
        %p667 = scmp.lt.s32.totalorder %s664, 15
        %s668 = scalar_select %p667, %s664, 15
        %s669 = smul.addr %s666, 16
        %s670 = sadd.s32 %s668, %s669
        %s671 = smul.addr %s670, 4
        %s672 = scalar_lea.vmem %s2, %s671
      $region48: #{generator_forward.11} parent=43 // pred_fallthru
        _
      // Predicated region
      $region49: #{generator_forward.11} parent=43 // pred_check
        %p673 = pneg %p133
      $region50: #{generator_forward.11} parent=43 // pred_check_branch
        %675 = sbr.rel (%p673) target = $region52
      $region51: #{generator_forward.11} parent=43 // pred_region
        %p676 = scmp.lt.s32.totalorder %s21, 3
        %s677 = scalar_select %p676, %s21, 3
        %s678 = smul.addr %s677, 2
        %s679 = scalar_lea.vmem %s3, %s678
      $region52: #{generator_forward.11} parent=43 // pred_fallthru
        _
    $region44: #{generator_forward.11} parent=5 // pred_fallthru
      _
  $region6: #{generator_forward.11} parent=0 // loop_footer
    %s14 = sadd.s32 1, %s10
  $region7: #{generator_forward.11} parent=0 // loop_footer_branch
    %9 = sbr.rel target = $region3
  $region8: #{generator_forward.11} parent=0 // loop_exit
    _

// kernel: generator_forward.12
$region0: #{generator_forward.12}
  #allocation0 [shape = 'u32[]', space=smem, size = 0x4, offset = 0x4, fixed_abs, tag = 'smem constant byte address 0x4 - core index']
  #allocation1 [shape = 'u32[144,128]{1,0:T(1,128)}', space=vmem, size = 0x12000, scoped, tag = 'internal scratch']
  %s0 = inlined_call_operand.vmem [shape: bf16[512,8], index: 0, kind: input, shape index: {}]
  %s1 = inlined_call_operand.vmem [shape: f32[1,8], index: 1, kind: input, shape index: {}]
  %s2 = inlined_call_operand.vmem [shape: f32[1,8], index: 2, kind: input, shape index: {}]
  %s3 = inlined_call_operand.vmem [shape: bf16[512,8], index: 3, kind: output, shape index: {}]
  %s4 = sld [smem:[#allocation0]]
  $region22: #{generator_forward.12} parent=0
    _
  %s6 = ssub.s32 1, %s4
  %s7 = scalar_select 0, %s6, %s4
  // Predicated region
  $region2: #{generator_forward.12} parent=0 // pred_check
    _
  $region3: #{generator_forward.12} parent=0 // pred_check_branch
    %9 = sbr.rel (0) target = $region5
  $region4: #{generator_forward.12} parent=0 // pred_region
    _
  $region5: #{generator_forward.12} parent=0 // pred_fallthru
    _
  // Predicated region
  $region6: #{generator_forward.12} parent=0 // pred_check
    _
  $region7: #{generator_forward.12} parent=0 // pred_check_branch
    %11 = sbr.rel (0) target = $region9
  $region8: #{generator_forward.12} parent=0 // pred_region
    _
  $region9: #{generator_forward.12} parent=0 // pred_fallthru
    _
  // Predicated region
  $region10: #{generator_forward.12} parent=0 // pred_check
    _
  $region11: #{generator_forward.12} parent=0 // pred_check_branch
    %13 = sbr.rel (0) target = $region13
  $region12: #{generator_forward.12} parent=0 // pred_region
    _
  $region13: #{generator_forward.12} parent=0 // pred_fallthru
    _
  %v14 = vld [vmem:[%s0] sm:$0xf]
  %v15 = vld [vmem:[%s0 + $0x4] sm:$0xf]
  %v16 = vld [vmem:[%s0 + $0x8] sm:$0xf]
  %v17 = vld [vmem:[%s0 + $0xc] sm:$0xf]
  %v18 = vld [vmem:[%s0 + $0x10] sm:$0xf]
  %v19 = vld [vmem:[%s0 + $0x14] sm:$0xf]
  %v20 = vld [vmem:[%s0 + $0x18] sm:$0xf]
  %v21 = vld [vmem:[%s0 + $0x1c] sm:$0xf]
  %v22 = vld [vmem:[%s0 + $0x20] sm:$0xf]
  %v23 = vld [vmem:[%s0 + $0x24] sm:$0xf]
  %v24 = vld [vmem:[%s0 + $0x28] sm:$0xf]
  %v25 = vld [vmem:[%s0 + $0x2c] sm:$0xf]
  %v26 = vld [vmem:[%s0 + $0x30] sm:$0xf]
  %v27 = vld [vmem:[%s0 + $0x34] sm:$0xf]
  %v28 = vld [vmem:[%s0 + $0x38] sm:$0xf]
  %v29 = vld [vmem:[%s0 + $0x3c] sm:$0xf]
  %v30 = vld [vmem:[%s0 + $0x40] sm:$0xf]
  %v31 = vld [vmem:[%s0 + $0x44] sm:$0xf]
  %v32 = vld [vmem:[%s0 + $0x48] sm:$0xf]
  %v33 = vld [vmem:[%s0 + $0x4c] sm:$0xf]
  %v34 = vld [vmem:[%s0 + $0x50] sm:$0xf]
  %v35 = vld [vmem:[%s0 + $0x54] sm:$0xf]
  %v36 = vld [vmem:[%s0 + $0x58] sm:$0xf]
  %v37 = vld [vmem:[%s0 + $0x5c] sm:$0xf]
  %v38 = vld [vmem:[%s0 + $0x60] sm:$0xf]
  %v39 = vld [vmem:[%s0 + $0x64] sm:$0xf]
  %v40 = vld [vmem:[%s0 + $0x68] sm:$0xf]
  %v41 = vld [vmem:[%s0 + $0x6c] sm:$0xf]
  %v42 = vld [vmem:[%s0 + $0x70] sm:$0xf]
  %v43 = vld [vmem:[%s0 + $0x74] sm:$0xf]
  %v44 = vld [vmem:[%s0 + $0x78] sm:$0xf]
  %v45 = vld [vmem:[%s0 + $0x7c] sm:$0xf]
  %v46 = vld [vmem:[%s0 + $0x80] sm:$0xf]
  %v47 = vld [vmem:[%s0 + $0x84] sm:$0xf]
  %v48 = vld [vmem:[%s0 + $0x88] sm:$0xf]
  %v49 = vld [vmem:[%s0 + $0x8c] sm:$0xf]
  %v50 = vld [vmem:[%s0 + $0x90] sm:$0xf]
  %v51 = vld [vmem:[%s0 + $0x94] sm:$0xf]
  %v52 = vld [vmem:[%s0 + $0x98] sm:$0xf]
  %v53 = vld [vmem:[%s0 + $0x9c] sm:$0xf]
  %v54 = vld [vmem:[%s0 + $0xa0] sm:$0xf]
  %v55 = vld [vmem:[%s0 + $0xa4] sm:$0xf]
  %v56 = vld [vmem:[%s0 + $0xa8] sm:$0xf]
  %v57 = vld [vmem:[%s0 + $0xac] sm:$0xf]
  %v58 = vld [vmem:[%s0 + $0xb0] sm:$0xf]
  %v59 = vld [vmem:[%s0 + $0xb4] sm:$0xf]
  %v60 = vld [vmem:[%s0 + $0xb8] sm:$0xf]
  %v61 = vld [vmem:[%s0 + $0xbc] sm:$0xf]
  %v62 = vld [vmem:[%s0 + $0xc0] sm:$0xf]
  %v63 = vld [vmem:[%s0 + $0xc4] sm:$0xf]
  %v64 = vld [vmem:[%s0 + $0xc8] sm:$0xf]
  %v65 = vld [vmem:[%s0 + $0xcc] sm:$0xf]
  %v66 = vld [vmem:[%s0 + $0xd0] sm:$0xf]
  %v67 = vld [vmem:[%s0 + $0xd4] sm:$0xf]
  %v68 = vld [vmem:[%s0 + $0xd8] sm:$0xf]
  %v69 = vld [vmem:[%s0 + $0xdc] sm:$0xf]
  %v70 = vld [vmem:[%s0 + $0xe0] sm:$0xf]
  %v71 = vld [vmem:[%s0 + $0xe4] sm:$0xf]
  %v72 = vld [vmem:[%s0 + $0xe8] sm:$0xf]
  %v73 = vld [vmem:[%s0 + $0xec] sm:$0xf]
  %v74 = vld [vmem:[%s0 + $0xf0] sm:$0xf]
  %v75 = vld [vmem:[%s0 + $0xf4] sm:$0xf]
  %v76 = vld [vmem:[%s0 + $0xf8] sm:$0xf]
  %v77 = vld [vmem:[%s0 + $0xfc] sm:$0xf]
  %v78 = vunpack.c.l.bf16 %v14
  %v79 = vunpack.c.l.bf16 %v15
  %v80 = vunpack.c.l.bf16 %v16
  %v81 = vunpack.c.l.bf16 %v17
  %v82 = vunpack.c.l.bf16 %v18
  %v83 = vunpack.c.l.bf16 %v19
  %v84 = vunpack.c.l.bf16 %v20
  %v85 = vunpack.c.l.bf16 %v21
  %v86 = vunpack.c.l.bf16 %v22
  %v87 = vunpack.c.l.bf16 %v23
  %v88 = vunpack.c.l.bf16 %v24
  %v89 = vunpack.c.l.bf16 %v25
  %v90 = vunpack.c.l.bf16 %v26
  %v91 = vunpack.c.l.bf16 %v27
  %v92 = vunpack.c.l.bf16 %v28
  %v93 = vunpack.c.l.bf16 %v29
  %v94 = vunpack.c.l.bf16 %v30
  %v95 = vunpack.c.l.bf16 %v31
  %v96 = vunpack.c.l.bf16 %v32
  %v97 = vunpack.c.l.bf16 %v33
  %v98 = vunpack.c.l.bf16 %v34
  %v99 = vunpack.c.l.bf16 %v35
  %v100 = vunpack.c.l.bf16 %v36
  %v101 = vunpack.c.l.bf16 %v37
  %v102 = vunpack.c.l.bf16 %v38
  %v103 = vunpack.c.l.bf16 %v39
  %v104 = vunpack.c.l.bf16 %v40
  %v105 = vunpack.c.l.bf16 %v41
  %v106 = vunpack.c.l.bf16 %v42
  %v107 = vunpack.c.l.bf16 %v43
  %v108 = vunpack.c.l.bf16 %v44
  %v109 = vunpack.c.l.bf16 %v45
  %v110 = vunpack.c.l.bf16 %v46
  %v111 = vunpack.c.l.bf16 %v47
  %v112 = vunpack.c.l.bf16 %v48
  %v113 = vunpack.c.l.bf16 %v49
  %v114 = vunpack.c.l.bf16 %v50
  %v115 = vunpack.c.l.bf16 %v51
  %v116 = vunpack.c.l.bf16 %v52
  %v117 = vunpack.c.l.bf16 %v53
  %v118 = vunpack.c.l.bf16 %v54
  %v119 = vunpack.c.l.bf16 %v55
  %v120 = vunpack.c.l.bf16 %v56
  %v121 = vunpack.c.l.bf16 %v57
  %v122 = vunpack.c.l.bf16 %v58
  %v123 = vunpack.c.l.bf16 %v59
  %v124 = vunpack.c.l.bf16 %v60
  %v125 = vunpack.c.l.bf16 %v61
  %v126 = vunpack.c.l.bf16 %v62
  %v127 = vunpack.c.l.bf16 %v63
  %v128 = vunpack.c.l.bf16 %v64
  %v129 = vunpack.c.l.bf16 %v65
  %v130 = vunpack.c.l.bf16 %v66
  %v131 = vunpack.c.l.bf16 %v67
  %v132 = vunpack.c.l.bf16 %v68
  %v133 = vunpack.c.l.bf16 %v69
  %v134 = vunpack.c.l.bf16 %v70
  %v135 = vunpack.c.l.bf16 %v71
  %v136 = vunpack.c.l.bf16 %v72
  %v137 = vunpack.c.l.bf16 %v73
  %v138 = vunpack.c.l.bf16 %v74
  %v139 = vunpack.c.l.bf16 %v75
  %v140 = vunpack.c.l.bf16 %v76
  %v141 = vunpack.c.l.bf16 %v77
  %v142 = vld [vmem:[%s1] sm:$0x1]
  %v144 = vlaneseq
  %v145 = vshrl.u32 %v144, 7
  %v146 = vsub.s32 0, %v145
  %v147 = vrot.slane %v142, %v146
  %v149 = vmul.f32 %v78, %v147
  %v150 = vmul.f32 %v79, %v147
  %v151 = vmul.f32 %v80, %v147
  %v152 = vmul.f32 %v81, %v147
  %v153 = vmul.f32 %v82, %v147
  %v154 = vmul.f32 %v83, %v147
  %v155 = vmul.f32 %v84, %v147
  %v156 = vmul.f32 %v85, %v147
  %v157 = vmul.f32 %v86, %v147
  %v158 = vmul.f32 %v87, %v147
  %v159 = vmul.f32 %v88, %v147
  %v160 = vmul.f32 %v89, %v147
  %v161 = vmul.f32 %v90, %v147
  %v162 = vmul.f32 %v91, %v147
  %v163 = vmul.f32 %v92, %v147
  %v164 = vmul.f32 %v93, %v147
  %v165 = vmul.f32 %v94, %v147
  %v166 = vmul.f32 %v95, %v147
  %v167 = vmul.f32 %v96, %v147
  %v168 = vmul.f32 %v97, %v147
  %v169 = vmul.f32 %v98, %v147
  %v170 = vmul.f32 %v99, %v147
  %v171 = vmul.f32 %v100, %v147
  %v172 = vmul.f32 %v101, %v147
  %v173 = vmul.f32 %v102, %v147
  %v174 = vmul.f32 %v103, %v147
  %v175 = vmul.f32 %v104, %v147
  %v176 = vmul.f32 %v105, %v147
  %v177 = vmul.f32 %v106, %v147
  %v178 = vmul.f32 %v107, %v147
  %v179 = vmul.f32 %v108, %v147
  %v180 = vmul.f32 %v109, %v147
  %v181 = vmul.f32 %v110, %v147
  %v182 = vmul.f32 %v111, %v147
  %v183 = vmul.f32 %v112, %v147
  %v184 = vmul.f32 %v113, %v147
  %v185 = vmul.f32 %v114, %v147
  %v186 = vmul.f32 %v115, %v147
  %v187 = vmul.f32 %v116, %v147
  %v188 = vmul.f32 %v117, %v147
  %v189 = vmul.f32 %v118, %v147
  %v190 = vmul.f32 %v119, %v147
  %v191 = vmul.f32 %v120, %v147
  %v192 = vmul.f32 %v121, %v147
  %v193 = vmul.f32 %v122, %v147
  %v194 = vmul.f32 %v123, %v147
  %v195 = vmul.f32 %v124, %v147
  %v196 = vmul.f32 %v125, %v147
  %v197 = vmul.f32 %v126, %v147
  %v198 = vmul.f32 %v127, %v147
  %v199 = vmul.f32 %v128, %v147
  %v200 = vmul.f32 %v129, %v147
  %v201 = vmul.f32 %v130, %v147
  %v202 = vmul.f32 %v131, %v147
  %v203 = vmul.f32 %v132, %v147
  %v204 = vmul.f32 %v133, %v147
  %v205 = vmul.f32 %v134, %v147
  %v206 = vmul.f32 %v135, %v147
  %v207 = vmul.f32 %v136, %v147
  %v208 = vmul.f32 %v137, %v147
  %v209 = vmul.f32 %v138, %v147
  %v210 = vmul.f32 %v139, %v147
  %v211 = vmul.f32 %v140, %v147
  %v212 = vmul.f32 %v141, %v147
  %v213 = vld [vmem:[%s2] sm:$0x1]
  %v215 = vlaneseq
  %v216 = vshrl.u32 %v215, 7
  %v217 = vsub.s32 0, %v216
  %v218 = vrot.slane %v213, %v217
  %v220 = vadd.f32 %v149, %v218
  %v221 = vadd.f32 %v150, %v218
  %v222 = vadd.f32 %v151, %v218
  %v223 = vadd.f32 %v152, %v218
  %v224 = vadd.f32 %v153, %v218
  %v225 = vadd.f32 %v154, %v218
  %v226 = vadd.f32 %v155, %v218
  %v227 = vadd.f32 %v156, %v218
  %v228 = vadd.f32 %v157, %v218
  %v229 = vadd.f32 %v158, %v218
  %v230 = vadd.f32 %v159, %v218
  %v231 = vadd.f32 %v160, %v218
  %v232 = vadd.f32 %v161, %v218
  %v233 = vadd.f32 %v162, %v218
  %v234 = vadd.f32 %v163, %v218
  %v235 = vadd.f32 %v164, %v218
  %v236 = vadd.f32 %v165, %v218
  %v237 = vadd.f32 %v166, %v218
  %v238 = vadd.f32 %v167, %v218
  %v239 = vadd.f32 %v168, %v218
  %v240 = vadd.f32 %v169, %v218
  %v241 = vadd.f32 %v170, %v218
  %v242 = vadd.f32 %v171, %v218
  %v243 = vadd.f32 %v172, %v218
  %v244 = vadd.f32 %v173, %v218
  %v245 = vadd.f32 %v174, %v218
  %v246 = vadd.f32 %v175, %v218
  %v247 = vadd.f32 %v176, %v218
  %v248 = vadd.f32 %v177, %v218
  %v249 = vadd.f32 %v178, %v218
  %v250 = vadd.f32 %v179, %v218
  %v251 = vadd.f32 %v180, %v218
  %v252 = vadd.f32 %v181, %v218
  %v253 = vadd.f32 %v182, %v218
  %v254 = vadd.f32 %v183, %v218
  %v255 = vadd.f32 %v184, %v218
  %v256 = vadd.f32 %v185, %v218
  %v257 = vadd.f32 %v186, %v218
  %v258 = vadd.f32 %v187, %v218
  %v259 = vadd.f32 %v188, %v218
  %v260 = vadd.f32 %v189, %v218
  %v261 = vadd.f32 %v190, %v218
  %v262 = vadd.f32 %v191, %v218
  %v263 = vadd.f32 %v192, %v218
  %v264 = vadd.f32 %v193, %v218
  %v265 = vadd.f32 %v194, %v218
  %v266 = vadd.f32 %v195, %v218
  %v267 = vadd.f32 %v196, %v218
  %v268 = vadd.f32 %v197, %v218
  %v269 = vadd.f32 %v198, %v218
  %v270 = vadd.f32 %v199, %v218
  %v271 = vadd.f32 %v200, %v218
  %v272 = vadd.f32 %v201, %v218
  %v273 = vadd.f32 %v202, %v218
  %v274 = vadd.f32 %v203, %v218
  %v275 = vadd.f32 %v204, %v218
  %v276 = vadd.f32 %v205, %v218
  %v277 = vadd.f32 %v206, %v218
  %v278 = vadd.f32 %v207, %v218
  %v279 = vadd.f32 %v208, %v218
  %v280 = vadd.f32 %v209, %v218
  %v281 = vadd.f32 %v210, %v218
  %v282 = vadd.f32 %v211, %v218
  %v283 = vadd.f32 %v212, %v218
  %v284 = vmax.f32 %v220, 0.0
  %v285 = vmax.f32 %v221, 0.0
  %v286 = vmax.f32 %v222, 0.0
  %v287 = vmax.f32 %v223, 0.0
  %v288 = vmax.f32 %v224, 0.0
  %v289 = vmax.f32 %v225, 0.0
  %v290 = vmax.f32 %v226, 0.0
  %v291 = vmax.f32 %v227, 0.0
  %v292 = vmax.f32 %v228, 0.0
  %v293 = vmax.f32 %v229, 0.0
  %v294 = vmax.f32 %v230, 0.0
  %v295 = vmax.f32 %v231, 0.0
  %v296 = vmax.f32 %v232, 0.0
  %v297 = vmax.f32 %v233, 0.0
  %v298 = vmax.f32 %v234, 0.0
  %v299 = vmax.f32 %v235, 0.0
  %v300 = vmax.f32 %v236, 0.0
  %v301 = vmax.f32 %v237, 0.0
  %v302 = vmax.f32 %v238, 0.0
  %v303 = vmax.f32 %v239, 0.0
  %v304 = vmax.f32 %v240, 0.0
  %v305 = vmax.f32 %v241, 0.0
  %v306 = vmax.f32 %v242, 0.0
  %v307 = vmax.f32 %v243, 0.0
  %v308 = vmax.f32 %v244, 0.0
  %v309 = vmax.f32 %v245, 0.0
  %v310 = vmax.f32 %v246, 0.0
  %v311 = vmax.f32 %v247, 0.0
  %v312 = vmax.f32 %v248, 0.0
  %v313 = vmax.f32 %v249, 0.0
  %v314 = vmax.f32 %v250, 0.0
  %v315 = vmax.f32 %v251, 0.0
  %v316 = vmax.f32 %v252, 0.0
  %v317 = vmax.f32 %v253, 0.0
  %v318 = vmax.f32 %v254, 0.0
  %v319 = vmax.f32 %v255, 0.0
  %v320 = vmax.f32 %v256, 0.0
  %v321 = vmax.f32 %v257, 0.0
  %v322 = vmax.f32 %v258, 0.0
  %v323 = vmax.f32 %v259, 0.0
  %v324 = vmax.f32 %v260, 0.0
  %v325 = vmax.f32 %v261, 0.0
  %v326 = vmax.f32 %v262, 0.0
  %v327 = vmax.f32 %v263, 0.0
  %v328 = vmax.f32 %v264, 0.0
  %v329 = vmax.f32 %v265, 0.0
  %v330 = vmax.f32 %v266, 0.0
  %v331 = vmax.f32 %v267, 0.0
  %v332 = vmax.f32 %v268, 0.0
  %v333 = vmax.f32 %v269, 0.0
  %v334 = vmax.f32 %v270, 0.0
  %v335 = vmax.f32 %v271, 0.0
  %v336 = vmax.f32 %v272, 0.0
  %v337 = vmax.f32 %v273, 0.0
  %v338 = vmax.f32 %v274, 0.0
  %v339 = vmax.f32 %v275, 0.0
  %v340 = vmax.f32 %v276, 0.0
  %v341 = vmax.f32 %v277, 0.0
  %v342 = vmax.f32 %v278, 0.0
  %v343 = vmax.f32 %v279, 0.0
  %v344 = vmax.f32 %v280, 0.0
  %v345 = vmax.f32 %v281, 0.0
  %v346 = vmax.f32 %v282, 0.0
  %v347 = vmax.f32 %v283, 0.0
  %v348 = vpack.c.bf16 %v285, %v284
  %v349 = vpack.c.bf16 %v287, %v286
  %v350 = vpack.c.bf16 %v289, %v288
  %v351 = vpack.c.bf16 %v291, %v290
  %v352 = vpack.c.bf16 %v293, %v292
  %v353 = vpack.c.bf16 %v295, %v294
  %v354 = vpack.c.bf16 %v297, %v296
  %v355 = vpack.c.bf16 %v299, %v298
  %v356 = vpack.c.bf16 %v301, %v300
  %v357 = vpack.c.bf16 %v303, %v302
  %v358 = vpack.c.bf16 %v305, %v304
  %v359 = vpack.c.bf16 %v307, %v306
  %v360 = vpack.c.bf16 %v309, %v308
  %v361 = vpack.c.bf16 %v311, %v310
  %v362 = vpack.c.bf16 %v313, %v312
  %v363 = vpack.c.bf16 %v315, %v314
  %v364 = vpack.c.bf16 %v317, %v316
  %v365 = vpack.c.bf16 %v319, %v318
  %v366 = vpack.c.bf16 %v321, %v320
  %v367 = vpack.c.bf16 %v323, %v322
  %v368 = vpack.c.bf16 %v325, %v324
  %v369 = vpack.c.bf16 %v327, %v326
  %v370 = vpack.c.bf16 %v329, %v328
  %v371 = vpack.c.bf16 %v331, %v330
  %v372 = vpack.c.bf16 %v333, %v332
  %v373 = vpack.c.bf16 %v335, %v334
  %v374 = vpack.c.bf16 %v337, %v336
  %v375 = vpack.c.bf16 %v339, %v338
  %v376 = vpack.c.bf16 %v341, %v340
  %v377 = vpack.c.bf16 %v343, %v342
  %v378 = vpack.c.bf16 %v345, %v344
  %v379 = vpack.c.bf16 %v347, %v346
  %v412 = vunpack.c.l.b16 %v348
  %v413 = vunpack.c.h.b16 %v348
  %v414 = vunpack.c.l.b16 %v349
  %v415 = vunpack.c.h.b16 %v349
  %v416 = vunpack.c.l.b16 %v350
  %v417 = vunpack.c.h.b16 %v350
  %v418 = vunpack.c.l.b16 %v351
  %v419 = vunpack.c.h.b16 %v351
  %v420 = vunpack.c.l.b16 %v352
  %v421 = vunpack.c.h.b16 %v352
  %v422 = vunpack.c.l.b16 %v353
  %v423 = vunpack.c.h.b16 %v353
  %v424 = vunpack.c.l.b16 %v354
  %v425 = vunpack.c.h.b16 %v354
  %v426 = vunpack.c.l.b16 %v355
  %v427 = vunpack.c.h.b16 %v355
  %v428 = vunpack.c.l.b16 %v356
  %v429 = vunpack.c.h.b16 %v356
  %v430 = vunpack.c.l.b16 %v357
  %v431 = vunpack.c.h.b16 %v357
  %v432 = vunpack.c.l.b16 %v358
  %v433 = vunpack.c.h.b16 %v358
  %v434 = vunpack.c.l.b16 %v359
  %v435 = vunpack.c.h.b16 %v359
  %v436 = vunpack.c.l.b16 %v360
  %v437 = vunpack.c.h.b16 %v360
  %v438 = vunpack.c.l.b16 %v361
  %v439 = vunpack.c.h.b16 %v361
  %v440 = vunpack.c.l.b16 %v362
  %v441 = vunpack.c.h.b16 %v362
  %v442 = vunpack.c.l.b16 %v363
  %v443 = vunpack.c.h.b16 %v363
  %v444 = vunpack.c.l.b16 %v364
  %v445 = vunpack.c.h.b16 %v364
  %v446 = vunpack.c.l.b16 %v365
  %v447 = vunpack.c.h.b16 %v365
  %v448 = vunpack.c.l.b16 %v366
  %v449 = vunpack.c.h.b16 %v366
  %v450 = vunpack.c.l.b16 %v367
  %v451 = vunpack.c.h.b16 %v367
  %v452 = vunpack.c.l.b16 %v368
  %v453 = vunpack.c.h.b16 %v368
  %v454 = vunpack.c.l.b16 %v369
  %v455 = vunpack.c.h.b16 %v369
  %v456 = vunpack.c.l.b16 %v370
  %v457 = vunpack.c.h.b16 %v370
  %v458 = vunpack.c.l.b16 %v371
  %v459 = vunpack.c.h.b16 %v371
  %v460 = vunpack.c.l.b16 %v372
  %v461 = vunpack.c.h.b16 %v372
  %v462 = vunpack.c.l.b16 %v373
  %v463 = vunpack.c.h.b16 %v373
  %v464 = vunpack.c.l.b16 %v374
  %v465 = vunpack.c.h.b16 %v374
  %v466 = vunpack.c.l.b16 %v375
  %v467 = vunpack.c.h.b16 %v375
  %v468 = vunpack.c.l.b16 %v376
  %v469 = vunpack.c.h.b16 %v376
  %v470 = vunpack.c.l.b16 %v377
  %v471 = vunpack.c.h.b16 %v377
  %v472 = vunpack.c.l.b16 %v378
  %v473 = vunpack.c.h.b16 %v378
  %v474 = vunpack.c.l.b16 %v379
  %v475 = vunpack.c.h.b16 %v379
  %v476 = vpack.c.b16 %v412, %v412
  %v477 = vpack.c.b16 %v413, %v413
  %v478 = vpack.c.b16 %v414, %v414
  %v479 = vpack.c.b16 %v415, %v415
  %v480 = vpack.c.b16 %v416, %v416
  %v481 = vpack.c.b16 %v417, %v417
  %v482 = vpack.c.b16 %v418, %v418
  %v483 = vpack.c.b16 %v419, %v419
  %v484 = vpack.c.b16 %v420, %v420
  %v485 = vpack.c.b16 %v421, %v421
  %v486 = vpack.c.b16 %v422, %v422
  %v487 = vpack.c.b16 %v423, %v423
  %v488 = vpack.c.b16 %v424, %v424
  %v489 = vpack.c.b16 %v425, %v425
  %v490 = vpack.c.b16 %v426, %v426
  %v491 = vpack.c.b16 %v427, %v427
  %v492 = vpack.c.b16 %v428, %v428
  %v493 = vpack.c.b16 %v429, %v429
  %v494 = vpack.c.b16 %v430, %v430
  %v495 = vpack.c.b16 %v431, %v431
  %v496 = vpack.c.b16 %v432, %v432
  %v497 = vpack.c.b16 %v433, %v433
  %v498 = vpack.c.b16 %v434, %v434
  %v499 = vpack.c.b16 %v435, %v435
  %v500 = vpack.c.b16 %v436, %v436
  %v501 = vpack.c.b16 %v437, %v437
  %v502 = vpack.c.b16 %v438, %v438
  %v503 = vpack.c.b16 %v439, %v439
  %v504 = vpack.c.b16 %v440, %v440
  %v505 = vpack.c.b16 %v441, %v441
  %v506 = vpack.c.b16 %v442, %v442
  %v507 = vpack.c.b16 %v443, %v443
  %v508 = vpack.c.b16 %v444, %v444
  %v509 = vpack.c.b16 %v445, %v445
  %v510 = vpack.c.b16 %v446, %v446
  %v511 = vpack.c.b16 %v447, %v447
  %v512 = vpack.c.b16 %v448, %v448
  %v513 = vpack.c.b16 %v449, %v449
  %v514 = vpack.c.b16 %v450, %v450
  %v515 = vpack.c.b16 %v451, %v451
  %v516 = vpack.c.b16 %v452, %v452
  %v517 = vpack.c.b16 %v453, %v453
  %v518 = vpack.c.b16 %v454, %v454
  %v519 = vpack.c.b16 %v455, %v455
  %v520 = vpack.c.b16 %v456, %v456
  %v521 = vpack.c.b16 %v457, %v457
  %v522 = vpack.c.b16 %v458, %v458
  %v523 = vpack.c.b16 %v459, %v459
  %v524 = vpack.c.b16 %v460, %v460
  %v525 = vpack.c.b16 %v461, %v461
  %v526 = vpack.c.b16 %v462, %v462
  %v527 = vpack.c.b16 %v463, %v463
  %v528 = vpack.c.b16 %v464, %v464
  %v529 = vpack.c.b16 %v465, %v465
  %v530 = vpack.c.b16 %v466, %v466
  %v531 = vpack.c.b16 %v467, %v467
  %v532 = vpack.c.b16 %v468, %v468
  %v533 = vpack.c.b16 %v469, %v469
  %v534 = vpack.c.b16 %v470, %v470
  %v535 = vpack.c.b16 %v471, %v471
  %v536 = vpack.c.b16 %v472, %v472
  %v537 = vpack.c.b16 %v473, %v473
  %v538 = vpack.c.b16 %v474, %v474
  %v539 = vpack.c.b16 %v475, %v475
  %vm604 = vcmask 60416
  %605 = vst.msk [vmem:[%s3] sm:$0xf] %vm604, %v476
  %606 = vst.msk [vmem:[%s3 + $0x4] sm:$0xf] %vm604, %v477
  %607 = vst.msk [vmem:[%s3 + $0x8] sm:$0xf] %vm604, %v478
  %608 = vst.msk [vmem:[%s3 + $0xc] sm:$0xf] %vm604, %v479
  %609 = vst.msk [vmem:[%s3 + $0x10] sm:$0xf] %vm604, %v480
  %610 = vst.msk [vmem:[%s3 + $0x14] sm:$0xf] %vm604, %v481
  %611 = vst.msk [vmem:[%s3 + $0x18] sm:$0xf] %vm604, %v482
  %612 = vst.msk [vmem:[%s3 + $0x1c] sm:$0xf] %vm604, %v483
  %613 = vst.msk [vmem:[%s3 + $0x20] sm:$0xf] %vm604, %v484
  %614 = vst.msk [vmem:[%s3 + $0x24] sm:$0xf] %vm604, %v485
  %615 = vst.msk [vmem:[%s3 + $0x28] sm:$0xf] %vm604, %v486
  %616 = vst.msk [vmem:[%s3 + $0x2c] sm:$0xf] %vm604, %v487
  %617 = vst.msk [vmem:[%s3 + $0x30] sm:$0xf] %vm604, %v488
  %618 = vst.msk [vmem:[%s3 + $0x34] sm:$0xf] %vm604, %v489
  %619 = vst.msk [vmem:[%s3 + $0x38] sm:$0xf] %vm604, %v490
  %620 = vst.msk [vmem:[%s3 + $0x3c] sm:$0xf] %vm604, %v491
  %621 = vst.msk [vmem:[%s3 + $0x40] sm:$0xf] %vm604, %v492
  %622 = vst.msk [vmem:[%s3 + $0x44] sm:$0xf] %vm604, %v493
  %623 = vst.msk [vmem:[%s3 + $0x48] sm:$0xf] %vm604, %v494
  %624 = vst.msk [vmem:[%s3 + $0x4c] sm:$0xf] %vm604, %v495
  %625 = vst.msk [vmem:[%s3 + $0x50] sm:$0xf] %vm604, %v496
  %626 = vst.msk [vmem:[%s3 + $0x54] sm:$0xf] %vm604, %v497
  %627 = vst.msk [vmem:[%s3 + $0x58] sm:$0xf] %vm604, %v498
  %628 = vst.msk [vmem:[%s3 + $0x5c] sm:$0xf] %vm604, %v499
  %629 = vst.msk [vmem:[%s3 + $0x60] sm:$0xf] %vm604, %v500
  %630 = vst.msk [vmem:[%s3 + $0x64] sm:$0xf] %vm604, %v501
  %631 = vst.msk [vmem:[%s3 + $0x68] sm:$0xf] %vm604, %v502
  %632 = vst.msk [vmem:[%s3 + $0x6c] sm:$0xf] %vm604, %v503
  %633 = vst.msk [vmem:[%s3 + $0x70] sm:$0xf] %vm604, %v504
  %634 = vst.msk [vmem:[%s3 + $0x74] sm:$0xf] %vm604, %v505
  %635 = vst.msk [vmem:[%s3 + $0x78] sm:$0xf] %vm604, %v506
  %636 = vst.msk [vmem:[%s3 + $0x7c] sm:$0xf] %vm604, %v507
  %637 = vst.msk [vmem:[%s3 + $0x80] sm:$0xf] %vm604, %v508
  %638 = vst.msk [vmem:[%s3 + $0x84] sm:$0xf] %vm604, %v509
  %639 = vst.msk [vmem:[%s3 + $0x88] sm:$0xf] %vm604, %v510
  %640 = vst.msk [vmem:[%s3 + $0x8c] sm:$0xf] %vm604, %v511
  %641 = vst.msk [vmem:[%s3 + $0x90] sm:$0xf] %vm604, %v512
  %642 = vst.msk [vmem:[%s3 + $0x94] sm:$0xf] %vm604, %v513
  %643 = vst.msk [vmem:[%s3 + $0x98] sm:$0xf] %vm604, %v514
  %644 = vst.msk [vmem:[%s3 + $0x9c] sm:$0xf] %vm604, %v515
  %645 = vst.msk [vmem:[%s3 + $0xa0] sm:$0xf] %vm604, %v516
  %646 = vst.msk [vmem:[%s3 + $0xa4] sm:$0xf] %vm604, %v517
  %647 = vst.msk [vmem:[%s3 + $0xa8] sm:$0xf] %vm604, %v518
  %648 = vst.msk [vmem:[%s3 + $0xac] sm:$0xf] %vm604, %v519
  %649 = vst.msk [vmem:[%s3 + $0xb0] sm:$0xf] %vm604, %v520
  %650 = vst.msk [vmem:[%s3 + $0xb4] sm:$0xf] %vm604, %v521
  %651 = vst.msk [vmem:[%s3 + $0xb8] sm:$0xf] %vm604, %v522
  %652 = vst.msk [vmem:[%s3 + $0xbc] sm:$0xf] %vm604, %v523
  %653 = vst.msk [vmem:[%s3 + $0xc0] sm:$0xf] %vm604, %v524
  %654 = vst.msk [vmem:[%s3 + $0xc4] sm:$0xf] %vm604, %v525
  %655 = vst.msk [vmem:[%s3 + $0xc8] sm:$0xf] %vm604, %v526
  %656 = vst.msk [vmem:[%s3 + $0xcc] sm:$0xf] %vm604, %v527
  %657 = vst.msk [vmem:[%s3 + $0xd0] sm:$0xf] %vm604, %v528
  %658 = vst.msk [vmem:[%s3 + $0xd4] sm:$0xf] %vm604, %v529
  %659 = vst.msk [vmem:[%s3 + $0xd8] sm:$0xf] %vm604, %v530
  %660 = vst.msk [vmem:[%s3 + $0xdc] sm:$0xf] %vm604, %v531
  %661 = vst.msk [vmem:[%s3 + $0xe0] sm:$0xf] %vm604, %v532
  %662 = vst.msk [vmem:[%s3 + $0xe4] sm:$0xf] %vm604, %v533
  %663 = vst.msk [vmem:[%s3 + $0xe8] sm:$0xf] %vm604, %v534
  %664 = vst.msk [vmem:[%s3 + $0xec] sm:$0xf] %vm604, %v535
  %665 = vst.msk [vmem:[%s3 + $0xf0] sm:$0xf] %vm604, %v536
  %666 = vst.msk [vmem:[%s3 + $0xf4] sm:$0xf] %vm604, %v537
  %667 = vst.msk [vmem:[%s3 + $0xf8] sm:$0xf] %vm604, %v538
  %668 = vst.msk [vmem:[%s3 + $0xfc] sm:$0xf] %vm604, %v539
  // Predicated region
  $region14: #{generator_forward.12} parent=0 // pred_check
    _
  $region15: #{generator_forward.12} parent=0 // pred_check_branch
    %670 = sbr.rel (0) target = $region17
  $region16: #{generator_forward.12} parent=0 // pred_region
    _
  $region17: #{generator_forward.12} parent=0 // pred_fallthru
    _
  // Predicated region
  $region18: #{generator_forward.12} parent=0 // pred_check
    _
  $region19: #{generator_forward.12} parent=0 // pred_check_branch
    %672 = sbr.rel (0) target = $region21
  $region20: #{generator_forward.12} parent=0 // pred_region
    _
  $region21: #{generator_forward.12} parent=0 // pred_fallthru
    _

// kernel: generator_forward.13
$region0: #{generator_forward.13}
  #allocation0 [shape = 'u32[]', space=smem, size = 0x4, offset = 0x4, fixed_abs, tag = 'smem constant byte address 0x4 - core index']
  #allocation1 [shape = 'u32[144,128]{1,0:T(1,128)}', space=vmem, size = 0x12000, scoped, tag = 'internal scratch']
  %s0 = inlined_call_operand.vmem [shape: bf16[4,8,32], index: 0, kind: input, shape index: {}]
  %s1 = inlined_call_operand.vmem [shape: bf16[4,32,512], index: 1, kind: input, shape index: {}]
  %s2 = inlined_call_operand.vmem [shape: f32[4,8,512], index: 2, kind: output, shape index: {}]
  %s3 = sld [smem:[#allocation0]]
  $region41: #{generator_forward.13} parent=0
    _
  %s5 = ssub.s32 1, %s3
  %s6 = scalar_select 0, %s5, %s3
  loop: start=0, step=1, limit=6
  $region2: #{generator_forward.13} parent=0 // loop_pre_header
    _
  $region3: #{generator_forward.13} parent=0 // loop_header
    %s8 = sphi 0, %s12
    %p9 = scmp.ge.s32.totalorder %s8, 6
    %s15 = sphi 0, %s27
    %s16 = sphi 0, %s23
    %s17 = sphi 0, %s15
    %s18 = sphi 0, %s16
    %s19 = sphi 0, %s17
    %s20 = sphi 0, %s18
    %s30 = sphi 0, %s32
    %s33 = sphi 0, %s30
    %s34 = sphi 0, %s33
    %s50 = sphi 0, %s34
    %s58 = sphi 0, %s60
    %s61 = sphi 0, %s58
    %s62 = sphi 0, %s61
    %s78 = sphi 0, %s62
    %s86 = sphi 0, %s88
    %s89 = sphi 0, %s86
    %s90 = sphi 0, %s89
    %s106 = sphi 0, %s90
  $region4: #{generator_forward.13} parent=0 // loop_header_branch
    %11 = sbr.rel (%p9) target = $region8
  $region5: #{generator_forward.13} parent=0 // loop_body
    %s13 = ssub.s32 %s8, 1
    %s14 = ssub.s32 %s8, 2
    %s21 = sadd.s32 1, %s16
    %p22 = scmp.ge.s32.totalorder %s21, 1
    %s23 = scalar_select %p22, 0, %s21
    %s24 = sadd.s32 1, %s15
    %s25 = scalar_select %p22, %s24, %s15
    %p26 = scmp.ge.s32.totalorder %s25, 4
    %s27 = scalar_select %p26, 0, %s25
    %s28 = ssub.s32 %s15, %s27
    %p29 = scmp.eq.s32.totalorder %s28, 0
    %s31 = sadd.s32 %s30, 1
    %s32 = scalar_select %p29, %s30, %s31
    %p35 = pneg %p29
    %p36 = scmp.eq.s32.totalorder %s8, 3
    %p37 = por %p35, %p36
    %p38 = scmp.ne.s32.totalorder %s30, %s33
    %p39 = scmp.eq.s32.totalorder %s8, 0
    %p40 = por %p38, %p39
    %p41 = scmp.ne.s32.totalorder %s30, %s33
    %p42 = scmp.eq.s32.totalorder %s13, 3
    %p43 = por %p41, %p42
    %p44 = scmp.ne.s32.totalorder %s33, %s34
    %p45 = scmp.eq.s32.totalorder %s13, 0
    %p46 = por %p44, %p45
    %p47 = scmp.ne.s32.totalorder %s33, %s34
    %p48 = scmp.eq.s32.totalorder %s14, 3
    %p49 = por %p47, %p48
    %p51 = scmp.ne.s32.totalorder %s34, %s50
    %p52 = scmp.eq.s32.totalorder %s14, 0
    %p53 = por %p51, %p52
    %s54 = ssub.s32 %s15, %s27
    %s55 = ssub.s32 %s16, %s23
    %s56 = sor.u32 %s54, %s55
    %p57 = scmp.eq.s32.totalorder %s56, 0
    %s59 = sadd.s32 %s58, 1
    %s60 = scalar_select %p57, %s58, %s59
    %p63 = pneg %p57
    %p64 = scmp.eq.s32.totalorder %s8, 3
    %p65 = por %p63, %p64
    %p66 = scmp.ne.s32.totalorder %s58, %s61
    %p67 = scmp.eq.s32.totalorder %s8, 0
    %p68 = por %p66, %p67
    %p69 = scmp.ne.s32.totalorder %s58, %s61
    %p70 = scmp.eq.s32.totalorder %s13, 3
    %p71 = por %p69, %p70
    %p72 = scmp.ne.s32.totalorder %s61, %s62
    %p73 = scmp.eq.s32.totalorder %s13, 0
    %p74 = por %p72, %p73
    %p75 = scmp.ne.s32.totalorder %s61, %s62
    %p76 = scmp.eq.s32.totalorder %s14, 3
    %p77 = por %p75, %p76
    %p79 = scmp.ne.s32.totalorder %s62, %s78
    %p80 = scmp.eq.s32.totalorder %s14, 0
    %p81 = por %p79, %p80
    %s82 = ssub.s32 %s15, %s27
    %s83 = ssub.s32 %s16, %s23
    %s84 = sor.u32 %s82, %s83
    %p85 = scmp.eq.s32.totalorder %s84, 0
    %s87 = sadd.s32 %s86, 1
    %s88 = scalar_select %p85, %s86, %s87
    %p91 = pneg %p85
    %p92 = scmp.eq.s32.totalorder %s8, 3
    %p93 = por %p91, %p92
    %p94 = scmp.ne.s32.totalorder %s86, %s89
    %p95 = scmp.eq.s32.totalorder %s8, 0
    %p96 = por %p94, %p95
    %p97 = scmp.ne.s32.totalorder %s86, %s89
    %p98 = scmp.eq.s32.totalorder %s13, 3
    %p99 = por %p97, %p98
    %p100 = scmp.ne.s32.totalorder %s89, %s90
    %p101 = scmp.eq.s32.totalorder %s13, 0
    %p102 = por %p100, %p101
    %p103 = scmp.ne.s32.totalorder %s89, %s90
    %p104 = scmp.eq.s32.totalorder %s14, 3
    %p105 = por %p103, %p104
    %p107 = scmp.ne.s32.totalorder %s90, %s106
    %p108 = scmp.eq.s32.totalorder %s14, 0
    %p109 = por %p107, %p108
    %p110 = scmp.le.s32.totalorder 1, %s8
    %p111 = scmp.lt.s32.totalorder %s8, 5
    %p112 = pnand %p110, %p111
    %p113 = pneg %p112
    // Predicated region
    $region9: #{generator_forward.13} parent=5 // pred_check
      _
    $region10: #{generator_forward.13} parent=5 // pred_check_branch
      %115 = sbr.rel (%p112) target = $region12
    $region11: #{generator_forward.13} parent=5 // pred_region
      %s116 = ssub.s32 %s8, 1
    $region12: #{generator_forward.13} parent=5 // pred_fallthru
      _
    %p117 = scmp.lt.s32.totalorder %s8, 4
    // Predicated region
    $region13: #{generator_forward.13} parent=5 // pred_check
      %p118 = pneg %p117
    $region14: #{generator_forward.13} parent=5 // pred_check_branch
      %120 = sbr.rel (%p118) target = $region16
    $region15: #{generator_forward.13} parent=5 // pred_region
      // Predicated region
      $region17: #{generator_forward.13} parent=15 // pred_check
        %p121 = pneg %p40
      $region18: #{generator_forward.13} parent=15 // pred_check_branch
        %123 = sbr.rel (%p121) target = $region20
      $region19: #{generator_forward.13} parent=15 // pred_region
        %p124 = scmp.lt.s32.totalorder %s15, 3
        %s125 = scalar_select %p124, %s15, 3
        %s126 = smul.addr %s125, 4
        %s127 = scalar_lea.vmem %s0, %s126
      $region20: #{generator_forward.13} parent=15 // pred_fallthru
        _
      // Predicated region
      $region21: #{generator_forward.13} parent=15 // pred_check
        %p128 = pneg %p68
      $region22: #{generator_forward.13} parent=15 // pred_check_branch
        %130 = sbr.rel (%p128) target = $region24
      $region23: #{generator_forward.13} parent=15 // pred_region
        %s131 = smul.u32 4, %s16
        %p132 = scmp.lt.s32.totalorder %s15, 3
        %s133 = scalar_select %p132, %s15, 3
        %p134 = scmp.lt.s32.totalorder %s131, 3
        %s135 = scalar_select %p134, %s131, 3
        %s136 = smul.addr %s133, 16
        %s137 = sadd.s32 %s135, %s136
        %s138 = smul.addr %s137, 4
        %s139 = scalar_lea.vmem %s1, %s138
        %s140 = smul.u32 4, %s16
      $region24: #{generator_forward.13} parent=15 // pred_fallthru
        _
    $region16: #{generator_forward.13} parent=5 // pred_fallthru
      _
    %p141 = scmp.le.s32.totalorder 1, %s8
    %p142 = scmp.lt.s32.totalorder %s8, 5
    %p143 = pnand %p141, %p142
    %p144 = pneg %p143
    // Predicated region
    $region25: #{generator_forward.13} parent=5 // pred_check
      _
    $region26: #{generator_forward.13} parent=5 // pred_check_branch
      %146 = sbr.rel (%p143) target = $region28
    $region27: #{generator_forward.13} parent=5 // pred_region
      %s147 = ssub.s32 %s8, 1
      %p148 = scmp.lt.s32.totalorder %s17, 3
      %s149 = scalar_select %p148, %s17, 3
      %s150 = smul.addr %s149, 4
      %s151 = scalar_lea.vmem %s0, %s150
      %p152 = pneg %p46
      %p153 = pneg %p43
      %s154 = smul.u32 4, %s18
      %p155 = scmp.lt.s32.totalorder %s17, 3
      %s156 = scalar_select %p155, %s17, 3
      %p157 = scmp.lt.s32.totalorder %s154, 3
      %s158 = scalar_select %p157, %s154, 3
      %s159 = smul.addr %s156, 16
      %s160 = sadd.s32 %s158, %s159
      %s161 = smul.addr %s160, 4
      %s162 = scalar_lea.vmem %s1, %s161
      %p163 = pneg %p74
      %p164 = pneg %p71
      %p165 = pneg %p102
      %p166 = pneg %p99
      %s167 = smul.u32 4, %s18
      %p168 = scmp.lt.s32.totalorder %s17, 3
      %s169 = scalar_select %p168, %s17, 3
      %p170 = scmp.lt.s32.totalorder %s167, 3
      %s171 = scalar_select %p170, %s167, 3
      %s172 = smul.addr %s169, 4
      %s173 = sadd.s32 %s171, %s172
      %s174 = smul.addr %s173, 8
      %s175 = scalar_lea.vmem %s2, %s174
      %p176 = scmp.lt.s32.totalorder %s17, 3
      %s177 = scalar_select %p176, %s17, 3
      %s178 = smul.addr %s177, 4
      %s179 = scalar_lea.vmem %s0, %s178
      %s180 = smul.u32 4, %s18
      %p181 = scmp.lt.s32.totalorder %s17, 3
      %s182 = scalar_select %p181, %s17, 3
      %p183 = scmp.lt.s32.totalorder %s180, 3
      %s184 = scalar_select %p183, %s180, 3
      %s185 = smul.addr %s182, 16
      %s186 = sadd.s32 %s184, %s185
      %s187 = smul.addr %s186, 4
      %s188 = scalar_lea.vmem %s1, %s187
      %s189 = smul.u32 4, %s18
      %s190 = smul.u32 4, %s18
      %p191 = scmp.lt.s32.totalorder %s17, 3
      %s192 = scalar_select %p191, %s17, 3
      %p193 = scmp.lt.s32.totalorder %s190, 3
      %s194 = scalar_select %p193, %s190, 3
      %s195 = smul.addr %s192, 4
      %s196 = sadd.s32 %s194, %s195
      %s197 = smul.addr %s196, 8
      %s198 = scalar_lea.vmem %s2, %s197
      %s199 = smul.u32 4, %s18
      %v201 = vld [vmem:[%s179] sm:$0xf]
      %v202 = vld [vmem:[%s188] sm:$0xff]
      %v203 = vld [vmem:[%s188 + $0x8] sm:$0xff]
      %v204 = vld [vmem:[%s188 + $0x10] sm:$0xff]
      %v205 = vld [vmem:[%s188 + $0x18] sm:$0xff]
      %v206 = vld [vmem:[%s188 + $0x20] sm:$0xff]
      %v207 = vld [vmem:[%s188 + $0x28] sm:$0xff]
      %v208 = vld [vmem:[%s188 + $0x30] sm:$0xff]
      %v209 = vld [vmem:[%s188 + $0x38] sm:$0xff]
      %v218 = vunpack.c.l.b16 %v202
      %v219 = vunpack.c.h.b16 %v202
      %v220 = vunpack.c.l.b16 %v203
      %v221 = vunpack.c.h.b16 %v203
      %v222 = vunpack.c.l.b16 %v204
      %v223 = vunpack.c.h.b16 %v204
      %v224 = vunpack.c.l.b16 %v205
      %v225 = vunpack.c.h.b16 %v205
      %v226 = vunpack.c.l.b16 %v206
      %v227 = vunpack.c.h.b16 %v206
      %v228 = vunpack.c.l.b16 %v207
      %v229 = vunpack.c.h.b16 %v207
      %v230 = vunpack.c.l.b16 %v208
      %v231 = vunpack.c.h.b16 %v208
      %v232 = vunpack.c.l.b16 %v209
      %v233 = vunpack.c.h.b16 %v209
      %v234 = vpack.c.b16 %v222, %v218
      %v235 = vpack.c.b16 %v223, %v219
      %v236 = vpack.c.b16 %v224, %v220
      %v237 = vpack.c.b16 %v225, %v221
      %v238 = vpack.c.b16 %v230, %v226
      %v239 = vpack.c.b16 %v231, %v227
      %v240 = vpack.c.b16 %v232, %v228
      %v241 = vpack.c.b16 %v233, %v229
      %vm250 = vcmask 261120
      %v252 = vsel %vm250, %v201, 0
      %254 = vmatprep.subr.bf16.mxu0 %v235
      %255 = vmatpush1.bf16.msra.mxu0 %v234
      %256 = vmatprep.subr.bf16.mxu0 %v239
      %257 = vmatpush1.bf16.msra.mxu0 %v238
      %258 = vmatprep.subr.bf16.mxu0 0
      %259 = vmatpush1.bf16.msra.mxu0 0
      %260 = vmatprep.subr.bf16.mxu0 0
      %261 = vmatpush1.bf16.msra.mxu0 0
      %262 = vmatprep.subr.bf16.mxu0 0
      %263 = vmatpush1.bf16.msra.mxu0 0
      %264 = vmatprep.subr.bf16.mxu0 0
      %265 = vmatpush1.bf16.msra.mxu0 0
      %266 = vmatprep.subr.bf16.mxu0 0
      %267 = vmatpush1.bf16.msra.mxu0 0
      %268 = vmatprep.subr.bf16.mxu0 0
      %269 = vmatpush1.bf16.msra.mxu0 0
      %270 = vmatprep.subr.bf16.mxu0 0
      %271 = vmatpush1.bf16.msra.mxu0 0
      %272 = vmatprep.subr.bf16.mxu0 0
      %273 = vmatpush1.bf16.msra.mxu0 0
      %274 = vmatprep.subr.bf16.mxu0 0
      %275 = vmatpush1.bf16.msra.mxu0 0
      %276 = vmatprep.subr.bf16.mxu0 0
      %277 = vmatpush1.bf16.msra.mxu0 0
      %278 = vmatprep.subr.bf16.mxu0 0
      %279 = vmatpush1.bf16.msra.mxu0 0
      %280 = vmatprep.subr.bf16.mxu0 0
      %281 = vmatpush1.bf16.msra.mxu0 0
      %282 = vmatprep.subr.bf16.mxu0 0
      %283 = vmatpush1.bf16.msra.mxu0 0
      %284 = vmatprep.subr.bf16.mxu0 0
      %285 = vmatpush1.bf16.msra.mxu0 0
      %286 = vmatprep.mubr.bf16.mxu0 0
      %287 = vmatmul.mubr.bf16.gmra.mrb[0].mxu0 %v252
      %v288 = vpop.f32.mrb[0].mxu0
      %v289 = vadd.f32 0.0, %v288
      %v290 = vpop.f32.mrb[0].mxu0
      %v291 = vadd.f32 0.0, %v290
      %v292 = vpop.f32.mrb[0].mxu0
      %v293 = vpop.f32.mrb[0].mxu0
      %294 = vdwg.mxu0
      %295 = vmatprep.subr.bf16.mxu0 %v237
      %296 = vmatpush1.bf16.msra.mxu0 %v236
      %297 = vmatprep.subr.bf16.mxu0 %v241
      %298 = vmatpush1.bf16.msra.mxu0 %v240
      %299 = vmatprep.subr.bf16.mxu0 0
      %300 = vmatpush1.bf16.msra.mxu0 0
      %301 = vmatprep.subr.bf16.mxu0 0
      %302 = vmatpush1.bf16.msra.mxu0 0
      %303 = vmatprep.subr.bf16.mxu0 0
      %304 = vmatpush1.bf16.msra.mxu0 0
      %305 = vmatprep.subr.bf16.mxu0 0
      %306 = vmatpush1.bf16.msra.mxu0 0
      %307 = vmatprep.subr.bf16.mxu0 0
      %308 = vmatpush1.bf16.msra.mxu0 0
      %309 = vmatprep.subr.bf16.mxu0 0
      %310 = vmatpush1.bf16.msra.mxu0 0
      %311 = vmatprep.subr.bf16.mxu0 0
      %312 = vmatpush1.bf16.msra.mxu0 0
      %313 = vmatprep.subr.bf16.mxu0 0
      %314 = vmatpush1.bf16.msra.mxu0 0
      %315 = vmatprep.subr.bf16.mxu0 0
      %316 = vmatpush1.bf16.msra.mxu0 0
      %317 = vmatprep.subr.bf16.mxu0 0
      %318 = vmatpush1.bf16.msra.mxu0 0
      %319 = vmatprep.subr.bf16.mxu0 0
      %320 = vmatpush1.bf16.msra.mxu0 0
      %321 = vmatprep.subr.bf16.mxu0 0
      %322 = vmatpush1.bf16.msra.mxu0 0
      %323 = vmatprep.subr.bf16.mxu0 0
      %324 = vmatpush1.bf16.msra.mxu0 0
      %325 = vmatprep.subr.bf16.mxu0 0
      %326 = vmatpush1.bf16.msra.mxu0 0
      %327 = vmatprep.mubr.bf16.mxu0 0
      %328 = vmatmul.mubr.bf16.gmra.mrb[0].mxu0 %v252
      %v329 = vpop.f32.mrb[0].mxu0
      %v330 = vadd.f32 0.0, %v329
      %v331 = vpop.f32.mrb[0].mxu0
      %v332 = vadd.f32 0.0, %v331
      %v333 = vpop.f32.mrb[0].mxu0
      %v334 = vpop.f32.mrb[0].mxu0
      %335 = vdwg.mxu0
      %v336 = vtanh.pop %v289
      %v337 = vtanh.pop %v291
      %v338 = vtanh.pop %v330
      %v339 = vtanh.pop %v332
      %340 = vst [vmem:[%s198] sm:$0xff] %v336
      %341 = vst [vmem:[%s198 + $0x8] sm:$0xff] %v337
      %342 = vst [vmem:[%s198 + $0x10] sm:$0xff] %v338
      %343 = vst [vmem:[%s198 + $0x18] sm:$0xff] %v339
      %s344 = smul.u32 4, %s18
      %p345 = scmp.lt.s32.totalorder %s17, 3
      %s346 = scalar_select %p345, %s17, 3
      %p347 = scmp.lt.s32.totalorder %s344, 3
      %s348 = scalar_select %p347, %s344, 3
      %s349 = smul.addr %s346, 4
      %s350 = sadd.s32 %s348, %s349
      %s351 = smul.addr %s350, 8
      %s352 = scalar_lea.vmem %s2, %s351
      // Predicated region
      $region29: #{generator_forward.13} parent=27 // pred_check
        %p353 = pneg %p99
      $region30: #{generator_forward.13} parent=27 // pred_check_branch
        %355 = sbr.rel (%p353) target = $region32
      $region31: #{generator_forward.13} parent=27 // pred_region
        %s356 = smul.u32 4, %s18
      $region32: #{generator_forward.13} parent=27 // pred_fallthru
        _
    $region28: #{generator_forward.13} parent=5 // pred_fallthru
      _
    %p357 = scmp.le.s32.totalorder 2, %s8
    // Predicated region
    $region33: #{generator_forward.13} parent=5 // pred_check
      %p358 = pneg %p357
    $region34: #{generator_forward.13} parent=5 // pred_check_branch
      %360 = sbr.rel (%p358) target = $region36
    $region35: #{generator_forward.13} parent=5 // pred_region
      %s361 = ssub.s32 %s8, 2
      // Predicated region
      $region37: #{generator_forward.13} parent=35 // pred_check
        %p362 = pneg %p105
      $region38: #{generator_forward.13} parent=35 // pred_check_branch
        %364 = sbr.rel (%p362) target = $region40
      $region39: #{generator_forward.13} parent=35 // pred_region
        %s365 = smul.u32 4, %s20
        %p366 = scmp.lt.s32.totalorder %s19, 3
        %s367 = scalar_select %p366, %s19, 3
        %p368 = scmp.lt.s32.totalorder %s365, 3
        %s369 = scalar_select %p368, %s365, 3
        %s370 = smul.addr %s367, 4
        %s371 = sadd.s32 %s369, %s370
        %s372 = smul.addr %s371, 8
        %s373 = scalar_lea.vmem %s2, %s372
      $region40: #{generator_forward.13} parent=35 // pred_fallthru
        _
    $region36: #{generator_forward.13} parent=5 // pred_fallthru
      _
  $region6: #{generator_forward.13} parent=0 // loop_footer
    %s12 = sadd.s32 1, %s8
  $region7: #{generator_forward.13} parent=0 // loop_footer_branch
    %7 = sbr.rel target = $region3
  $region8: #{generator_forward.13} parent=0 // loop_exit
    _

</llo_original>
